<compile_context>
chip_gen: v7x
topology: tpu7x:2x2x1
jax: 0.10.0
libtpu: 0.0.40
codegen_flags: <defaults>
</compile_context>

<pallas_src>
import functools

import jax
import jax.numpy as jnp
import numpy as np
from jax.experimental import pallas as pl
from jax.experimental.pallas import tpu as pltpu

BN_EPS = 1e-3


# ---------------------------------------------------------------------------
# In-kernel helpers (pure VMEM values; nothing here touches HBM)
# ---------------------------------------------------------------------------
def _pad_hw(a, p, value):
    """Pad the two leading spatial dims of an (H, W, C) value by `p` with
    `value`, built from jnp.concatenate (avoids lax.pad inside Mosaic)."""
    h, w, c = a.shape
    col = jnp.full((h, p, c), value, a.dtype)
    a = jnp.concatenate([col, a, col], axis=1)            # (h, w+2p, c)
    row = jnp.full((p, w + 2 * p, c), value, a.dtype)
    return jnp.concatenate([row, a, row], axis=0)          # (h+2p, w+2p, c)


def _conv_kxk(r, w, b, k):
    """k x k 'same' Conv + folded-BN bias + ReLU on an (H, W, Cr) f32 value.

    Builds the (H*W, k*k*Cr) im2col operand in VMEM and does one deep MXU
    matmul (K = k*k*Cr) instead of k*k shallow matmuls + accumulator adds.
    w: (k*k*Cr, Cout) bf16 with BN scale folded in; b: (1, Cout) f32.
    """
    H, W, cr = r.shape
    pad = (k - 1) // 2
    rp = _pad_hw(r, pad, 0.0)                              # zero halo, in VMEM
    taps = [rp[kh:kh + H, kw:kw + W, :].reshape(H * W, cr)
            for kh in range(k) for kw in range(k)]
    a = jnp.concatenate(taps, axis=-1).astype(jnp.bfloat16)   # (H*W, k*k*Cr)
    acc = jnp.dot(a, w, preferred_element_type=jnp.float32)
    return jnp.maximum(acc + b, 0.0)                       # (H*W, Cout) f32


def _inception_kernel(x_ref, w1_ref, b1_ref, w2_ref, b2_ref, w3_ref, b3_ref,
                      wp_ref, bp_ref, o_ref, *, H, W, c1, c2r, c3r, k2, k3):
    """Whole Inception block for one batch element."""
    x = x_ref[0]                                           # (H, W, Cin) f32
    cin = x.shape[-1]

    # ---- fused 1x1 convs: branch1 | 3x3-reduce | 5x5-reduce (one matmul) ----
    xm = x.reshape(H * W, cin).astype(jnp.bfloat16)
    y1 = jnp.dot(xm, w1_ref[...], preferred_element_type=jnp.float32)
    y1 = jnp.maximum(y1 + b1_ref[...], 0.0)                # (H*W, c1+c2r+c3r)
    br1 = y1[:, :c1]
    r2 = y1[:, c1:c1 + c2r].reshape(H, W, c2r)             # stays f32 in VMEM
    r3 = y1[:, c1 + c2r:c1 + c2r + c3r].reshape(H, W, c3r)

    # ---- 3x3 / 5x5 Conv+BN+ReLU on the in-VMEM reduce activations ----
    br2 = _conv_kxk(r2, w2_ref[...], b2_ref[...], k2)
    br3 = _conv_kxk(r3, w3_ref[...], b3_ref[...], k3)

    # ---- separable 3x3/s1 maxpool (-inf halo built in VMEM) + pool-proj ----
    xp = _pad_hw(x, 1, -jnp.inf)                           # (H+2, W+2, Cin)
    mw = jnp.maximum(jnp.maximum(xp[:, 0:W, :], xp[:, 1:W + 1, :]),
                     xp[:, 2:W + 2, :])                    # (H+2, W, Cin)
    mp = jnp.maximum(jnp.maximum(mw[0:H], mw[1:H + 1]), mw[2:H + 2])
    pm = mp.reshape(H * W, cin).astype(jnp.bfloat16)
    br4 = jnp.dot(pm, wp_ref[...], preferred_element_type=jnp.float32)
    br4 = jnp.maximum(br4 + bp_ref[...], 0.0)

    # ---- one lane-concat in VMEM, single store (no HBM concat pass) ----
    out = jnp.concatenate([br1, br2, br3, br4], axis=-1)   # (H*W, Ctot) f32
    o_ref[0] = out.reshape(H, W, out.shape[-1])


# ---------------------------------------------------------------------------
# Parameter setup & BN folding
# ---------------------------------------------------------------------------
def init_conv_params(key, cin, cout, k):
    kw_, kb, kg, kbeta, km, kv = jax.random.split(key, 6)
    return dict(
        w=0.1 * jax.random.normal(kw_, (cout, cin, k, k), jnp.float32),  # OIHW
        b=0.05 * jax.random.normal(kb, (cout,), jnp.float32),
        gamma=1.0 + 0.1 * jax.random.normal(kg, (cout,), jnp.float32),
        beta=0.05 * jax.random.normal(kbeta, (cout,), jnp.float32),
        mean=0.05 * jax.random.normal(km, (cout,), jnp.float32),
        var=0.5 + jnp.abs(jax.random.normal(kv, (cout,), jnp.float32)),
    )


def init_inception_params(key, in_ch, out_1x1, out_3x3_red, out_3x3,
                          out_5x5_red, out_5x5, pool_proj):
    keys = jax.random.split(key, 6)
    return dict(
        b1=init_conv_params(keys[0], in_ch, out_1x1, 1),
        b2_red=init_conv_params(keys[1], in_ch, out_3x3_red, 1),
        b2=init_conv_params(keys[2], out_3x3_red, out_3x3, 3),
        b3_red=init_conv_params(keys[3], in_ch, out_5x5_red, 1),
        b3=init_conv_params(keys[4], out_5x5_red, out_5x5, 5),
        b4=init_conv_params(keys[5], in_ch, pool_proj, 1),
    )


def _fold_conv_bn(p):
    """Fold Conv bias + inference BN into (k*k*Cin, Cout) weights + (Cout,) bias."""
    cout, cin, k, _ = p['w'].shape            # static shapes
    scale = p['gamma'] / jnp.sqrt(p['var'] + BN_EPS)
    w = jnp.transpose(p['w'], (2, 3, 1, 0)).reshape(k * k * cin, cout)  # tap-major
    w = w * scale[None, :]
    bias = (p['b'] - p['mean']) * scale + p['beta']
    return w, bias, k


# ---------------------------------------------------------------------------
# Forward
# ---------------------------------------------------------------------------
def inception_forward(x_nchw, params):
    x = jnp.transpose(x_nchw, (0, 2, 3, 1))                # NCHW -> NHWC
    N, H, W, cin = x.shape

    w1, bias1, _ = _fold_conv_bn(params['b1'])
    w2r, bias2r, _ = _fold_conv_bn(params['b2_red'])
    w3r, bias3r, _ = _fold_conv_bn(params['b3_red'])
    w2, bias2, k2 = _fold_conv_bn(params['b2'])
    w3, bias3, k3 = _fold_conv_bn(params['b3'])
    wp, biasp, _ = _fold_conv_bn(params['b4'])

    c1, c2r, c3r = w1.shape[-1], w2r.shape[-1], w3r.shape[-1]
    c2, c3, c4 = w2.shape[-1], w3.shape[-1], wp.shape[-1]
    ccat, ctot = c1 + c2r + c3r, c1 + c2 + c3 + c4

    # One lane-dense matmul for the three 1x1 branches (Cout concatenated).
    w1cat = jnp.concatenate([w1, w2r, w3r], axis=-1)        # (Cin, ccat)
    b1cat = jnp.concatenate([bias1, bias2r, bias3r])

    kern = functools.partial(_inception_kernel, H=H, W=W,
                             c1=c1, c2r=c2r, c3r=c3r, k2=k2, k3=k3)
    y = pl.pallas_call(
        kern,
        grid=(N,),
        in_specs=[
            pl.BlockSpec((1, H, W, cin), lambda n: (n, 0, 0, 0)),
            pl.BlockSpec((cin, ccat), lambda n: (0, 0)),
            pl.BlockSpec((1, ccat), lambda n: (0, 0)),
            pl.BlockSpec((k2 * k2 * c2r, c2), lambda n: (0, 0)),
            pl.BlockSpec((1, c2), lambda n: (0, 0)),
            pl.BlockSpec((k3 * k3 * c3r, c3), lambda n: (0, 0)),
            pl.BlockSpec((1, c3), lambda n: (0, 0)),
            pl.BlockSpec((cin, c4), lambda n: (0, 0)),
            pl.BlockSpec((1, c4), lambda n: (0, 0)),
        ],
        out_specs=pl.BlockSpec((1, H, W, ctot), lambda n: (n, 0, 0, 0)),
        out_shape=jax.ShapeDtypeStruct((N, H, W, ctot), jnp.float32),
        compiler_params=pltpu.CompilerParams(
            dimension_semantics=("parallel",)),
    )(x,
      w1cat.astype(jnp.bfloat16), b1cat.reshape(1, -1),
      w2.astype(jnp.bfloat16), bias2.reshape(1, -1),
      w3.astype(jnp.bfloat16), bias3.reshape(1, -1),
      wp.astype(jnp.bfloat16), biasp.reshape(1, -1))

    return jnp.transpose(y, (0, 3, 1, 2))                   # NHWC -> NCHW


# ---------------------------------------------------------------------------
# Pure-JAX reference (correctness check only)
# ---------------------------------------------------------------------------
def _ref_conv_bn_relu(x_nhwc, p):
    k = p['w'].shape[-1]
    pad = (k - 1) // 2
    w_hwio = jnp.transpose(p['w'], (2, 3, 1, 0))
    y = jax.lax.conv_general_dilated(
        x_nhwc, w_hwio, window_strides=(1, 1),
        padding=[(pad, pad), (pad, pad)],
        dimension_numbers=('NHWC', 'HWIO', 'NHWC'))
    y = y + p['b']
    scale = p['gamma'] / jnp.sqrt(p['var'] + BN_EPS)
    y = (y - p['mean']) * scale + p['beta']
    return jnp.maximum(y, 0.0)


def _ref_maxpool(x_nhwc):
    return jax.lax.reduce_window(x_nhwc, -jnp.inf, jax.lax.max,
                                 (1, 3, 3, 1), (1, 1, 1, 1),
                                 [(0, 0), (1, 1), (1, 1), (0, 0)])


def _ref_forward(x_nchw, params):
    x = jnp.transpose(x_nchw, (0, 2, 3, 1))
    b1 = _ref_conv_bn_relu(x, params['b1'])
    b2 = _ref_conv_bn_relu(_ref_conv_bn_relu(x, params['b2_red']), params['b2'])
    b3 = _ref_conv_bn_relu(_ref_conv_bn_relu(x, params['b3_red']), params['b3'])
    b4 = _ref_conv_bn_relu(_ref_maxpool(x), params['b4'])
    y = jnp.concatenate([b1, b2, b3, b4], axis=-1)
    return jnp.transpose(y, (0, 3, 1, 2))


# ---------------------------------------------------------------------------
if __name__ == "__main__":
    key = jax.random.PRNGKey(0)
    kx, kp = jax.random.split(key)

    N, Cin, H, W = 2, 4, 16, 16
    x = jax.random.normal(kx, (N, Cin, H, W), jnp.float32)
    params = init_inception_params(
        kp, Cin, out_1x1=8, out_3x3_red=4, out_3x3=8,
        out_5x5_red=4, out_5x5=8, pool_proj=8)

    fwd = jax.jit(inception_forward)
    out = jax.block_until_ready(fwd(x, params))
    assert out.shape == (N, 8 + 8 + 8 + 8, H, W), out.shape

    ref = _ref_forward(x, params)
    np.testing.assert_allclose(np.asarray(out), np.asarray(ref),
                               rtol=1e-2, atol=1e-2)
    print("KERNEL_OK")
</pallas_src>

<mosaic_0001>
module attributes {stable_mosaic.version = 11 : i64} {
  func.func @_inception_kernel(%arg0: i32, %arg1: memref<1x16x16x4xf32, #tpu.memory_space<vmem>>, %arg2: memref<4x16xbf16, #tpu.memory_space<vmem>>, %arg3: memref<1x16xf32, #tpu.memory_space<vmem>>, %arg4: memref<36x8xbf16, #tpu.memory_space<vmem>>, %arg5: memref<1x8xf32, #tpu.memory_space<vmem>>, %arg6: memref<100x8xbf16, #tpu.memory_space<vmem>>, %arg7: memref<1x8xf32, #tpu.memory_space<vmem>>, %arg8: memref<4x8xbf16, #tpu.memory_space<vmem>>, %arg9: memref<1x8xf32, #tpu.memory_space<vmem>>, %arg10: memref<1x16x16x32xf32, #tpu.memory_space<vmem>>) attributes {dimension_semantics = [#tpu.dimension_semantics<parallel>], iteration_bounds = array<i64: 2>, scalar_prefetch = 0 : i64, scratch_operands = 0 : i64, tpu.core_type = #tpu.core_type<tc>, window_params = [{transform_indices = @transform_0, window_bounds = array<i64: 1, 16, 16, 4>}, {pipeline_mode = #tpu.pipeline_mode<synchronous>, transform_indices = @transform_1, window_bounds = array<i64: 4, 16>}, {pipeline_mode = #tpu.pipeline_mode<synchronous>, transform_indices = @transform_2, window_bounds = array<i64: 1, 16>}, {pipeline_mode = #tpu.pipeline_mode<synchronous>, transform_indices = @transform_3, window_bounds = array<i64: 36, 8>}, {pipeline_mode = #tpu.pipeline_mode<synchronous>, transform_indices = @transform_4, window_bounds = array<i64: 1, 8>}, {pipeline_mode = #tpu.pipeline_mode<synchronous>, transform_indices = @transform_5, window_bounds = array<i64: 100, 8>}, {pipeline_mode = #tpu.pipeline_mode<synchronous>, transform_indices = @transform_6, window_bounds = array<i64: 1, 8>}, {pipeline_mode = #tpu.pipeline_mode<synchronous>, transform_indices = @transform_7, window_bounds = array<i64: 4, 8>}, {pipeline_mode = #tpu.pipeline_mode<synchronous>, transform_indices = @transform_8, window_bounds = array<i64: 1, 8>}, {transform_indices = @transform_9, window_bounds = array<i64: 1, 16, 16, 32>}]} {
    %c0 = arith.constant 0 : index
    %c0_0 = arith.constant 0 : index
    %c0_1 = arith.constant 0 : index
    %c0_2 = arith.constant 0 : index
    %0 = vector.load %arg1[%c0, %c0_0, %c0_1, %c0_2] : memref<1x16x16x4xf32, #tpu.memory_space<vmem>>, vector<1x16x16x4xf32>
    %1 = vector.shape_cast %0 : vector<1x16x16x4xf32> to vector<16x16x4xf32>
    %2 = vector.shape_cast %1 : vector<16x16x4xf32> to vector<256x4xf32>
    %3 = arith.truncf %2 : vector<256x4xf32> to vector<256x4xbf16>
    %c0_3 = arith.constant 0 : index
    %c0_4 = arith.constant 0 : index
    %4 = vector.load %arg2[%c0_3, %c0_4] : memref<4x16xbf16, #tpu.memory_space<vmem>>, vector<4x16xbf16>
    %cst = arith.constant dense<0.000000e+00> : vector<256x16xf32>
    %5 = tpu.matmul %3, %4, %cst {dimension_numbers = #tpu.dot_dimension_numbers<[1], [0], [0], [1], [0, 0, 1, 1], [], []>} : vector<256x4xbf16>, vector<4x16xbf16>, vector<256x16xf32> -> vector<256x16xf32>
    %c0_5 = arith.constant 0 : index
    %c0_6 = arith.constant 0 : index
    %6 = vector.load %arg3[%c0_5, %c0_6] : memref<1x16xf32, #tpu.memory_space<vmem>>, vector<1x16xf32>
    %7 = vector.broadcast %6 : vector<1x16xf32> to vector<256x16xf32>
    %8 = arith.addf %5, %7 : vector<256x16xf32>
    %cst_7 = arith.constant 0.000000e+00 : f32
    %9 = vector.broadcast %cst_7 : f32 to vector<256x16xf32>
    %10 = arith.maximumf %8, %9 : vector<256x16xf32>
    %11 = vector.extract_strided_slice %10 {offsets = [0, 0], sizes = [256, 8], strides = [1, 1]} : vector<256x16xf32> to vector<256x8xf32>
    %12 = vector.extract_strided_slice %10 {offsets = [0, 8], sizes = [256, 4], strides = [1, 1]} : vector<256x16xf32> to vector<256x4xf32>
    %13 = vector.shape_cast %12 : vector<256x4xf32> to vector<16x16x4xf32>
    %14 = vector.extract_strided_slice %10 {offsets = [0, 12], sizes = [256, 4], strides = [1, 1]} : vector<256x16xf32> to vector<256x4xf32>
    %15 = vector.shape_cast %14 : vector<256x4xf32> to vector<16x16x4xf32>
    %c0_8 = arith.constant 0 : index
    %c0_9 = arith.constant 0 : index
    %16 = vector.load %arg4[%c0_8, %c0_9] : memref<36x8xbf16, #tpu.memory_space<vmem>>, vector<36x8xbf16>
    %c0_10 = arith.constant 0 : index
    %c0_11 = arith.constant 0 : index
    %17 = vector.load %arg5[%c0_10, %c0_11] : memref<1x8xf32, #tpu.memory_space<vmem>>, vector<1x8xf32>
    %cst_12 = arith.constant 0.000000e+00 : f32
    %18 = vector.broadcast %cst_12 : f32 to vector<16x1x4xf32>
    %19 = tpu.concatenate %18, %13, %18 in 1 : vector<16x1x4xf32>, vector<16x16x4xf32>, vector<16x1x4xf32> -> vector<16x18x4xf32>
    %cst_13 = arith.constant 0.000000e+00 : f32
    %20 = vector.broadcast %cst_13 : f32 to vector<1x18x4xf32>
    %21 = tpu.concatenate %20, %19, %20 in 0 : vector<1x18x4xf32>, vector<16x18x4xf32>, vector<1x18x4xf32> -> vector<18x18x4xf32>
    %22 = vector.extract_strided_slice %21 {offsets = [0, 0, 0], sizes = [16, 16, 4], strides = [1, 1, 1]} : vector<18x18x4xf32> to vector<16x16x4xf32>
    %23 = vector.shape_cast %22 : vector<16x16x4xf32> to vector<256x4xf32>
    %24 = vector.extract_strided_slice %21 {offsets = [0, 1, 0], sizes = [16, 16, 4], strides = [1, 1, 1]} : vector<18x18x4xf32> to vector<16x16x4xf32>
    %25 = vector.shape_cast %24 : vector<16x16x4xf32> to vector<256x4xf32>
    %26 = vector.extract_strided_slice %21 {offsets = [0, 2, 0], sizes = [16, 16, 4], strides = [1, 1, 1]} : vector<18x18x4xf32> to vector<16x16x4xf32>
    %27 = vector.shape_cast %26 : vector<16x16x4xf32> to vector<256x4xf32>
    %28 = vector.extract_strided_slice %21 {offsets = [1, 0, 0], sizes = [16, 16, 4], strides = [1, 1, 1]} : vector<18x18x4xf32> to vector<16x16x4xf32>
    %29 = vector.shape_cast %28 : vector<16x16x4xf32> to vector<256x4xf32>
    %30 = vector.extract_strided_slice %21 {offsets = [1, 1, 0], sizes = [16, 16, 4], strides = [1, 1, 1]} : vector<18x18x4xf32> to vector<16x16x4xf32>
    %31 = vector.shape_cast %30 : vector<16x16x4xf32> to vector<256x4xf32>
    %32 = vector.extract_strided_slice %21 {offsets = [1, 2, 0], sizes = [16, 16, 4], strides = [1, 1, 1]} : vector<18x18x4xf32> to vector<16x16x4xf32>
    %33 = vector.shape_cast %32 : vector<16x16x4xf32> to vector<256x4xf32>
    %34 = vector.extract_strided_slice %21 {offsets = [2, 0, 0], sizes = [16, 16, 4], strides = [1, 1, 1]} : vector<18x18x4xf32> to vector<16x16x4xf32>
    %35 = vector.shape_cast %34 : vector<16x16x4xf32> to vector<256x4xf32>
    %36 = vector.extract_strided_slice %21 {offsets = [2, 1, 0], sizes = [16, 16, 4], strides = [1, 1, 1]} : vector<18x18x4xf32> to vector<16x16x4xf32>
    %37 = vector.shape_cast %36 : vector<16x16x4xf32> to vector<256x4xf32>
    %38 = vector.extract_strided_slice %21 {offsets = [2, 2, 0], sizes = [16, 16, 4], strides = [1, 1, 1]} : vector<18x18x4xf32> to vector<16x16x4xf32>
    %39 = vector.shape_cast %38 : vector<16x16x4xf32> to vector<256x4xf32>
    %40 = tpu.concatenate %23, %25, %27, %29, %31, %33, %35, %37, %39 in 1 : vector<256x4xf32>, vector<256x4xf32>, vector<256x4xf32>, vector<256x4xf32>, vector<256x4xf32>, vector<256x4xf32>, vector<256x4xf32>, vector<256x4xf32>, vector<256x4xf32> -> vector<256x36xf32>
    %41 = arith.truncf %40 : vector<256x36xf32> to vector<256x36xbf16>
    %cst_14 = arith.constant dense<0.000000e+00> : vector<256x8xf32>
    %42 = tpu.matmul %41, %16, %cst_14 {dimension_numbers = #tpu.dot_dimension_numbers<[1], [0], [0], [1], [0, 0, 1, 1], [], []>} : vector<256x36xbf16>, vector<36x8xbf16>, vector<256x8xf32> -> vector<256x8xf32>
    %43 = vector.broadcast %17 : vector<1x8xf32> to vector<256x8xf32>
    %44 = arith.addf %42, %43 : vector<256x8xf32>
    %cst_15 = arith.constant 0.000000e+00 : f32
    %45 = vector.broadcast %cst_15 : f32 to vector<256x8xf32>
    %46 = arith.maximumf %44, %45 : vector<256x8xf32>
    %c0_16 = arith.constant 0 : index
    %c0_17 = arith.constant 0 : index
    %47 = vector.load %arg6[%c0_16, %c0_17] : memref<100x8xbf16, #tpu.memory_space<vmem>>, vector<100x8xbf16>
    %c0_18 = arith.constant 0 : index
    %c0_19 = arith.constant 0 : index
    %48 = vector.load %arg7[%c0_18, %c0_19] : memref<1x8xf32, #tpu.memory_space<vmem>>, vector<1x8xf32>
    %cst_20 = arith.constant 0.000000e+00 : f32
    %49 = vector.broadcast %cst_20 : f32 to vector<16x2x4xf32>
    %50 = tpu.concatenate %49, %15, %49 in 1 : vector<16x2x4xf32>, vector<16x16x4xf32>, vector<16x2x4xf32> -> vector<16x20x4xf32>
    %cst_21 = arith.constant 0.000000e+00 : f32
    %51 = vector.broadcast %cst_21 : f32 to vector<2x20x4xf32>
    %52 = tpu.concatenate %51, %50, %51 in 0 : vector<2x20x4xf32>, vector<16x20x4xf32>, vector<2x20x4xf32> -> vector<20x20x4xf32>
    %53 = vector.extract_strided_slice %52 {offsets = [0, 0, 0], sizes = [16, 16, 4], strides = [1, 1, 1]} : vector<20x20x4xf32> to vector<16x16x4xf32>
    %54 = vector.shape_cast %53 : vector<16x16x4xf32> to vector<256x4xf32>
    %55 = vector.extract_strided_slice %52 {offsets = [0, 1, 0], sizes = [16, 16, 4], strides = [1, 1, 1]} : vector<20x20x4xf32> to vector<16x16x4xf32>
    %56 = vector.shape_cast %55 : vector<16x16x4xf32> to vector<256x4xf32>
    %57 = vector.extract_strided_slice %52 {offsets = [0, 2, 0], sizes = [16, 16, 4], strides = [1, 1, 1]} : vector<20x20x4xf32> to vector<16x16x4xf32>
    %58 = vector.shape_cast %57 : vector<16x16x4xf32> to vector<256x4xf32>
    %59 = vector.extract_strided_slice %52 {offsets = [0, 3, 0], sizes = [16, 16, 4], strides = [1, 1, 1]} : vector<20x20x4xf32> to vector<16x16x4xf32>
    %60 = vector.shape_cast %59 : vector<16x16x4xf32> to vector<256x4xf32>
    %61 = vector.extract_strided_slice %52 {offsets = [0, 4, 0], sizes = [16, 16, 4], strides = [1, 1, 1]} : vector<20x20x4xf32> to vector<16x16x4xf32>
    %62 = vector.shape_cast %61 : vector<16x16x4xf32> to vector<256x4xf32>
    %63 = vector.extract_strided_slice %52 {offsets = [1, 0, 0], sizes = [16, 16, 4], strides = [1, 1, 1]} : vector<20x20x4xf32> to vector<16x16x4xf32>
    %64 = vector.shape_cast %63 : vector<16x16x4xf32> to vector<256x4xf32>
    %65 = vector.extract_strided_slice %52 {offsets = [1, 1, 0], sizes = [16, 16, 4], strides = [1, 1, 1]} : vector<20x20x4xf32> to vector<16x16x4xf32>
    %66 = vector.shape_cast %65 : vector<16x16x4xf32> to vector<256x4xf32>
    %67 = vector.extract_strided_slice %52 {offsets = [1, 2, 0], sizes = [16, 16, 4], strides = [1, 1, 1]} : vector<20x20x4xf32> to vector<16x16x4xf32>
    %68 = vector.shape_cast %67 : vector<16x16x4xf32> to vector<256x4xf32>
    %69 = vector.extract_strided_slice %52 {offsets = [1, 3, 0], sizes = [16, 16, 4], strides = [1, 1, 1]} : vector<20x20x4xf32> to vector<16x16x4xf32>
    %70 = vector.shape_cast %69 : vector<16x16x4xf32> to vector<256x4xf32>
    %71 = vector.extract_strided_slice %52 {offsets = [1, 4, 0], sizes = [16, 16, 4], strides = [1, 1, 1]} : vector<20x20x4xf32> to vector<16x16x4xf32>
    %72 = vector.shape_cast %71 : vector<16x16x4xf32> to vector<256x4xf32>
    %73 = vector.extract_strided_slice %52 {offsets = [2, 0, 0], sizes = [16, 16, 4], strides = [1, 1, 1]} : vector<20x20x4xf32> to vector<16x16x4xf32>
    %74 = vector.shape_cast %73 : vector<16x16x4xf32> to vector<256x4xf32>
    %75 = vector.extract_strided_slice %52 {offsets = [2, 1, 0], sizes = [16, 16, 4], strides = [1, 1, 1]} : vector<20x20x4xf32> to vector<16x16x4xf32>
    %76 = vector.shape_cast %75 : vector<16x16x4xf32> to vector<256x4xf32>
    %77 = vector.extract_strided_slice %52 {offsets = [2, 2, 0], sizes = [16, 16, 4], strides = [1, 1, 1]} : vector<20x20x4xf32> to vector<16x16x4xf32>
    %78 = vector.shape_cast %77 : vector<16x16x4xf32> to vector<256x4xf32>
    %79 = vector.extract_strided_slice %52 {offsets = [2, 3, 0], sizes = [16, 16, 4], strides = [1, 1, 1]} : vector<20x20x4xf32> to vector<16x16x4xf32>
    %80 = vector.shape_cast %79 : vector<16x16x4xf32> to vector<256x4xf32>
    %81 = vector.extract_strided_slice %52 {offsets = [2, 4, 0], sizes = [16, 16, 4], strides = [1, 1, 1]} : vector<20x20x4xf32> to vector<16x16x4xf32>
    %82 = vector.shape_cast %81 : vector<16x16x4xf32> to vector<256x4xf32>
    %83 = vector.extract_strided_slice %52 {offsets = [3, 0, 0], sizes = [16, 16, 4], strides = [1, 1, 1]} : vector<20x20x4xf32> to vector<16x16x4xf32>
    %84 = vector.shape_cast %83 : vector<16x16x4xf32> to vector<256x4xf32>
    %85 = vector.extract_strided_slice %52 {offsets = [3, 1, 0], sizes = [16, 16, 4], strides = [1, 1, 1]} : vector<20x20x4xf32> to vector<16x16x4xf32>
    %86 = vector.shape_cast %85 : vector<16x16x4xf32> to vector<256x4xf32>
    %87 = vector.extract_strided_slice %52 {offsets = [3, 2, 0], sizes = [16, 16, 4], strides = [1, 1, 1]} : vector<20x20x4xf32> to vector<16x16x4xf32>
    %88 = vector.shape_cast %87 : vector<16x16x4xf32> to vector<256x4xf32>
    %89 = vector.extract_strided_slice %52 {offsets = [3, 3, 0], sizes = [16, 16, 4], strides = [1, 1, 1]} : vector<20x20x4xf32> to vector<16x16x4xf32>
    %90 = vector.shape_cast %89 : vector<16x16x4xf32> to vector<256x4xf32>
    %91 = vector.extract_strided_slice %52 {offsets = [3, 4, 0], sizes = [16, 16, 4], strides = [1, 1, 1]} : vector<20x20x4xf32> to vector<16x16x4xf32>
    %92 = vector.shape_cast %91 : vector<16x16x4xf32> to vector<256x4xf32>
    %93 = vector.extract_strided_slice %52 {offsets = [4, 0, 0], sizes = [16, 16, 4], strides = [1, 1, 1]} : vector<20x20x4xf32> to vector<16x16x4xf32>
    %94 = vector.shape_cast %93 : vector<16x16x4xf32> to vector<256x4xf32>
    %95 = vector.extract_strided_slice %52 {offsets = [4, 1, 0], sizes = [16, 16, 4], strides = [1, 1, 1]} : vector<20x20x4xf32> to vector<16x16x4xf32>
    %96 = vector.shape_cast %95 : vector<16x16x4xf32> to vector<256x4xf32>
    %97 = vector.extract_strided_slice %52 {offsets = [4, 2, 0], sizes = [16, 16, 4], strides = [1, 1, 1]} : vector<20x20x4xf32> to vector<16x16x4xf32>
    %98 = vector.shape_cast %97 : vector<16x16x4xf32> to vector<256x4xf32>
    %99 = vector.extract_strided_slice %52 {offsets = [4, 3, 0], sizes = [16, 16, 4], strides = [1, 1, 1]} : vector<20x20x4xf32> to vector<16x16x4xf32>
    %100 = vector.shape_cast %99 : vector<16x16x4xf32> to vector<256x4xf32>
    %101 = vector.extract_strided_slice %52 {offsets = [4, 4, 0], sizes = [16, 16, 4], strides = [1, 1, 1]} : vector<20x20x4xf32> to vector<16x16x4xf32>
    %102 = vector.shape_cast %101 : vector<16x16x4xf32> to vector<256x4xf32>
    %103 = tpu.concatenate %54, %56, %58, %60, %62, %64, %66, %68, %70, %72, %74, %76, %78, %80, %82, %84 in 1 : vector<256x4xf32>, vector<256x4xf32>, vector<256x4xf32>, vector<256x4xf32>, vector<256x4xf32>, vector<256x4xf32>, vector<256x4xf32>, vector<256x4xf32>, vector<256x4xf32>, vector<256x4xf32>, vector<256x4xf32>, vector<256x4xf32>, vector<256x4xf32>, vector<256x4xf32>, vector<256x4xf32>, vector<256x4xf32> -> vector<256x64xf32>
    %104 = tpu.concatenate %86, %88, %90, %92, %94, %96, %98, %100, %102 in 1 : vector<256x4xf32>, vector<256x4xf32>, vector<256x4xf32>, vector<256x4xf32>, vector<256x4xf32>, vector<256x4xf32>, vector<256x4xf32>, vector<256x4xf32>, vector<256x4xf32> -> vector<256x36xf32>
    %105 = tpu.concatenate %103, %104 in 1 : vector<256x64xf32>, vector<256x36xf32> -> vector<256x100xf32>
    %106 = arith.truncf %105 : vector<256x100xf32> to vector<256x100xbf16>
    %cst_22 = arith.constant dense<0.000000e+00> : vector<256x8xf32>
    %107 = tpu.matmul %106, %47, %cst_22 {dimension_numbers = #tpu.dot_dimension_numbers<[1], [0], [0], [1], [0, 0, 1, 1], [], []>} : vector<256x100xbf16>, vector<100x8xbf16>, vector<256x8xf32> -> vector<256x8xf32>
    %108 = vector.broadcast %48 : vector<1x8xf32> to vector<256x8xf32>
    %109 = arith.addf %107, %108 : vector<256x8xf32>
    %cst_23 = arith.constant 0.000000e+00 : f32
    %110 = vector.broadcast %cst_23 : f32 to vector<256x8xf32>
    %111 = arith.maximumf %109, %110 : vector<256x8xf32>
    %cst_24 = arith.constant 0xFF800000 : f32
    %112 = vector.broadcast %cst_24 : f32 to vector<16x1x4xf32>
    %113 = tpu.concatenate %112, %1, %112 in 1 : vector<16x1x4xf32>, vector<16x16x4xf32>, vector<16x1x4xf32> -> vector<16x18x4xf32>
    %cst_25 = arith.constant 0xFF800000 : f32
    %114 = vector.broadcast %cst_25 : f32 to vector<1x18x4xf32>
    %115 = tpu.concatenate %114, %113, %114 in 0 : vector<1x18x4xf32>, vector<16x18x4xf32>, vector<1x18x4xf32> -> vector<18x18x4xf32>
    %116 = vector.extract_strided_slice %115 {offsets = [0, 0, 0], sizes = [18, 16, 4], strides = [1, 1, 1]} : vector<18x18x4xf32> to vector<18x16x4xf32>
    %117 = vector.extract_strided_slice %115 {offsets = [0, 1, 0], sizes = [18, 16, 4], strides = [1, 1, 1]} : vector<18x18x4xf32> to vector<18x16x4xf32>
    %118 = arith.maximumf %116, %117 : vector<18x16x4xf32>
    %119 = vector.extract_strided_slice %115 {offsets = [0, 2, 0], sizes = [18, 16, 4], strides = [1, 1, 1]} : vector<18x18x4xf32> to vector<18x16x4xf32>
    %120 = arith.maximumf %118, %119 : vector<18x16x4xf32>
    %121 = vector.extract_strided_slice %120 {offsets = [0, 0, 0], sizes = [16, 16, 4], strides = [1, 1, 1]} : vector<18x16x4xf32> to vector<16x16x4xf32>
    %122 = vector.extract_strided_slice %120 {offsets = [1, 0, 0], sizes = [16, 16, 4], strides = [1, 1, 1]} : vector<18x16x4xf32> to vector<16x16x4xf32>
    %123 = arith.maximumf %121, %122 : vector<16x16x4xf32>
    %124 = vector.extract_strided_slice %120 {offsets = [2, 0, 0], sizes = [16, 16, 4], strides = [1, 1, 1]} : vector<18x16x4xf32> to vector<16x16x4xf32>
    %125 = arith.maximumf %123, %124 : vector<16x16x4xf32>
    %126 = vector.shape_cast %125 : vector<16x16x4xf32> to vector<256x4xf32>
    %127 = arith.truncf %126 : vector<256x4xf32> to vector<256x4xbf16>
    %c0_26 = arith.constant 0 : index
    %c0_27 = arith.constant 0 : index
    %128 = vector.load %arg8[%c0_26, %c0_27] : memref<4x8xbf16, #tpu.memory_space<vmem>>, vector<4x8xbf16>
    %cst_28 = arith.constant dense<0.000000e+00> : vector<256x8xf32>
    %129 = tpu.matmul %127, %128, %cst_28 {dimension_numbers = #tpu.dot_dimension_numbers<[1], [0], [0], [1], [0, 0, 1, 1], [], []>} : vector<256x4xbf16>, vector<4x8xbf16>, vector<256x8xf32> -> vector<256x8xf32>
    %c0_29 = arith.constant 0 : index
    %c0_30 = arith.constant 0 : index
    %130 = vector.load %arg9[%c0_29, %c0_30] : memref<1x8xf32, #tpu.memory_space<vmem>>, vector<1x8xf32>
    %131 = vector.broadcast %130 : vector<1x8xf32> to vector<256x8xf32>
    %132 = arith.addf %129, %131 : vector<256x8xf32>
    %cst_31 = arith.constant 0.000000e+00 : f32
    %133 = vector.broadcast %cst_31 : f32 to vector<256x8xf32>
    %134 = arith.maximumf %132, %133 : vector<256x8xf32>
    %135 = tpu.concatenate %11, %46, %111, %134 in 1 : vector<256x8xf32>, vector<256x8xf32>, vector<256x8xf32>, vector<256x8xf32> -> vector<256x32xf32>
    %136 = vector.shape_cast %135 : vector<256x32xf32> to vector<16x16x32xf32>
    %c0_32 = arith.constant 0 : index
    %c0_33 = arith.constant 0 : index
    %c0_34 = arith.constant 0 : index
    %c0_35 = arith.constant 0 : index
    %137 = vector.load %arg10[%c0_32, %c0_33, %c0_34, %c0_35] : memref<1x16x16x32xf32, #tpu.memory_space<vmem>>, vector<1x16x16x32xf32>
    %138 = vector.shape_cast %137 : vector<1x16x16x32xf32> to vector<16x16x32xf32>
    %139 = vector.shape_cast %136 : vector<16x16x32xf32> to vector<1x16x16x32xf32>
    tpu.vector_store %arg10[%c0_32, %c0_33, %c0_34, %c0_35], %139 {strides = array<i32>} : memref<1x16x16x32xf32, #tpu.memory_space<vmem>>, vector<1x16x16x32xf32>,
    return
  }
  func.func @transform_0(%arg0: i32) -> (i32, i32, i32, i32) {
    %c0_i32 = arith.constant 0 : i32
    %c0_i32_0 = arith.constant 0 : i32
    %c0_i32_1 = arith.constant 0 : i32
    %c0_i32_2 = arith.constant 0 : i32
    return %arg0, %c0_i32, %c0_i32_0, %c0_i32_1 : i32, i32, i32, i32
  }
  func.func @transform_1(%arg0: i32) -> (i32, i32) {
    %c0_i32 = arith.constant 0 : i32
    %c0_i32_0 = arith.constant 0 : i32
    %c0_i32_1 = arith.constant 0 : i32
    return %c0_i32, %c0_i32_0 : i32, i32
  }
  func.func @transform_2(%arg0: i32) -> (i32, i32) {
    %c0_i32 = arith.constant 0 : i32
    %c0_i32_0 = arith.constant 0 : i32
    %c0_i32_1 = arith.constant 0 : i32
    return %c0_i32, %c0_i32_0 : i32, i32
  }
  func.func @transform_3(%arg0: i32) -> (i32, i32) {
    %c0_i32 = arith.constant 0 : i32
    %c0_i32_0 = arith.constant 0 : i32
    %c0_i32_1 = arith.constant 0 : i32
    return %c0_i32, %c0_i32_0 : i32, i32
  }
  func.func @transform_4(%arg0: i32) -> (i32, i32) {
    %c0_i32 = arith.constant 0 : i32
    %c0_i32_0 = arith.constant 0 : i32
    %c0_i32_1 = arith.constant 0 : i32
    return %c0_i32, %c0_i32_0 : i32, i32
  }
  func.func @transform_5(%arg0: i32) -> (i32, i32) {
    %c0_i32 = arith.constant 0 : i32
    %c0_i32_0 = arith.constant 0 : i32
    %c0_i32_1 = arith.constant 0 : i32
    return %c0_i32, %c0_i32_0 : i32, i32
  }
  func.func @transform_6(%arg0: i32) -> (i32, i32) {
    %c0_i32 = arith.constant 0 : i32
    %c0_i32_0 = arith.constant 0 : i32
    %c0_i32_1 = arith.constant 0 : i32
    return %c0_i32, %c0_i32_0 : i32, i32
  }
  func.func @transform_7(%arg0: i32) -> (i32, i32) {
    %c0_i32 = arith.constant 0 : i32
    %c0_i32_0 = arith.constant 0 : i32
    %c0_i32_1 = arith.constant 0 : i32
    return %c0_i32, %c0_i32_0 : i32, i32
  }
  func.func @transform_8(%arg0: i32) -> (i32, i32) {
    %c0_i32 = arith.constant 0 : i32
    %c0_i32_0 = arith.constant 0 : i32
    %c0_i32_1 = arith.constant 0 : i32
    return %c0_i32, %c0_i32_0 : i32, i32
  }
  func.func @transform_9(%arg0: i32) -> (i32, i32, i32, i32) {
    %c0_i32 = arith.constant 0 : i32
    %c0_i32_0 = arith.constant 0 : i32
    %c0_i32_1 = arith.constant 0 : i32
    %c0_i32_2 = arith.constant 0 : i32
    return %arg0, %c0_i32, %c0_i32_0, %c0_i32_1 : i32, i32, i32, i32
  }
}

</mosaic_0001>

<llo_original>
// kernel: inception_forward.1
$region0: #{inception_forward.1}
  #allocation0 [shape = 'u32[]', space=smem, size = 0x4, offset = 0x4, fixed_abs, tag = 'smem constant byte address 0x4 - core index']
  #allocation1 [shape = 'u32[144,128]{1,0:T(1,128)}', space=vmem, size = 0x12000, scoped, tag = 'internal scratch']
  %s0 = inlined_call_operand.vmem [shape: f32[2,16,16,4], index: 0, kind: input, shape index: {}]
  %s1 = inlined_call_operand.vmem [shape: bf16[4,16], index: 1, kind: input, shape index: {}]
  %s2 = inlined_call_operand.vmem [shape: f32[1,16], index: 2, kind: input, shape index: {}]
  %s3 = inlined_call_operand.vmem [shape: bf16[36,8], index: 3, kind: input, shape index: {}]
  %s4 = inlined_call_operand.vmem [shape: f32[1,8], index: 4, kind: input, shape index: {}]
  %s5 = inlined_call_operand.vmem [shape: bf16[100,8], index: 5, kind: input, shape index: {}]
  %s6 = inlined_call_operand.vmem [shape: f32[1,8], index: 6, kind: input, shape index: {}]
  %s7 = inlined_call_operand.vmem [shape: bf16[4,8], index: 7, kind: input, shape index: {}]
  %s8 = inlined_call_operand.vmem [shape: f32[1,8], index: 8, kind: input, shape index: {}]
  %s9 = inlined_call_operand.hbm [shape: f32[2,16,16,32], index: 9, kind: output, shape index: {}]
  %s10 = sld [smem:[#allocation0]]
  $region69: #{inception_forward.1} parent=0
    _
  %s12 = ssub.s32 1, %s10
  %s13 = scalar_select 0, %s12, %s10
  $region1: #{inception_forward.1} parent=0
    #allocation2 [shape = 'u8[262144]{0}', space=vmem, size = 0x40000, scoped, tag = 'output window, operand 0']
    #allocation3 [shape = 's32[2]{0}', space=sflag, size = 0x8, scoped, tag = 'scoped memory for inception_forward.1']
    %14 = vsyncpa [#allocation3], 0
    %s15 = scalar_lea.sflag [#allocation3], 1
    %16 = vsyncpa %s15, 0
    loop: start=0, step=1, limit=4
    $region2: #{inception_forward.1} parent=1 // loop_pre_header
      _
    $region3: #{inception_forward.1} parent=1 // loop_header
      %s18 = sphi 0, %s22
      %p19 = scmp.ge.s32.totalorder %s18, 4
      %s28 = sphi 0, %s30
      %s31 = sphi 0, %s28
      %s32 = sphi 0, %s31
      %s48 = sphi 0, %s32
      %s52 = sphi 0, %s52
      %s54 = sphi 0, %s52
      %s55 = sphi 0, %s54
      %s69 = sphi 0, %s55
      %s73 = sphi 0, %s73
      %s75 = sphi 0, %s73
      %s76 = sphi 0, %s75
      %s90 = sphi 0, %s76
      %s94 = sphi 0, %s94
      %s96 = sphi 0, %s94
      %s97 = sphi 0, %s96
      %s111 = sphi 0, %s97
      %s115 = sphi 0, %s115
      %s117 = sphi 0, %s115
      %s118 = sphi 0, %s117
      %s132 = sphi 0, %s118
      %s136 = sphi 0, %s136
      %s138 = sphi 0, %s136
      %s139 = sphi 0, %s138
      %s153 = sphi 0, %s139
      %s157 = sphi 0, %s157
      %s159 = sphi 0, %s157
      %s160 = sphi 0, %s159
      %s174 = sphi 0, %s160
      %s178 = sphi 0, %s178
      %s180 = sphi 0, %s178
      %s181 = sphi 0, %s180
      %s195 = sphi 0, %s181
      %s199 = sphi 0, %s199
      %s201 = sphi 0, %s199
      %s202 = sphi 0, %s201
      %s216 = sphi 0, %s202
      %s222 = sphi 0, %s224
      %s225 = sphi 0, %s222
      %s226 = sphi 0, %s225
      %s242 = sphi 0, %s226
    $region4: #{inception_forward.1} parent=1 // loop_header_branch
      %21 = sbr.rel (%p19) target = $region8
    $region5: #{inception_forward.1} parent=1 // loop_body
      %s23 = ssub.s32 %s18, 1
      %s24 = ssub.s32 %s18, 2
      %s25 = sadd.s32 %s18, 1
      %s26 = ssub.s32 %s18, %s25
      %p27 = scmp.eq.s32.totalorder %s26, 0
      %s29 = sadd.s32 %s28, 1
      %s30 = scalar_select %p27, %s28, %s29
      %p33 = pneg %p27
      %p34 = scmp.eq.s32.totalorder %s18, 1
      %p35 = por %p33, %p34
      %p36 = scmp.ne.s32.totalorder %s28, %s31
      %p37 = scmp.eq.s32.totalorder %s18, 0
      %p38 = por %p36, %p37
      %p39 = scmp.ne.s32.totalorder %s28, %s31
      %p40 = scmp.eq.s32.totalorder %s23, 1
      %p41 = por %p39, %p40
      %p42 = scmp.ne.s32.totalorder %s31, %s32
      %p43 = scmp.eq.s32.totalorder %s23, 0
      %p44 = por %p42, %p43
      %p45 = scmp.ne.s32.totalorder %s31, %s32
      %p46 = scmp.eq.s32.totalorder %s24, 1
      %p47 = por %p45, %p46
      %p49 = scmp.ne.s32.totalorder %s32, %s48
      %p50 = scmp.eq.s32.totalorder %s24, 0
      %p51 = por %p49, %p50
      %s53 = sadd.s32 %s52, 1
      %p56 = scmp.eq.s32.totalorder %s18, 1
      %p57 = scmp.ne.s32.totalorder %s52, %s54
      %p58 = scmp.eq.s32.totalorder %s18, 0
      %p59 = por %p57, %p58
      %p60 = scmp.ne.s32.totalorder %s52, %s54
      %p61 = scmp.eq.s32.totalorder %s23, 1
      %p62 = por %p60, %p61
      %p63 = scmp.ne.s32.totalorder %s54, %s55
      %p64 = scmp.eq.s32.totalorder %s23, 0
      %p65 = por %p63, %p64
      %p66 = scmp.ne.s32.totalorder %s54, %s55
      %p67 = scmp.eq.s32.totalorder %s24, 1
      %p68 = por %p66, %p67
      %p70 = scmp.ne.s32.totalorder %s55, %s69
      %p71 = scmp.eq.s32.totalorder %s24, 0
      %p72 = por %p70, %p71
      %s74 = sadd.s32 %s73, 1
      %p77 = scmp.eq.s32.totalorder %s18, 1
      %p78 = scmp.ne.s32.totalorder %s73, %s75
      %p79 = scmp.eq.s32.totalorder %s18, 0
      %p80 = por %p78, %p79
      %p81 = scmp.ne.s32.totalorder %s73, %s75
      %p82 = scmp.eq.s32.totalorder %s23, 1
      %p83 = por %p81, %p82
      %p84 = scmp.ne.s32.totalorder %s75, %s76
      %p85 = scmp.eq.s32.totalorder %s23, 0
      %p86 = por %p84, %p85
      %p87 = scmp.ne.s32.totalorder %s75, %s76
      %p88 = scmp.eq.s32.totalorder %s24, 1
      %p89 = por %p87, %p88
      %p91 = scmp.ne.s32.totalorder %s76, %s90
      %p92 = scmp.eq.s32.totalorder %s24, 0
      %p93 = por %p91, %p92
      %s95 = sadd.s32 %s94, 1
      %p98 = scmp.eq.s32.totalorder %s18, 1
      %p99 = scmp.ne.s32.totalorder %s94, %s96
      %p100 = scmp.eq.s32.totalorder %s18, 0
      %p101 = por %p99, %p100
      %p102 = scmp.ne.s32.totalorder %s94, %s96
      %p103 = scmp.eq.s32.totalorder %s23, 1
      %p104 = por %p102, %p103
      %p105 = scmp.ne.s32.totalorder %s96, %s97
      %p106 = scmp.eq.s32.totalorder %s23, 0
      %p107 = por %p105, %p106
      %p108 = scmp.ne.s32.totalorder %s96, %s97
      %p109 = scmp.eq.s32.totalorder %s24, 1
      %p110 = por %p108, %p109
      %p112 = scmp.ne.s32.totalorder %s97, %s111
      %p113 = scmp.eq.s32.totalorder %s24, 0
      %p114 = por %p112, %p113
      %s116 = sadd.s32 %s115, 1
      %p119 = scmp.eq.s32.totalorder %s18, 1
      %p120 = scmp.ne.s32.totalorder %s115, %s117
      %p121 = scmp.eq.s32.totalorder %s18, 0
      %p122 = por %p120, %p121
      %p123 = scmp.ne.s32.totalorder %s115, %s117
      %p124 = scmp.eq.s32.totalorder %s23, 1
      %p125 = por %p123, %p124
      %p126 = scmp.ne.s32.totalorder %s117, %s118
      %p127 = scmp.eq.s32.totalorder %s23, 0
      %p128 = por %p126, %p127
      %p129 = scmp.ne.s32.totalorder %s117, %s118
      %p130 = scmp.eq.s32.totalorder %s24, 1
      %p131 = por %p129, %p130
      %p133 = scmp.ne.s32.totalorder %s118, %s132
      %p134 = scmp.eq.s32.totalorder %s24, 0
      %p135 = por %p133, %p134
      %s137 = sadd.s32 %s136, 1
      %p140 = scmp.eq.s32.totalorder %s18, 1
      %p141 = scmp.ne.s32.totalorder %s136, %s138
      %p142 = scmp.eq.s32.totalorder %s18, 0
      %p143 = por %p141, %p142
      %p144 = scmp.ne.s32.totalorder %s136, %s138
      %p145 = scmp.eq.s32.totalorder %s23, 1
      %p146 = por %p144, %p145
      %p147 = scmp.ne.s32.totalorder %s138, %s139
      %p148 = scmp.eq.s32.totalorder %s23, 0
      %p149 = por %p147, %p148
      %p150 = scmp.ne.s32.totalorder %s138, %s139
      %p151 = scmp.eq.s32.totalorder %s24, 1
      %p152 = por %p150, %p151
      %p154 = scmp.ne.s32.totalorder %s139, %s153
      %p155 = scmp.eq.s32.totalorder %s24, 0
      %p156 = por %p154, %p155
      %s158 = sadd.s32 %s157, 1
      %p161 = scmp.eq.s32.totalorder %s18, 1
      %p162 = scmp.ne.s32.totalorder %s157, %s159
      %p163 = scmp.eq.s32.totalorder %s18, 0
      %p164 = por %p162, %p163
      %p165 = scmp.ne.s32.totalorder %s157, %s159
      %p166 = scmp.eq.s32.totalorder %s23, 1
      %p167 = por %p165, %p166
      %p168 = scmp.ne.s32.totalorder %s159, %s160
      %p169 = scmp.eq.s32.totalorder %s23, 0
      %p170 = por %p168, %p169
      %p171 = scmp.ne.s32.totalorder %s159, %s160
      %p172 = scmp.eq.s32.totalorder %s24, 1
      %p173 = por %p171, %p172
      %p175 = scmp.ne.s32.totalorder %s160, %s174
      %p176 = scmp.eq.s32.totalorder %s24, 0
      %p177 = por %p175, %p176
      %s179 = sadd.s32 %s178, 1
      %p182 = scmp.eq.s32.totalorder %s18, 1
      %p183 = scmp.ne.s32.totalorder %s178, %s180
      %p184 = scmp.eq.s32.totalorder %s18, 0
      %p185 = por %p183, %p184
      %p186 = scmp.ne.s32.totalorder %s178, %s180
      %p187 = scmp.eq.s32.totalorder %s23, 1
      %p188 = por %p186, %p187
      %p189 = scmp.ne.s32.totalorder %s180, %s181
      %p190 = scmp.eq.s32.totalorder %s23, 0
      %p191 = por %p189, %p190
      %p192 = scmp.ne.s32.totalorder %s180, %s181
      %p193 = scmp.eq.s32.totalorder %s24, 1
      %p194 = por %p192, %p193
      %p196 = scmp.ne.s32.totalorder %s181, %s195
      %p197 = scmp.eq.s32.totalorder %s24, 0
      %p198 = por %p196, %p197
      %s200 = sadd.s32 %s199, 1
      %p203 = scmp.eq.s32.totalorder %s18, 1
      %p204 = scmp.ne.s32.totalorder %s199, %s201
      %p205 = scmp.eq.s32.totalorder %s18, 0
      %p206 = por %p204, %p205
      %p207 = scmp.ne.s32.totalorder %s199, %s201
      %p208 = scmp.eq.s32.totalorder %s23, 1
      %p209 = por %p207, %p208
      %p210 = scmp.ne.s32.totalorder %s201, %s202
      %p211 = scmp.eq.s32.totalorder %s23, 0
      %p212 = por %p210, %p211
      %p213 = scmp.ne.s32.totalorder %s201, %s202
      %p214 = scmp.eq.s32.totalorder %s24, 1
      %p215 = por %p213, %p214
      %p217 = scmp.ne.s32.totalorder %s202, %s216
      %p218 = scmp.eq.s32.totalorder %s24, 0
      %p219 = por %p217, %p218
      %s220 = ssub.s32 %s18, %s25
      %p221 = scmp.eq.s32.totalorder %s220, 0
      %s223 = sadd.s32 %s222, 1
      %s224 = scalar_select %p221, %s222, %s223
      %p227 = pneg %p221
      %p228 = scmp.eq.s32.totalorder %s18, 1
      %p229 = por %p227, %p228
      %p230 = scmp.ne.s32.totalorder %s222, %s225
      %p231 = scmp.eq.s32.totalorder %s18, 0
      %p232 = por %p230, %p231
      %p233 = scmp.ne.s32.totalorder %s222, %s225
      %p234 = scmp.eq.s32.totalorder %s23, 1
      %p235 = por %p233, %p234
      %p236 = scmp.ne.s32.totalorder %s225, %s226
      %p237 = scmp.eq.s32.totalorder %s23, 0
      %p238 = por %p236, %p237
      %p239 = scmp.ne.s32.totalorder %s225, %s226
      %p240 = scmp.eq.s32.totalorder %s24, 1
      %p241 = por %p239, %p240
      %p243 = scmp.ne.s32.totalorder %s226, %s242
      %p244 = scmp.eq.s32.totalorder %s24, 0
      %p245 = por %p243, %p244
      %p246 = scmp.le.s32.totalorder 1, %s18
      %p247 = scmp.lt.s32.totalorder %s18, 3
      %p248 = pnand %p246, %p247
      %p249 = pneg %p248
      // Predicated region
      $region9: #{inception_forward.1} parent=5 // pred_check
        _
      $region10: #{inception_forward.1} parent=5 // pred_check_branch
        %251 = sbr.rel (%p248) target = $region12
      $region11: #{inception_forward.1} parent=5 // pred_region
        %s252 = ssub.s32 %s18, 1
        // Predicated region
        $region13: #{inception_forward.1} parent=11 // pred_check
          %p253 = pneg %p65
        $region14: #{inception_forward.1} parent=11 // pred_check_branch
          %255 = sbr.rel (%p253) target = $region16
        $region15: #{inception_forward.1} parent=11 // pred_region
          _
        $region16: #{inception_forward.1} parent=11 // pred_fallthru
          _
        // Predicated region
        $region17: #{inception_forward.1} parent=11 // pred_check
          %p256 = pneg %p86
        $region18: #{inception_forward.1} parent=11 // pred_check_branch
          %258 = sbr.rel (%p256) target = $region20
        $region19: #{inception_forward.1} parent=11 // pred_region
          _
        $region20: #{inception_forward.1} parent=11 // pred_fallthru
          _
        // Predicated region
        $region21: #{inception_forward.1} parent=11 // pred_check
          %p259 = pneg %p107
        $region22: #{inception_forward.1} parent=11 // pred_check_branch
          %261 = sbr.rel (%p259) target = $region24
        $region23: #{inception_forward.1} parent=11 // pred_region
          _
        $region24: #{inception_forward.1} parent=11 // pred_fallthru
          _
        // Predicated region
        $region25: #{inception_forward.1} parent=11 // pred_check
          %p262 = pneg %p128
        $region26: #{inception_forward.1} parent=11 // pred_check_branch
          %264 = sbr.rel (%p262) target = $region28
        $region27: #{inception_forward.1} parent=11 // pred_region
          _
        $region28: #{inception_forward.1} parent=11 // pred_fallthru
          _
        // Predicated region
        $region29: #{inception_forward.1} parent=11 // pred_check
          %p265 = pneg %p149
        $region30: #{inception_forward.1} parent=11 // pred_check_branch
          %267 = sbr.rel (%p265) target = $region32
        $region31: #{inception_forward.1} parent=11 // pred_region
          _
        $region32: #{inception_forward.1} parent=11 // pred_fallthru
          _
        // Predicated region
        $region33: #{inception_forward.1} parent=11 // pred_check
          %p268 = pneg %p170
        $region34: #{inception_forward.1} parent=11 // pred_check_branch
          %270 = sbr.rel (%p268) target = $region36
        $region35: #{inception_forward.1} parent=11 // pred_region
          _
        $region36: #{inception_forward.1} parent=11 // pred_fallthru
          _
        // Predicated region
        $region37: #{inception_forward.1} parent=11 // pred_check
          %p271 = pneg %p191
        $region38: #{inception_forward.1} parent=11 // pred_check_branch
          %273 = sbr.rel (%p271) target = $region40
        $region39: #{inception_forward.1} parent=11 // pred_region
          _
        $region40: #{inception_forward.1} parent=11 // pred_fallthru
          _
        // Predicated region
        $region41: #{inception_forward.1} parent=11 // pred_check
          %p274 = pneg %p212
        $region42: #{inception_forward.1} parent=11 // pred_check_branch
          %276 = sbr.rel (%p274) target = $region44
        $region43: #{inception_forward.1} parent=11 // pred_region
          _
        $region44: #{inception_forward.1} parent=11 // pred_fallthru
          _
      $region12: #{inception_forward.1} parent=5 // pred_fallthru
        _
      %p277 = scmp.lt.s32.totalorder %s18, 2
      // Predicated region
      $region45: #{inception_forward.1} parent=5 // pred_check
        %p278 = pneg %p277
      $region46: #{inception_forward.1} parent=5 // pred_check_branch
        %280 = sbr.rel (%p278) target = $region48
      $region47: #{inception_forward.1} parent=5 // pred_region
        // Predicated region
        $region49: #{inception_forward.1} parent=47 // pred_check
          %p281 = pneg %p38
        $region50: #{inception_forward.1} parent=47 // pred_check_branch
          %283 = sbr.rel (%p281) target = $region52
        $region51: #{inception_forward.1} parent=47 // pred_region
          %p284 = scmp.lt.s32.totalorder %s18, 1
          %s285 = scalar_select %p284, %s18, 1
          %s286 = smul.addr %s285, 32
          %s287 = smul.addr %s286, 8
          %s288 = scalar_lea.vmem %s0, %s287
        $region52: #{inception_forward.1} parent=47 // pred_fallthru
          _
      $region48: #{inception_forward.1} parent=5 // pred_fallthru
        _
      %p289 = scmp.le.s32.totalorder 1, %s18
      %p290 = scmp.lt.s32.totalorder %s18, 3
      %p291 = pnand %p289, %p290
      %p292 = pneg %p291
      // Predicated region
      $region53: #{inception_forward.1} parent=5 // pred_check
        _
      $region54: #{inception_forward.1} parent=5 // pred_check_branch
        %294 = sbr.rel (%p291) target = $region56
      $region55: #{inception_forward.1} parent=5 // pred_region
        %s295 = ssub.s32 %s18, 1
        %p296 = scmp.lt.s32.totalorder %s23, 1
        %s297 = scalar_select %p296, %s23, 1
        %s298 = smul.addr %s297, 32
        %s299 = smul.addr %s298, 8
        %s300 = scalar_lea.vmem %s0, %s299
        %p301 = pneg %p44
        %p302 = pneg %p41
        %p303 = pneg %p65
        %p304 = pneg %p62
        %p305 = pneg %p86
        %p306 = pneg %p83
        %p307 = pneg %p107
        %p308 = pneg %p104
        %p309 = pneg %p128
        %p310 = pneg %p125
        %p311 = pneg %p149
        %p312 = pneg %p146
        %p313 = pneg %p170
        %p314 = pneg %p167
        %p315 = pneg %p191
        %p316 = pneg %p188
        %p317 = pneg %p212
        %p318 = pneg %p209
        %p319 = pneg %p238
        %p320 = pneg %p235
        %s321 = sand.u32 %s225, 1
        %s322 = scalar_lea.sflag [#allocation3], %s321
        %s323 = sand.u32 %s225, 1
        %s324 = smul.addr %s323, 256
        %s325 = scalar_lea.vmem [#allocation2], %s324
        %p326 = scmp.lt.s32.totalorder %s23, 1
        %s327 = scalar_select %p326, %s23, 1
        %s328 = smul.addr %s327, 32
        %s329 = smul.addr %s328, 8
        %s330 = scalar_lea.vmem %s0, %s329
        %v332 = vld [vmem:[%s330] sm:$0xff]
        %v333 = vld [vmem:[%s330 + $0x8] sm:$0xff]
        %v334 = vld [vmem:[%s330 + $0x10] sm:$0xff]
        %v335 = vld [vmem:[%s330 + $0x18] sm:$0xff]
        %v336 = vld [vmem:[%s330 + $0x20] sm:$0xff]
        %v337 = vld [vmem:[%s330 + $0x28] sm:$0xff]
        %v338 = vld [vmem:[%s330 + $0x30] sm:$0xff]
        %v339 = vld [vmem:[%s330 + $0x38] sm:$0xff]
        %v340 = vld [vmem:[%s330 + $0x40] sm:$0xff]
        %v341 = vld [vmem:[%s330 + $0x48] sm:$0xff]
        %v342 = vld [vmem:[%s330 + $0x50] sm:$0xff]
        %v343 = vld [vmem:[%s330 + $0x58] sm:$0xff]
        %v344 = vld [vmem:[%s330 + $0x60] sm:$0xff]
        %v345 = vld [vmem:[%s330 + $0x68] sm:$0xff]
        %v346 = vld [vmem:[%s330 + $0x70] sm:$0xff]
        %v347 = vld [vmem:[%s330 + $0x78] sm:$0xff]
        %v348 = vld [vmem:[%s330 + $0x80] sm:$0xff]
        %v349 = vld [vmem:[%s330 + $0x88] sm:$0xff]
        %v350 = vld [vmem:[%s330 + $0x90] sm:$0xff]
        %v351 = vld [vmem:[%s330 + $0x98] sm:$0xff]
        %v352 = vld [vmem:[%s330 + $0xa0] sm:$0xff]
        %v353 = vld [vmem:[%s330 + $0xa8] sm:$0xff]
        %v354 = vld [vmem:[%s330 + $0xb0] sm:$0xff]
        %v355 = vld [vmem:[%s330 + $0xb8] sm:$0xff]
        %v356 = vld [vmem:[%s330 + $0xc0] sm:$0xff]
        %v357 = vld [vmem:[%s330 + $0xc8] sm:$0xff]
        %v358 = vld [vmem:[%s330 + $0xd0] sm:$0xff]
        %v359 = vld [vmem:[%s330 + $0xd8] sm:$0xff]
        %v360 = vld [vmem:[%s330 + $0xe0] sm:$0xff]
        %v361 = vld [vmem:[%s330 + $0xe8] sm:$0xff]
        %v362 = vld [vmem:[%s330 + $0xf0] sm:$0xff]
        %v363 = vld [vmem:[%s330 + $0xf8] sm:$0xff]
        %v364 = vpack.c.bf16 %v333, %v332
        %v365 = vpack.c.bf16 %v335, %v334
        %v366 = vpack.c.bf16 %v337, %v336
        %v367 = vpack.c.bf16 %v339, %v338
        %v368 = vpack.c.bf16 %v341, %v340
        %v369 = vpack.c.bf16 %v343, %v342
        %v370 = vpack.c.bf16 %v345, %v344
        %v371 = vpack.c.bf16 %v347, %v346
        %v372 = vpack.c.bf16 %v349, %v348
        %v373 = vpack.c.bf16 %v351, %v350
        %v374 = vpack.c.bf16 %v353, %v352
        %v375 = vpack.c.bf16 %v355, %v354
        %v376 = vpack.c.bf16 %v357, %v356
        %v377 = vpack.c.bf16 %v359, %v358
        %v378 = vpack.c.bf16 %v361, %v360
        %v379 = vpack.c.bf16 %v363, %v362
        %v380 = vld [vmem:[%s1] sm:$0x3]
        %v381 = vld [vmem:[%s2] sm:$0x1]
        %v383 = vlaneseq
        %v384 = vshrl.u32 %v383, 7
        %v385 = vsub.s32 0, %v384
        %v386 = vrot.slane %v381, %v385
        %vm388 = vcmask 31744
        %v390 = vsel %vm388, %v364, 0
        %v393 = vsel %vm388, %v365, 0
        %v396 = vsel %vm388, %v366, 0
        %v399 = vsel %vm388, %v367, 0
        %v402 = vsel %vm388, %v368, 0
        %v405 = vsel %vm388, %v369, 0
        %v408 = vsel %vm388, %v370, 0
        %v411 = vsel %vm388, %v371, 0
        %v414 = vsel %vm388, %v372, 0
        %v417 = vsel %vm388, %v373, 0
        %v420 = vsel %vm388, %v374, 0
        %v423 = vsel %vm388, %v375, 0
        %v426 = vsel %vm388, %v376, 0
        %v429 = vsel %vm388, %v377, 0
        %v432 = vsel %vm388, %v378, 0
        %v435 = vsel %vm388, %v379, 0
        %vm437 = vcmask 1041408
        %v439 = vsel %vm437, %v380, 0
        %441 = vmatprep.subr.bf16.mxu0 0
        %442 = vmatpush1.bf16.msra.mxu0 %v439
        %443 = vmatprep.subr.bf16.mxu0 0
        %444 = vmatpush1.bf16.msra.mxu0 0
        %445 = vmatprep.subr.bf16.mxu0 0
        %446 = vmatpush1.bf16.msra.mxu0 0
        %447 = vmatprep.subr.bf16.mxu0 0
        %448 = vmatpush1.bf16.msra.mxu0 0
        %449 = vmatprep.subr.bf16.mxu0 0
        %450 = vmatpush1.bf16.msra.mxu0 0
        %451 = vmatprep.subr.bf16.mxu0 0
        %452 = vmatpush1.bf16.msra.mxu0 0
        %453 = vmatprep.subr.bf16.mxu0 0
        %454 = vmatpush1.bf16.msra.mxu0 0
        %455 = vmatprep.subr.bf16.mxu0 0
        %456 = vmatpush1.bf16.msra.mxu0 0
        %457 = vmatprep.subr.bf16.mxu0 0
        %458 = vmatpush1.bf16.msra.mxu0 0
        %459 = vmatprep.subr.bf16.mxu0 0
        %460 = vmatpush1.bf16.msra.mxu0 0
        %461 = vmatprep.subr.bf16.mxu0 0
        %462 = vmatpush1.bf16.msra.mxu0 0
        %463 = vmatprep.subr.bf16.mxu0 0
        %464 = vmatpush1.bf16.msra.mxu0 0
        %465 = vmatprep.subr.bf16.mxu0 0
        %466 = vmatpush1.bf16.msra.mxu0 0
        %467 = vmatprep.subr.bf16.mxu0 0
        %468 = vmatpush1.bf16.msra.mxu0 0
        %469 = vmatprep.subr.bf16.mxu0 0
        %470 = vmatpush1.bf16.msra.mxu0 0
        %471 = vmatprep.subr.bf16.mxu0 0
        %472 = vmatpush1.bf16.msra.mxu0 0
        %473 = vmatprep.mubr.bf16.mxu0 0
        %474 = vmatmul.mubr.bf16.gmra.mrb[0].mxu0 %v390
        %v475 = vpop.f32.mrb[0].mxu0
        %v476 = vadd.f32 %v386, %v475
        %v477 = vpop.f32.mrb[0].mxu0
        %v478 = vpop.f32.mrb[0].mxu0
        %v479 = vadd.f32 %v386, %v478
        %v480 = vpop.f32.mrb[0].mxu0
        %481 = vmatprep.mubr.bf16.mxu0 0
        %482 = vmatmul.mubr.bf16.gmra.mrb[0].mxu0 %v393
        %v483 = vpop.f32.mrb[0].mxu0
        %v484 = vadd.f32 %v386, %v483
        %v485 = vpop.f32.mrb[0].mxu0
        %v486 = vpop.f32.mrb[0].mxu0
        %v487 = vadd.f32 %v386, %v486
        %v488 = vpop.f32.mrb[0].mxu0
        %489 = vmatprep.mubr.bf16.mxu0 0
        %490 = vmatmul.mubr.bf16.gmra.mrb[0].mxu0 %v396
        %v491 = vpop.f32.mrb[0].mxu0
        %v492 = vadd.f32 %v386, %v491
        %v493 = vpop.f32.mrb[0].mxu0
        %v494 = vpop.f32.mrb[0].mxu0
        %v495 = vadd.f32 %v386, %v494
        %v496 = vpop.f32.mrb[0].mxu0
        %497 = vmatprep.mubr.bf16.mxu0 0
        %498 = vmatmul.mubr.bf16.gmra.mrb[0].mxu0 %v399
        %v499 = vpop.f32.mrb[0].mxu0
        %v500 = vadd.f32 %v386, %v499
        %v501 = vpop.f32.mrb[0].mxu0
        %v502 = vpop.f32.mrb[0].mxu0
        %v503 = vadd.f32 %v386, %v502
        %v504 = vpop.f32.mrb[0].mxu0
        %505 = vmatprep.mubr.bf16.mxu0 0
        %506 = vmatmul.mubr.bf16.gmra.mrb[0].mxu0 %v402
        %v507 = vpop.f32.mrb[0].mxu0
        %v508 = vadd.f32 %v386, %v507
        %v509 = vpop.f32.mrb[0].mxu0
        %v510 = vpop.f32.mrb[0].mxu0
        %v511 = vadd.f32 %v386, %v510
        %v512 = vpop.f32.mrb[0].mxu0
        %513 = vmatprep.mubr.bf16.mxu0 0
        %514 = vmatmul.mubr.bf16.gmra.mrb[0].mxu0 %v405
        %v515 = vpop.f32.mrb[0].mxu0
        %v516 = vadd.f32 %v386, %v515
        %v517 = vpop.f32.mrb[0].mxu0
        %v518 = vpop.f32.mrb[0].mxu0
        %v519 = vadd.f32 %v386, %v518
        %v520 = vpop.f32.mrb[0].mxu0
        %521 = vmatprep.mubr.bf16.mxu0 0
        %522 = vmatmul.mubr.bf16.gmra.mrb[0].mxu0 %v408
        %v523 = vpop.f32.mrb[0].mxu0
        %v524 = vadd.f32 %v386, %v523
        %v525 = vpop.f32.mrb[0].mxu0
        %v526 = vpop.f32.mrb[0].mxu0
        %v527 = vadd.f32 %v386, %v526
        %v528 = vpop.f32.mrb[0].mxu0
        %529 = vmatprep.mubr.bf16.mxu0 0
        %530 = vmatmul.mubr.bf16.gmra.mrb[0].mxu0 %v411
        %v531 = vpop.f32.mrb[0].mxu0
        %v532 = vadd.f32 %v386, %v531
        %v533 = vpop.f32.mrb[0].mxu0
        %v534 = vpop.f32.mrb[0].mxu0
        %v535 = vadd.f32 %v386, %v534
        %v536 = vpop.f32.mrb[0].mxu0
        %537 = vmatprep.mubr.bf16.mxu0 0
        %538 = vmatmul.mubr.bf16.gmra.mrb[0].mxu0 %v414
        %v539 = vpop.f32.mrb[0].mxu0
        %v540 = vadd.f32 %v386, %v539
        %v541 = vpop.f32.mrb[0].mxu0
        %v542 = vpop.f32.mrb[0].mxu0
        %v543 = vadd.f32 %v386, %v542
        %v544 = vpop.f32.mrb[0].mxu0
        %545 = vmatprep.mubr.bf16.mxu0 0
        %546 = vmatmul.mubr.bf16.gmra.mrb[0].mxu0 %v417
        %v547 = vpop.f32.mrb[0].mxu0
        %v548 = vadd.f32 %v386, %v547
        %v549 = vpop.f32.mrb[0].mxu0
        %v550 = vpop.f32.mrb[0].mxu0
        %v551 = vadd.f32 %v386, %v550
        %v552 = vpop.f32.mrb[0].mxu0
        %553 = vmatprep.mubr.bf16.mxu0 0
        %554 = vmatmul.mubr.bf16.gmra.mrb[0].mxu0 %v420
        %v555 = vpop.f32.mrb[0].mxu0
        %v556 = vadd.f32 %v386, %v555
        %v557 = vpop.f32.mrb[0].mxu0
        %v558 = vpop.f32.mrb[0].mxu0
        %v559 = vadd.f32 %v386, %v558
        %v560 = vpop.f32.mrb[0].mxu0
        %561 = vmatprep.mubr.bf16.mxu0 0
        %562 = vmatmul.mubr.bf16.gmra.mrb[0].mxu0 %v423
        %v563 = vpop.f32.mrb[0].mxu0
        %v564 = vadd.f32 %v386, %v563
        %v565 = vpop.f32.mrb[0].mxu0
        %v566 = vpop.f32.mrb[0].mxu0
        %v567 = vadd.f32 %v386, %v566
        %v568 = vpop.f32.mrb[0].mxu0
        %569 = vmatprep.mubr.bf16.mxu0 0
        %570 = vmatmul.mubr.bf16.gmra.mrb[0].mxu0 %v426
        %v571 = vpop.f32.mrb[0].mxu0
        %v572 = vadd.f32 %v386, %v571
        %v573 = vpop.f32.mrb[0].mxu0
        %v574 = vpop.f32.mrb[0].mxu0
        %v575 = vadd.f32 %v386, %v574
        %v576 = vpop.f32.mrb[0].mxu0
        %577 = vmatprep.mubr.bf16.mxu0 0
        %578 = vmatmul.mubr.bf16.gmra.mrb[0].mxu0 %v429
        %v579 = vpop.f32.mrb[0].mxu0
        %v580 = vadd.f32 %v386, %v579
        %v581 = vpop.f32.mrb[0].mxu0
        %v582 = vpop.f32.mrb[0].mxu0
        %v583 = vadd.f32 %v386, %v582
        %v584 = vpop.f32.mrb[0].mxu0
        %585 = vmatprep.mubr.bf16.mxu0 0
        %586 = vmatmul.mubr.bf16.gmra.mrb[0].mxu0 %v432
        %v587 = vpop.f32.mrb[0].mxu0
        %v588 = vadd.f32 %v386, %v587
        %v589 = vpop.f32.mrb[0].mxu0
        %v590 = vpop.f32.mrb[0].mxu0
        %v591 = vadd.f32 %v386, %v590
        %v592 = vpop.f32.mrb[0].mxu0
        %593 = vmatprep.mubr.bf16.mxu0 0
        %594 = vmatmul.mubr.bf16.gmra.mrb[0].mxu0 %v435
        %v595 = vpop.f32.mrb[0].mxu0
        %v596 = vadd.f32 %v386, %v595
        %v597 = vpop.f32.mrb[0].mxu0
        %v598 = vpop.f32.mrb[0].mxu0
        %v599 = vadd.f32 %v386, %v598
        %v600 = vpop.f32.mrb[0].mxu0
        %601 = vdwg.mxu0
        %v602 = vmax.f32 %v476, 0.0
        %v603 = vmax.f32 %v479, 0.0
        %v604 = vmax.f32 %v484, 0.0
        %v605 = vmax.f32 %v487, 0.0
        %v606 = vmax.f32 %v492, 0.0
        %v607 = vmax.f32 %v495, 0.0
        %v608 = vmax.f32 %v500, 0.0
        %v609 = vmax.f32 %v503, 0.0
        %v610 = vmax.f32 %v508, 0.0
        %v611 = vmax.f32 %v511, 0.0
        %v612 = vmax.f32 %v516, 0.0
        %v613 = vmax.f32 %v519, 0.0
        %v614 = vmax.f32 %v524, 0.0
        %v615 = vmax.f32 %v527, 0.0
        %v616 = vmax.f32 %v532, 0.0
        %v617 = vmax.f32 %v535, 0.0
        %v618 = vmax.f32 %v540, 0.0
        %v619 = vmax.f32 %v543, 0.0
        %v620 = vmax.f32 %v548, 0.0
        %v621 = vmax.f32 %v551, 0.0
        %v622 = vmax.f32 %v556, 0.0
        %v623 = vmax.f32 %v559, 0.0
        %v624 = vmax.f32 %v564, 0.0
        %v625 = vmax.f32 %v567, 0.0
        %v626 = vmax.f32 %v572, 0.0
        %v627 = vmax.f32 %v575, 0.0
        %v628 = vmax.f32 %v580, 0.0
        %v629 = vmax.f32 %v583, 0.0
        %v630 = vmax.f32 %v588, 0.0
        %v631 = vmax.f32 %v591, 0.0
        %v632 = vmax.f32 %v596, 0.0
        %v633 = vmax.f32 %v599, 0.0
        %v634 = vld [vmem:[%s3] sm:$0xf]
        %v635 = vld [vmem:[%s3 + $0x4] sm:$0xf]
        %v636 = vld [vmem:[%s3 + $0x8] sm:$0xf]
        %v637 = vld [vmem:[%s3 + $0xc] sm:$0xf]
        %v638 = vld [vmem:[%s3 + $0x10] sm:$0x3]
        %v639 = vld [vmem:[%s4] sm:$0x1]
        %vm672 = vcmask 1040384
        %v673 = vrot.slane %v602, 7
        %v674 = vrot.slane %v603, 7
        %v675 = vsel %vm672, %v673, %v674
        %v676 = vrot.slane %v604, 7
        %v677 = vrot.slane %v605, 7
        %v678 = vsel %vm672, %v676, %v677
        %v679 = vrot.slane %v606, 7
        %v680 = vrot.slane %v607, 7
        %v681 = vsel %vm672, %v679, %v680
        %v682 = vrot.slane %v608, 7
        %v683 = vrot.slane %v609, 7
        %v684 = vsel %vm672, %v682, %v683
        %v685 = vrot.slane %v610, 7
        %v686 = vrot.slane %v611, 7
        %v687 = vsel %vm672, %v685, %v686
        %v688 = vrot.slane %v612, 7
        %v689 = vrot.slane %v613, 7
        %v690 = vsel %vm672, %v688, %v689
        %v691 = vrot.slane %v614, 7
        %v692 = vrot.slane %v615, 7
        %v693 = vsel %vm672, %v691, %v692
        %v694 = vrot.slane %v616, 7
        %v695 = vrot.slane %v617, 7
        %v696 = vsel %vm672, %v694, %v695
        %v697 = vrot.slane %v618, 7
        %v698 = vrot.slane %v619, 7
        %v699 = vsel %vm672, %v697, %v698
        %v700 = vrot.slane %v620, 7
        %v701 = vrot.slane %v621, 7
        %v702 = vsel %vm672, %v700, %v701
        %v703 = vrot.slane %v622, 7
        %v704 = vrot.slane %v623, 7
        %v705 = vsel %vm672, %v703, %v704
        %v706 = vrot.slane %v624, 7
        %v707 = vrot.slane %v625, 7
        %v708 = vsel %vm672, %v706, %v707
        %v709 = vrot.slane %v626, 7
        %v710 = vrot.slane %v627, 7
        %v711 = vsel %vm672, %v709, %v710
        %v712 = vrot.slane %v628, 7
        %v713 = vrot.slane %v629, 7
        %v714 = vsel %vm672, %v712, %v713
        %v715 = vrot.slane %v630, 7
        %v716 = vrot.slane %v631, 7
        %v717 = vsel %vm672, %v715, %v716
        %v718 = vrot.slane %v632, 7
        %v719 = vrot.slane %v633, 7
        %v720 = vsel %vm672, %v718, %v719
        %721 = vrot.lane.b32.xlu0 %v673, 120
        %v722 = vpop.permute.xlu0 %721
        %723 = vrot.lane.b32.xlu0 %v675, 120
        %v724 = vpop.permute.xlu0 %723
        %725 = vrot.lane.b32.xlu0 %v674, 120
        %v726 = vpop.permute.xlu0 %725
        %727 = vrot.lane.b32.xlu0 %v676, 120
        %v728 = vpop.permute.xlu0 %727
        %729 = vrot.lane.b32.xlu0 %v678, 120
        %v730 = vpop.permute.xlu0 %729
        %731 = vrot.lane.b32.xlu0 %v677, 120
        %v732 = vpop.permute.xlu0 %731
        %733 = vrot.lane.b32.xlu0 %v679, 120
        %v734 = vpop.permute.xlu0 %733
        %735 = vrot.lane.b32.xlu0 %v681, 120
        %v736 = vpop.permute.xlu0 %735
        %737 = vrot.lane.b32.xlu0 %v680, 120
        %v738 = vpop.permute.xlu0 %737
        %739 = vrot.lane.b32.xlu0 %v682, 120
        %v740 = vpop.permute.xlu0 %739
        %741 = vrot.lane.b32.xlu0 %v684, 120
        %v742 = vpop.permute.xlu0 %741
        %743 = vrot.lane.b32.xlu0 %v683, 120
        %v744 = vpop.permute.xlu0 %743
        %745 = vrot.lane.b32.xlu0 %v685, 120
        %v746 = vpop.permute.xlu0 %745
        %747 = vrot.lane.b32.xlu0 %v687, 120
        %v748 = vpop.permute.xlu0 %747
        %749 = vrot.lane.b32.xlu0 %v686, 120
        %v750 = vpop.permute.xlu0 %749
        %751 = vrot.lane.b32.xlu0 %v688, 120
        %v752 = vpop.permute.xlu0 %751
        %753 = vrot.lane.b32.xlu0 %v690, 120
        %v754 = vpop.permute.xlu0 %753
        %755 = vrot.lane.b32.xlu0 %v689, 120
        %v756 = vpop.permute.xlu0 %755
        %757 = vrot.lane.b32.xlu0 %v691, 120
        %v758 = vpop.permute.xlu0 %757
        %759 = vrot.lane.b32.xlu0 %v693, 120
        %v760 = vpop.permute.xlu0 %759
        %761 = vrot.lane.b32.xlu0 %v692, 120
        %v762 = vpop.permute.xlu0 %761
        %763 = vrot.lane.b32.xlu0 %v694, 120
        %v764 = vpop.permute.xlu0 %763
        %765 = vrot.lane.b32.xlu0 %v696, 120
        %v766 = vpop.permute.xlu0 %765
        %767 = vrot.lane.b32.xlu0 %v695, 120
        %v768 = vpop.permute.xlu0 %767
        %769 = vrot.lane.b32.xlu0 %v697, 120
        %v770 = vpop.permute.xlu0 %769
        %771 = vrot.lane.b32.xlu0 %v699, 120
        %v772 = vpop.permute.xlu0 %771
        %773 = vrot.lane.b32.xlu0 %v698, 120
        %v774 = vpop.permute.xlu0 %773
        %775 = vrot.lane.b32.xlu0 %v700, 120
        %v776 = vpop.permute.xlu0 %775
        %777 = vrot.lane.b32.xlu0 %v702, 120
        %v778 = vpop.permute.xlu0 %777
        %779 = vrot.lane.b32.xlu0 %v701, 120
        %v780 = vpop.permute.xlu0 %779
        %781 = vrot.lane.b32.xlu0 %v703, 120
        %v782 = vpop.permute.xlu0 %781
        %783 = vrot.lane.b32.xlu0 %v705, 120
        %v784 = vpop.permute.xlu0 %783
        %785 = vrot.lane.b32.xlu0 %v704, 120
        %v786 = vpop.permute.xlu0 %785
        %787 = vrot.lane.b32.xlu0 %v706, 120
        %v788 = vpop.permute.xlu0 %787
        %789 = vrot.lane.b32.xlu0 %v708, 120
        %v790 = vpop.permute.xlu0 %789
        %791 = vrot.lane.b32.xlu0 %v707, 120
        %v792 = vpop.permute.xlu0 %791
        %793 = vrot.lane.b32.xlu0 %v709, 120
        %v794 = vpop.permute.xlu0 %793
        %795 = vrot.lane.b32.xlu0 %v711, 120
        %v796 = vpop.permute.xlu0 %795
        %797 = vrot.lane.b32.xlu0 %v710, 120
        %v798 = vpop.permute.xlu0 %797
        %799 = vrot.lane.b32.xlu0 %v712, 120
        %v800 = vpop.permute.xlu0 %799
        %801 = vrot.lane.b32.xlu0 %v714, 120
        %v802 = vpop.permute.xlu0 %801
        %803 = vrot.lane.b32.xlu0 %v713, 120
        %v804 = vpop.permute.xlu0 %803
        %805 = vrot.lane.b32.xlu0 %v715, 120
        %v806 = vpop.permute.xlu0 %805
        %807 = vrot.lane.b32.xlu0 %v717, 120
        %v808 = vpop.permute.xlu0 %807
        %809 = vrot.lane.b32.xlu0 %v716, 120
        %v810 = vpop.permute.xlu0 %809
        %811 = vrot.lane.b32.xlu0 %v718, 120
        %v812 = vpop.permute.xlu0 %811
        %813 = vrot.lane.b32.xlu0 %v720, 120
        %v814 = vpop.permute.xlu0 %813
        %815 = vrot.lane.b32.xlu0 %v719, 120
        %v816 = vpop.permute.xlu0 %815
        %v864 = vsel %vm672, 0.0, %v722
        %v865 = vsel %vm672, 0.0, %v728
        %v866 = vsel %vm672, 0.0, %v734
        %v867 = vsel %vm672, 0.0, %v740
        %v868 = vsel %vm672, 0.0, %v746
        %v869 = vsel %vm672, 0.0, %v752
        %v870 = vsel %vm672, 0.0, %v758
        %v871 = vsel %vm672, 0.0, %v764
        %v872 = vsel %vm672, 0.0, %v770
        %v873 = vsel %vm672, 0.0, %v776
        %v874 = vsel %vm672, 0.0, %v782
        %v875 = vsel %vm672, 0.0, %v788
        %v876 = vsel %vm672, 0.0, %v794
        %v877 = vsel %vm672, 0.0, %v800
        %v878 = vsel %vm672, 0.0, %v806
        %v879 = vsel %vm672, 0.0, %v812
        %v880 = vsel %vm672, %v726, 0.0
        %v881 = vsel %vm672, %v732, 0.0
        %v882 = vsel %vm672, %v738, 0.0
        %v883 = vsel %vm672, %v744, 0.0
        %v884 = vsel %vm672, %v750, 0.0
        %v885 = vsel %vm672, %v756, 0.0
        %v886 = vsel %vm672, %v762, 0.0
        %v887 = vsel %vm672, %v768, 0.0
        %v888 = vsel %vm672, %v774, 0.0
        %v889 = vsel %vm672, %v780, 0.0
        %v890 = vsel %vm672, %v786, 0.0
        %v891 = vsel %vm672, %v792, 0.0
        %v892 = vsel %vm672, %v798, 0.0
        %v893 = vsel %vm672, %v804, 0.0
        %v894 = vsel %vm672, %v810, 0.0
        %v895 = vsel %vm672, %v816, 0.0
        %vm927 = vcmask 1046528
        %v928 = vrot.slane 0.0, 1
        %v929 = vsel %vm927, %v928, %v928
        %v930 = vrot.slane %v864, 1
        %v931 = vrot.slane %v724, 1
        %v932 = vsel %vm927, %v930, %v931
        %v933 = vrot.slane %v880, 1
        %v934 = vsel %vm927, %v931, %v933
        %v935 = vrot.slane %v865, 1
        %v936 = vrot.slane %v730, 1
        %v937 = vsel %vm927, %v935, %v936
        %v938 = vrot.slane %v881, 1
        %v939 = vsel %vm927, %v936, %v938
        %v940 = vrot.slane %v866, 1
        %v941 = vrot.slane %v736, 1
        %v942 = vsel %vm927, %v940, %v941
        %v943 = vrot.slane %v882, 1
        %v944 = vsel %vm927, %v941, %v943
        %v945 = vrot.slane %v867, 1
        %v946 = vrot.slane %v742, 1
        %v947 = vsel %vm927, %v945, %v946
        %v948 = vrot.slane %v883, 1
        %v949 = vsel %vm927, %v946, %v948
        %v950 = vrot.slane %v868, 1
        %v951 = vrot.slane %v748, 1
        %v952 = vsel %vm927, %v950, %v951
        %v953 = vrot.slane %v884, 1
        %v954 = vsel %vm927, %v951, %v953
        %v955 = vrot.slane %v869, 1
        %v956 = vrot.slane %v754, 1
        %v957 = vsel %vm927, %v955, %v956
        %v958 = vrot.slane %v885, 1
        %v959 = vsel %vm927, %v956, %v958
        %v960 = vrot.slane %v870, 1
        %v961 = vrot.slane %v760, 1
        %v962 = vsel %vm927, %v960, %v961
        %v963 = vrot.slane %v886, 1
        %v964 = vsel %vm927, %v961, %v963
        %v965 = vrot.slane %v871, 1
        %v966 = vrot.slane %v766, 1
        %v967 = vsel %vm927, %v965, %v966
        %v968 = vrot.slane %v887, 1
        %v969 = vsel %vm927, %v966, %v968
        %v970 = vrot.slane %v872, 1
        %v971 = vrot.slane %v772, 1
        %v972 = vsel %vm927, %v970, %v971
        %v973 = vrot.slane %v888, 1
        %v974 = vsel %vm927, %v971, %v973
        %v975 = vrot.slane %v873, 1
        %v976 = vrot.slane %v778, 1
        %v977 = vsel %vm927, %v975, %v976
        %v978 = vrot.slane %v889, 1
        %v979 = vsel %vm927, %v976, %v978
        %v980 = vrot.slane %v874, 1
        %v981 = vrot.slane %v784, 1
        %v982 = vsel %vm927, %v980, %v981
        %v983 = vrot.slane %v890, 1
        %v984 = vsel %vm927, %v981, %v983
        %v985 = vrot.slane %v875, 1
        %v986 = vrot.slane %v790, 1
        %v987 = vsel %vm927, %v985, %v986
        %v988 = vrot.slane %v891, 1
        %v989 = vsel %vm927, %v986, %v988
        %v990 = vrot.slane %v876, 1
        %v991 = vrot.slane %v796, 1
        %v992 = vsel %vm927, %v990, %v991
        %v993 = vrot.slane %v892, 1
        %v994 = vsel %vm927, %v991, %v993
        %v995 = vrot.slane %v877, 1
        %v996 = vrot.slane %v802, 1
        %v997 = vsel %vm927, %v995, %v996
        %v998 = vrot.slane %v893, 1
        %v999 = vsel %vm927, %v996, %v998
        %v1000 = vrot.slane %v878, 1
        %v1001 = vrot.slane %v808, 1
        %v1002 = vsel %vm927, %v1000, %v1001
        %v1003 = vrot.slane %v894, 1
        %v1004 = vsel %vm927, %v1001, %v1003
        %vm1005 = vcmask 1045504
        %v1006 = vrot.slane 0.0, 2
        %v1007 = vsel %vm1005, %v1006, %v1006
        %v1008 = vrot.slane %v864, 2
        %v1009 = vrot.slane %v724, 2
        %v1010 = vsel %vm1005, %v1008, %v1009
        %v1011 = vrot.slane %v880, 2
        %v1012 = vsel %vm1005, %v1009, %v1011
        %v1013 = vrot.slane %v865, 2
        %v1014 = vrot.slane %v730, 2
        %v1015 = vsel %vm1005, %v1013, %v1014
        %v1016 = vrot.slane %v881, 2
        %v1017 = vsel %vm1005, %v1014, %v1016
        %v1018 = vrot.slane %v866, 2
        %v1019 = vrot.slane %v736, 2
        %v1020 = vsel %vm1005, %v1018, %v1019
        %v1021 = vrot.slane %v882, 2
        %v1022 = vsel %vm1005, %v1019, %v1021
        %v1023 = vrot.slane %v867, 2
        %v1024 = vrot.slane %v742, 2
        %v1025 = vsel %vm1005, %v1023, %v1024
        %v1026 = vrot.slane %v883, 2
        %v1027 = vsel %vm1005, %v1024, %v1026
        %v1028 = vrot.slane %v868, 2
        %v1029 = vrot.slane %v748, 2
        %v1030 = vsel %vm1005, %v1028, %v1029
        %v1031 = vrot.slane %v884, 2
        %v1032 = vsel %vm1005, %v1029, %v1031
        %v1033 = vrot.slane %v869, 2
        %v1034 = vrot.slane %v754, 2
        %v1035 = vsel %vm1005, %v1033, %v1034
        %v1036 = vrot.slane %v885, 2
        %v1037 = vsel %vm1005, %v1034, %v1036
        %v1038 = vrot.slane %v870, 2
        %v1039 = vrot.slane %v760, 2
        %v1040 = vsel %vm1005, %v1038, %v1039
        %v1041 = vrot.slane %v886, 2
        %v1042 = vsel %vm1005, %v1039, %v1041
        %v1043 = vrot.slane %v871, 2
        %v1044 = vrot.slane %v766, 2
        %v1045 = vsel %vm1005, %v1043, %v1044
        %v1046 = vrot.slane %v887, 2
        %v1047 = vsel %vm1005, %v1044, %v1046
        %v1048 = vrot.slane %v872, 2
        %v1049 = vrot.slane %v772, 2
        %v1050 = vsel %vm1005, %v1048, %v1049
        %v1051 = vrot.slane %v888, 2
        %v1052 = vsel %vm1005, %v1049, %v1051
        %v1053 = vrot.slane %v873, 2
        %v1054 = vrot.slane %v778, 2
        %v1055 = vsel %vm1005, %v1053, %v1054
        %v1056 = vrot.slane %v889, 2
        %v1057 = vsel %vm1005, %v1054, %v1056
        %v1058 = vrot.slane %v874, 2
        %v1059 = vrot.slane %v784, 2
        %v1060 = vsel %vm1005, %v1058, %v1059
        %v1061 = vrot.slane %v890, 2
        %v1062 = vsel %vm1005, %v1059, %v1061
        %v1063 = vrot.slane %v875, 2
        %v1064 = vrot.slane %v790, 2
        %v1065 = vsel %vm1005, %v1063, %v1064
        %v1066 = vrot.slane %v891, 2
        %v1067 = vsel %vm1005, %v1064, %v1066
        %v1068 = vrot.slane %v876, 2
        %v1069 = vrot.slane %v796, 2
        %v1070 = vsel %vm1005, %v1068, %v1069
        %v1071 = vrot.slane %v892, 2
        %v1072 = vsel %vm1005, %v1069, %v1071
        %v1073 = vrot.slane %v877, 2
        %v1074 = vrot.slane %v802, 2
        %v1075 = vsel %vm1005, %v1073, %v1074
        %v1076 = vrot.slane %v893, 2
        %v1077 = vsel %vm1005, %v1074, %v1076
        %v1078 = vrot.slane %v878, 2
        %v1079 = vrot.slane %v808, 2
        %v1080 = vsel %vm1005, %v1078, %v1079
        %v1081 = vrot.slane %v894, 2
        %v1082 = vsel %vm1005, %v1079, %v1081
        %v1085 = vrot.slane %v879, 1
        %v1086 = vrot.slane %v814, 1
        %v1087 = vsel %vm927, %v1085, %v1086
        %v1088 = vrot.slane %v895, 1
        %v1089 = vsel %vm927, %v1086, %v1088
        %v1090 = vrot.slane %v879, 2
        %v1091 = vrot.slane %v814, 2
        %v1092 = vsel %vm1005, %v1090, %v1091
        %v1093 = vrot.slane %v895, 2
        %v1094 = vsel %vm1005, %v1091, %v1093
        %1095 = vrot.lane.b32.xlu0 %v929, 4
        %v1096 = vpop.permute.xlu0 %1095
        %1097 = vrot.lane.b32.xlu0 %v932, 4
        %v1098 = vpop.permute.xlu0 %1097
        %1099 = vrot.lane.b32.xlu0 %v934, 4
        %v1100 = vpop.permute.xlu0 %1099
        %1101 = vrot.lane.b32.xlu0 %v937, 4
        %v1102 = vpop.permute.xlu0 %1101
        %1103 = vrot.lane.b32.xlu0 %v939, 4
        %v1104 = vpop.permute.xlu0 %1103
        %1105 = vrot.lane.b32.xlu0 %v942, 4
        %v1106 = vpop.permute.xlu0 %1105
        %1107 = vrot.lane.b32.xlu0 %v944, 4
        %v1108 = vpop.permute.xlu0 %1107
        %1109 = vrot.lane.b32.xlu0 %v947, 4
        %v1110 = vpop.permute.xlu0 %1109
        %1111 = vrot.lane.b32.xlu0 %v949, 4
        %v1112 = vpop.permute.xlu0 %1111
        %1113 = vrot.lane.b32.xlu0 %v952, 4
        %v1114 = vpop.permute.xlu0 %1113
        %1115 = vrot.lane.b32.xlu0 %v954, 4
        %v1116 = vpop.permute.xlu0 %1115
        %1117 = vrot.lane.b32.xlu0 %v957, 4
        %v1118 = vpop.permute.xlu0 %1117
        %1119 = vrot.lane.b32.xlu0 %v959, 4
        %v1120 = vpop.permute.xlu0 %1119
        %1121 = vrot.lane.b32.xlu0 %v962, 4
        %v1122 = vpop.permute.xlu0 %1121
        %1123 = vrot.lane.b32.xlu0 %v964, 4
        %v1124 = vpop.permute.xlu0 %1123
        %1125 = vrot.lane.b32.xlu0 %v967, 4
        %v1126 = vpop.permute.xlu0 %1125
        %1127 = vrot.lane.b32.xlu0 %v969, 4
        %v1128 = vpop.permute.xlu0 %1127
        %1129 = vrot.lane.b32.xlu0 %v972, 4
        %v1130 = vpop.permute.xlu0 %1129
        %1131 = vrot.lane.b32.xlu0 %v974, 4
        %v1132 = vpop.permute.xlu0 %1131
        %1133 = vrot.lane.b32.xlu0 %v977, 4
        %v1134 = vpop.permute.xlu0 %1133
        %1135 = vrot.lane.b32.xlu0 %v979, 4
        %v1136 = vpop.permute.xlu0 %1135
        %1137 = vrot.lane.b32.xlu0 %v982, 4
        %v1138 = vpop.permute.xlu0 %1137
        %1139 = vrot.lane.b32.xlu0 %v984, 4
        %v1140 = vpop.permute.xlu0 %1139
        %1141 = vrot.lane.b32.xlu0 %v987, 4
        %v1142 = vpop.permute.xlu0 %1141
        %1143 = vrot.lane.b32.xlu0 %v989, 4
        %v1144 = vpop.permute.xlu0 %1143
        %1145 = vrot.lane.b32.xlu0 %v992, 4
        %v1146 = vpop.permute.xlu0 %1145
        %1147 = vrot.lane.b32.xlu0 %v994, 4
        %v1148 = vpop.permute.xlu0 %1147
        %1149 = vrot.lane.b32.xlu0 %v997, 4
        %v1150 = vpop.permute.xlu0 %1149
        %1151 = vrot.lane.b32.xlu0 %v999, 4
        %v1152 = vpop.permute.xlu0 %1151
        %1153 = vrot.lane.b32.xlu0 %v1002, 4
        %v1154 = vpop.permute.xlu0 %1153
        %1155 = vrot.lane.b32.xlu0 %v1004, 4
        %v1156 = vpop.permute.xlu0 %1155
        %1188 = vrot.lane.b32.xlu0 %v1007, 8
        %v1189 = vpop.permute.xlu0 %1188
        %1190 = vrot.lane.b32.xlu0 %v1010, 8
        %v1191 = vpop.permute.xlu0 %1190
        %1192 = vrot.lane.b32.xlu0 %v1012, 8
        %v1193 = vpop.permute.xlu0 %1192
        %1194 = vrot.lane.b32.xlu0 %v1015, 8
        %v1195 = vpop.permute.xlu0 %1194
        %1196 = vrot.lane.b32.xlu0 %v1017, 8
        %v1197 = vpop.permute.xlu0 %1196
        %1198 = vrot.lane.b32.xlu0 %v1020, 8
        %v1199 = vpop.permute.xlu0 %1198
        %1200 = vrot.lane.b32.xlu0 %v1022, 8
        %v1201 = vpop.permute.xlu0 %1200
        %1202 = vrot.lane.b32.xlu0 %v1025, 8
        %v1203 = vpop.permute.xlu0 %1202
        %1204 = vrot.lane.b32.xlu0 %v1027, 8
        %v1205 = vpop.permute.xlu0 %1204
        %1206 = vrot.lane.b32.xlu0 %v1030, 8
        %v1207 = vpop.permute.xlu0 %1206
        %1208 = vrot.lane.b32.xlu0 %v1032, 8
        %v1209 = vpop.permute.xlu0 %1208
        %1210 = vrot.lane.b32.xlu0 %v1035, 8
        %v1211 = vpop.permute.xlu0 %1210
        %1212 = vrot.lane.b32.xlu0 %v1037, 8
        %v1213 = vpop.permute.xlu0 %1212
        %1214 = vrot.lane.b32.xlu0 %v1040, 8
        %v1215 = vpop.permute.xlu0 %1214
        %1216 = vrot.lane.b32.xlu0 %v1042, 8
        %v1217 = vpop.permute.xlu0 %1216
        %1218 = vrot.lane.b32.xlu0 %v1045, 8
        %v1219 = vpop.permute.xlu0 %1218
        %1220 = vrot.lane.b32.xlu0 %v1047, 8
        %v1221 = vpop.permute.xlu0 %1220
        %1222 = vrot.lane.b32.xlu0 %v1050, 8
        %v1223 = vpop.permute.xlu0 %1222
        %1224 = vrot.lane.b32.xlu0 %v1052, 8
        %v1225 = vpop.permute.xlu0 %1224
        %1226 = vrot.lane.b32.xlu0 %v1055, 8
        %v1227 = vpop.permute.xlu0 %1226
        %1228 = vrot.lane.b32.xlu0 %v1057, 8
        %v1229 = vpop.permute.xlu0 %1228
        %1230 = vrot.lane.b32.xlu0 %v1060, 8
        %v1231 = vpop.permute.xlu0 %1230
        %1232 = vrot.lane.b32.xlu0 %v1062, 8
        %v1233 = vpop.permute.xlu0 %1232
        %1234 = vrot.lane.b32.xlu0 %v1065, 8
        %v1235 = vpop.permute.xlu0 %1234
        %1236 = vrot.lane.b32.xlu0 %v1067, 8
        %v1237 = vpop.permute.xlu0 %1236
        %1238 = vrot.lane.b32.xlu0 %v1070, 8
        %v1239 = vpop.permute.xlu0 %1238
        %1240 = vrot.lane.b32.xlu0 %v1072, 8
        %v1241 = vpop.permute.xlu0 %1240
        %1242 = vrot.lane.b32.xlu0 %v1075, 8
        %v1243 = vpop.permute.xlu0 %1242
        %1244 = vrot.lane.b32.xlu0 %v1077, 8
        %v1245 = vpop.permute.xlu0 %1244
        %1246 = vrot.lane.b32.xlu0 %v1080, 8
        %v1247 = vpop.permute.xlu0 %1246
        %1248 = vrot.lane.b32.xlu0 %v1082, 8
        %v1249 = vpop.permute.xlu0 %1248
        %1281 = vrot.lane.b32.xlu0 %v864, 12
        %v1282 = vpop.permute.xlu0 %1281
        %1283 = vrot.lane.b32.xlu0 %v724, 12
        %v1284 = vpop.permute.xlu0 %1283
        %1285 = vrot.lane.b32.xlu0 %v865, 12
        %v1286 = vpop.permute.xlu0 %1285
        %1287 = vrot.lane.b32.xlu0 %v730, 12
        %v1288 = vpop.permute.xlu0 %1287
        %1289 = vrot.lane.b32.xlu0 %v866, 12
        %v1290 = vpop.permute.xlu0 %1289
        %1291 = vrot.lane.b32.xlu0 %v736, 12
        %v1292 = vpop.permute.xlu0 %1291
        %1293 = vrot.lane.b32.xlu0 %v867, 12
        %v1294 = vpop.permute.xlu0 %1293
        %1295 = vrot.lane.b32.xlu0 %v742, 12
        %v1296 = vpop.permute.xlu0 %1295
        %1297 = vrot.lane.b32.xlu0 %v868, 12
        %v1298 = vpop.permute.xlu0 %1297
        %1299 = vrot.lane.b32.xlu0 %v748, 12
        %v1300 = vpop.permute.xlu0 %1299
        %1301 = vrot.lane.b32.xlu0 %v869, 12
        %v1302 = vpop.permute.xlu0 %1301
        %1303 = vrot.lane.b32.xlu0 %v754, 12
        %v1304 = vpop.permute.xlu0 %1303
        %1305 = vrot.lane.b32.xlu0 %v870, 12
        %v1306 = vpop.permute.xlu0 %1305
        %1307 = vrot.lane.b32.xlu0 %v760, 12
        %v1308 = vpop.permute.xlu0 %1307
        %1309 = vrot.lane.b32.xlu0 %v871, 12
        %v1310 = vpop.permute.xlu0 %1309
        %1311 = vrot.lane.b32.xlu0 %v766, 12
        %v1312 = vpop.permute.xlu0 %1311
        %1313 = vrot.lane.b32.xlu0 %v872, 12
        %v1314 = vpop.permute.xlu0 %1313
        %1315 = vrot.lane.b32.xlu0 %v772, 12
        %v1316 = vpop.permute.xlu0 %1315
        %1317 = vrot.lane.b32.xlu0 %v873, 12
        %v1318 = vpop.permute.xlu0 %1317
        %1319 = vrot.lane.b32.xlu0 %v778, 12
        %v1320 = vpop.permute.xlu0 %1319
        %1321 = vrot.lane.b32.xlu0 %v874, 12
        %v1322 = vpop.permute.xlu0 %1321
        %1323 = vrot.lane.b32.xlu0 %v784, 12
        %v1324 = vpop.permute.xlu0 %1323
        %1325 = vrot.lane.b32.xlu0 %v875, 12
        %v1326 = vpop.permute.xlu0 %1325
        %1327 = vrot.lane.b32.xlu0 %v790, 12
        %v1328 = vpop.permute.xlu0 %1327
        %1329 = vrot.lane.b32.xlu0 %v876, 12
        %v1330 = vpop.permute.xlu0 %1329
        %1331 = vrot.lane.b32.xlu0 %v796, 12
        %v1332 = vpop.permute.xlu0 %1331
        %1333 = vrot.lane.b32.xlu0 %v877, 12
        %v1334 = vpop.permute.xlu0 %1333
        %1335 = vrot.lane.b32.xlu0 %v802, 12
        %v1336 = vpop.permute.xlu0 %1335
        %1337 = vrot.lane.b32.xlu0 %v878, 12
        %v1338 = vpop.permute.xlu0 %1337
        %1339 = vrot.lane.b32.xlu0 %v808, 12
        %v1340 = vpop.permute.xlu0 %1339
        %1341 = vrot.lane.b32.xlu0 %v879, 12
        %v1342 = vpop.permute.xlu0 %1341
        %1343 = vrot.lane.b32.xlu0 %v814, 12
        %v1344 = vpop.permute.xlu0 %1343
        %1377 = vrot.lane.b32.xlu0 %v932, 16
        %v1378 = vpop.permute.xlu0 %1377
        %1379 = vrot.lane.b32.xlu0 %v934, 16
        %v1380 = vpop.permute.xlu0 %1379
        %1381 = vrot.lane.b32.xlu0 %v937, 16
        %v1382 = vpop.permute.xlu0 %1381
        %1383 = vrot.lane.b32.xlu0 %v939, 16
        %v1384 = vpop.permute.xlu0 %1383
        %1385 = vrot.lane.b32.xlu0 %v942, 16
        %v1386 = vpop.permute.xlu0 %1385
        %1387 = vrot.lane.b32.xlu0 %v944, 16
        %v1388 = vpop.permute.xlu0 %1387
        %1389 = vrot.lane.b32.xlu0 %v947, 16
        %v1390 = vpop.permute.xlu0 %1389
        %1391 = vrot.lane.b32.xlu0 %v949, 16
        %v1392 = vpop.permute.xlu0 %1391
        %1393 = vrot.lane.b32.xlu0 %v952, 16
        %v1394 = vpop.permute.xlu0 %1393
        %1395 = vrot.lane.b32.xlu0 %v954, 16
        %v1396 = vpop.permute.xlu0 %1395
        %1397 = vrot.lane.b32.xlu0 %v957, 16
        %v1398 = vpop.permute.xlu0 %1397
        %1399 = vrot.lane.b32.xlu0 %v959, 16
        %v1400 = vpop.permute.xlu0 %1399
        %1401 = vrot.lane.b32.xlu0 %v962, 16
        %v1402 = vpop.permute.xlu0 %1401
        %1403 = vrot.lane.b32.xlu0 %v964, 16
        %v1404 = vpop.permute.xlu0 %1403
        %1405 = vrot.lane.b32.xlu0 %v967, 16
        %v1406 = vpop.permute.xlu0 %1405
        %1407 = vrot.lane.b32.xlu0 %v969, 16
        %v1408 = vpop.permute.xlu0 %1407
        %1409 = vrot.lane.b32.xlu0 %v972, 16
        %v1410 = vpop.permute.xlu0 %1409
        %1411 = vrot.lane.b32.xlu0 %v974, 16
        %v1412 = vpop.permute.xlu0 %1411
        %1413 = vrot.lane.b32.xlu0 %v977, 16
        %v1414 = vpop.permute.xlu0 %1413
        %1415 = vrot.lane.b32.xlu0 %v979, 16
        %v1416 = vpop.permute.xlu0 %1415
        %1417 = vrot.lane.b32.xlu0 %v982, 16
        %v1418 = vpop.permute.xlu0 %1417
        %1419 = vrot.lane.b32.xlu0 %v984, 16
        %v1420 = vpop.permute.xlu0 %1419
        %1421 = vrot.lane.b32.xlu0 %v987, 16
        %v1422 = vpop.permute.xlu0 %1421
        %1423 = vrot.lane.b32.xlu0 %v989, 16
        %v1424 = vpop.permute.xlu0 %1423
        %1425 = vrot.lane.b32.xlu0 %v992, 16
        %v1426 = vpop.permute.xlu0 %1425
        %1427 = vrot.lane.b32.xlu0 %v994, 16
        %v1428 = vpop.permute.xlu0 %1427
        %1429 = vrot.lane.b32.xlu0 %v997, 16
        %v1430 = vpop.permute.xlu0 %1429
        %1431 = vrot.lane.b32.xlu0 %v999, 16
        %v1432 = vpop.permute.xlu0 %1431
        %1433 = vrot.lane.b32.xlu0 %v1002, 16
        %v1434 = vpop.permute.xlu0 %1433
        %1435 = vrot.lane.b32.xlu0 %v1004, 16
        %v1436 = vpop.permute.xlu0 %1435
        %1437 = vrot.lane.b32.xlu0 %v1087, 16
        %v1438 = vpop.permute.xlu0 %1437
        %1439 = vrot.lane.b32.xlu0 %v1089, 16
        %v1440 = vpop.permute.xlu0 %1439
        %1473 = vrot.lane.b32.xlu0 %v1010, 20
        %v1474 = vpop.permute.xlu0 %1473
        %1475 = vrot.lane.b32.xlu0 %v1012, 20
        %v1476 = vpop.permute.xlu0 %1475
        %1477 = vrot.lane.b32.xlu0 %v1015, 20
        %v1478 = vpop.permute.xlu0 %1477
        %1479 = vrot.lane.b32.xlu0 %v1017, 20
        %v1480 = vpop.permute.xlu0 %1479
        %1481 = vrot.lane.b32.xlu0 %v1020, 20
        %v1482 = vpop.permute.xlu0 %1481
        %1483 = vrot.lane.b32.xlu0 %v1022, 20
        %v1484 = vpop.permute.xlu0 %1483
        %1485 = vrot.lane.b32.xlu0 %v1025, 20
        %v1486 = vpop.permute.xlu0 %1485
        %1487 = vrot.lane.b32.xlu0 %v1027, 20
        %v1488 = vpop.permute.xlu0 %1487
        %1489 = vrot.lane.b32.xlu0 %v1030, 20
        %v1490 = vpop.permute.xlu0 %1489
        %1491 = vrot.lane.b32.xlu0 %v1032, 20
        %v1492 = vpop.permute.xlu0 %1491
        %1493 = vrot.lane.b32.xlu0 %v1035, 20
        %v1494 = vpop.permute.xlu0 %1493
        %1495 = vrot.lane.b32.xlu0 %v1037, 20
        %v1496 = vpop.permute.xlu0 %1495
        %1497 = vrot.lane.b32.xlu0 %v1040, 20
        %v1498 = vpop.permute.xlu0 %1497
        %1499 = vrot.lane.b32.xlu0 %v1042, 20
        %v1500 = vpop.permute.xlu0 %1499
        %1501 = vrot.lane.b32.xlu0 %v1045, 20
        %v1502 = vpop.permute.xlu0 %1501
        %1503 = vrot.lane.b32.xlu0 %v1047, 20
        %v1504 = vpop.permute.xlu0 %1503
        %1505 = vrot.lane.b32.xlu0 %v1050, 20
        %v1506 = vpop.permute.xlu0 %1505
        %1507 = vrot.lane.b32.xlu0 %v1052, 20
        %v1508 = vpop.permute.xlu0 %1507
        %1509 = vrot.lane.b32.xlu0 %v1055, 20
        %v1510 = vpop.permute.xlu0 %1509
        %1511 = vrot.lane.b32.xlu0 %v1057, 20
        %v1512 = vpop.permute.xlu0 %1511
        %1513 = vrot.lane.b32.xlu0 %v1060, 20
        %v1514 = vpop.permute.xlu0 %1513
        %1515 = vrot.lane.b32.xlu0 %v1062, 20
        %v1516 = vpop.permute.xlu0 %1515
        %1517 = vrot.lane.b32.xlu0 %v1065, 20
        %v1518 = vpop.permute.xlu0 %1517
        %1519 = vrot.lane.b32.xlu0 %v1067, 20
        %v1520 = vpop.permute.xlu0 %1519
        %1521 = vrot.lane.b32.xlu0 %v1070, 20
        %v1522 = vpop.permute.xlu0 %1521
        %1523 = vrot.lane.b32.xlu0 %v1072, 20
        %v1524 = vpop.permute.xlu0 %1523
        %1525 = vrot.lane.b32.xlu0 %v1075, 20
        %v1526 = vpop.permute.xlu0 %1525
        %1527 = vrot.lane.b32.xlu0 %v1077, 20
        %v1528 = vpop.permute.xlu0 %1527
        %1529 = vrot.lane.b32.xlu0 %v1080, 20
        %v1530 = vpop.permute.xlu0 %1529
        %1531 = vrot.lane.b32.xlu0 %v1082, 20
        %v1532 = vpop.permute.xlu0 %1531
        %1533 = vrot.lane.b32.xlu0 %v1092, 20
        %v1534 = vpop.permute.xlu0 %1533
        %1535 = vrot.lane.b32.xlu0 %v1094, 20
        %v1536 = vpop.permute.xlu0 %1535
        %1569 = vrot.lane.b32.xlu0 %v865, 24
        %v1570 = vpop.permute.xlu0 %1569
        %1571 = vrot.lane.b32.xlu0 %v730, 24
        %v1572 = vpop.permute.xlu0 %1571
        %1573 = vrot.lane.b32.xlu0 %v866, 24
        %v1574 = vpop.permute.xlu0 %1573
        %1575 = vrot.lane.b32.xlu0 %v736, 24
        %v1576 = vpop.permute.xlu0 %1575
        %1577 = vrot.lane.b32.xlu0 %v867, 24
        %v1578 = vpop.permute.xlu0 %1577
        %1579 = vrot.lane.b32.xlu0 %v742, 24
        %v1580 = vpop.permute.xlu0 %1579
        %1581 = vrot.lane.b32.xlu0 %v868, 24
        %v1582 = vpop.permute.xlu0 %1581
        %1583 = vrot.lane.b32.xlu0 %v748, 24
        %v1584 = vpop.permute.xlu0 %1583
        %1585 = vrot.lane.b32.xlu0 %v869, 24
        %v1586 = vpop.permute.xlu0 %1585
        %1587 = vrot.lane.b32.xlu0 %v754, 24
        %v1588 = vpop.permute.xlu0 %1587
        %1589 = vrot.lane.b32.xlu0 %v870, 24
        %v1590 = vpop.permute.xlu0 %1589
        %1591 = vrot.lane.b32.xlu0 %v760, 24
        %v1592 = vpop.permute.xlu0 %1591
        %1593 = vrot.lane.b32.xlu0 %v871, 24
        %v1594 = vpop.permute.xlu0 %1593
        %1595 = vrot.lane.b32.xlu0 %v766, 24
        %v1596 = vpop.permute.xlu0 %1595
        %1597 = vrot.lane.b32.xlu0 %v872, 24
        %v1598 = vpop.permute.xlu0 %1597
        %1599 = vrot.lane.b32.xlu0 %v772, 24
        %v1600 = vpop.permute.xlu0 %1599
        %1601 = vrot.lane.b32.xlu0 %v873, 24
        %v1602 = vpop.permute.xlu0 %1601
        %1603 = vrot.lane.b32.xlu0 %v778, 24
        %v1604 = vpop.permute.xlu0 %1603
        %1605 = vrot.lane.b32.xlu0 %v874, 24
        %v1606 = vpop.permute.xlu0 %1605
        %1607 = vrot.lane.b32.xlu0 %v784, 24
        %v1608 = vpop.permute.xlu0 %1607
        %1609 = vrot.lane.b32.xlu0 %v875, 24
        %v1610 = vpop.permute.xlu0 %1609
        %1611 = vrot.lane.b32.xlu0 %v790, 24
        %v1612 = vpop.permute.xlu0 %1611
        %1613 = vrot.lane.b32.xlu0 %v876, 24
        %v1614 = vpop.permute.xlu0 %1613
        %1615 = vrot.lane.b32.xlu0 %v796, 24
        %v1616 = vpop.permute.xlu0 %1615
        %1617 = vrot.lane.b32.xlu0 %v877, 24
        %v1618 = vpop.permute.xlu0 %1617
        %1619 = vrot.lane.b32.xlu0 %v802, 24
        %v1620 = vpop.permute.xlu0 %1619
        %1621 = vrot.lane.b32.xlu0 %v878, 24
        %v1622 = vpop.permute.xlu0 %1621
        %1623 = vrot.lane.b32.xlu0 %v808, 24
        %v1624 = vpop.permute.xlu0 %1623
        %1625 = vrot.lane.b32.xlu0 %v879, 24
        %v1626 = vpop.permute.xlu0 %1625
        %1627 = vrot.lane.b32.xlu0 %v814, 24
        %v1628 = vpop.permute.xlu0 %1627
        %1629 = vrot.lane.b32.xlu0 0.0, 24
        %v1630 = vpop.permute.xlu0 %1629
        %1662 = vrot.lane.b32.xlu0 %v937, 28
        %v1663 = vpop.permute.xlu0 %1662
        %1664 = vrot.lane.b32.xlu0 %v939, 28
        %v1665 = vpop.permute.xlu0 %1664
        %1666 = vrot.lane.b32.xlu0 %v942, 28
        %v1667 = vpop.permute.xlu0 %1666
        %1668 = vrot.lane.b32.xlu0 %v944, 28
        %v1669 = vpop.permute.xlu0 %1668
        %1670 = vrot.lane.b32.xlu0 %v947, 28
        %v1671 = vpop.permute.xlu0 %1670
        %1672 = vrot.lane.b32.xlu0 %v949, 28
        %v1673 = vpop.permute.xlu0 %1672
        %1674 = vrot.lane.b32.xlu0 %v952, 28
        %v1675 = vpop.permute.xlu0 %1674
        %1676 = vrot.lane.b32.xlu0 %v954, 28
        %v1677 = vpop.permute.xlu0 %1676
        %1678 = vrot.lane.b32.xlu0 %v957, 28
        %v1679 = vpop.permute.xlu0 %1678
        %1680 = vrot.lane.b32.xlu0 %v959, 28
        %v1681 = vpop.permute.xlu0 %1680
        %1682 = vrot.lane.b32.xlu0 %v962, 28
        %v1683 = vpop.permute.xlu0 %1682
        %1684 = vrot.lane.b32.xlu0 %v964, 28
        %v1685 = vpop.permute.xlu0 %1684
        %1686 = vrot.lane.b32.xlu0 %v967, 28
        %v1687 = vpop.permute.xlu0 %1686
        %1688 = vrot.lane.b32.xlu0 %v969, 28
        %v1689 = vpop.permute.xlu0 %1688
        %1690 = vrot.lane.b32.xlu0 %v972, 28
        %v1691 = vpop.permute.xlu0 %1690
        %1692 = vrot.lane.b32.xlu0 %v974, 28
        %v1693 = vpop.permute.xlu0 %1692
        %1694 = vrot.lane.b32.xlu0 %v977, 28
        %v1695 = vpop.permute.xlu0 %1694
        %1696 = vrot.lane.b32.xlu0 %v979, 28
        %v1697 = vpop.permute.xlu0 %1696
        %1698 = vrot.lane.b32.xlu0 %v982, 28
        %v1699 = vpop.permute.xlu0 %1698
        %1700 = vrot.lane.b32.xlu0 %v984, 28
        %v1701 = vpop.permute.xlu0 %1700
        %1702 = vrot.lane.b32.xlu0 %v987, 28
        %v1703 = vpop.permute.xlu0 %1702
        %1704 = vrot.lane.b32.xlu0 %v989, 28
        %v1705 = vpop.permute.xlu0 %1704
        %1706 = vrot.lane.b32.xlu0 %v992, 28
        %v1707 = vpop.permute.xlu0 %1706
        %1708 = vrot.lane.b32.xlu0 %v994, 28
        %v1709 = vpop.permute.xlu0 %1708
        %1710 = vrot.lane.b32.xlu0 %v997, 28
        %v1711 = vpop.permute.xlu0 %1710
        %1712 = vrot.lane.b32.xlu0 %v999, 28
        %v1713 = vpop.permute.xlu0 %1712
        %1714 = vrot.lane.b32.xlu0 %v1002, 28
        %v1715 = vpop.permute.xlu0 %1714
        %1716 = vrot.lane.b32.xlu0 %v1004, 28
        %v1717 = vpop.permute.xlu0 %1716
        %1718 = vrot.lane.b32.xlu0 %v1087, 28
        %v1719 = vpop.permute.xlu0 %1718
        %1720 = vrot.lane.b32.xlu0 %v1089, 28
        %v1721 = vpop.permute.xlu0 %1720
        %1722 = vrot.lane.b32.xlu0 %v929, 28
        %v1723 = vpop.permute.xlu0 %1722
        %1755 = vrot.lane.b32.xlu0 %v1015, 32
        %v1756 = vpop.permute.xlu0 %1755
        %1757 = vrot.lane.b32.xlu0 %v1017, 32
        %v1758 = vpop.permute.xlu0 %1757
        %1759 = vrot.lane.b32.xlu0 %v1020, 32
        %v1760 = vpop.permute.xlu0 %1759
        %1761 = vrot.lane.b32.xlu0 %v1022, 32
        %v1762 = vpop.permute.xlu0 %1761
        %1763 = vrot.lane.b32.xlu0 %v1025, 32
        %v1764 = vpop.permute.xlu0 %1763
        %1765 = vrot.lane.b32.xlu0 %v1027, 32
        %v1766 = vpop.permute.xlu0 %1765
        %1767 = vrot.lane.b32.xlu0 %v1030, 32
        %v1768 = vpop.permute.xlu0 %1767
        %1769 = vrot.lane.b32.xlu0 %v1032, 32
        %v1770 = vpop.permute.xlu0 %1769
        %1771 = vrot.lane.b32.xlu0 %v1035, 32
        %v1772 = vpop.permute.xlu0 %1771
        %1773 = vrot.lane.b32.xlu0 %v1037, 32
        %v1774 = vpop.permute.xlu0 %1773
        %1775 = vrot.lane.b32.xlu0 %v1040, 32
        %v1776 = vpop.permute.xlu0 %1775
        %1777 = vrot.lane.b32.xlu0 %v1042, 32
        %v1778 = vpop.permute.xlu0 %1777
        %1779 = vrot.lane.b32.xlu0 %v1045, 32
        %v1780 = vpop.permute.xlu0 %1779
        %1781 = vrot.lane.b32.xlu0 %v1047, 32
        %v1782 = vpop.permute.xlu0 %1781
        %1783 = vrot.lane.b32.xlu0 %v1050, 32
        %v1784 = vpop.permute.xlu0 %1783
        %1785 = vrot.lane.b32.xlu0 %v1052, 32
        %v1786 = vpop.permute.xlu0 %1785
        %1787 = vrot.lane.b32.xlu0 %v1055, 32
        %v1788 = vpop.permute.xlu0 %1787
        %1789 = vrot.lane.b32.xlu0 %v1057, 32
        %v1790 = vpop.permute.xlu0 %1789
        %1791 = vrot.lane.b32.xlu0 %v1060, 32
        %v1792 = vpop.permute.xlu0 %1791
        %1793 = vrot.lane.b32.xlu0 %v1062, 32
        %v1794 = vpop.permute.xlu0 %1793
        %1795 = vrot.lane.b32.xlu0 %v1065, 32
        %v1796 = vpop.permute.xlu0 %1795
        %1797 = vrot.lane.b32.xlu0 %v1067, 32
        %v1798 = vpop.permute.xlu0 %1797
        %1799 = vrot.lane.b32.xlu0 %v1070, 32
        %v1800 = vpop.permute.xlu0 %1799
        %1801 = vrot.lane.b32.xlu0 %v1072, 32
        %v1802 = vpop.permute.xlu0 %1801
        %1803 = vrot.lane.b32.xlu0 %v1075, 32
        %v1804 = vpop.permute.xlu0 %1803
        %1805 = vrot.lane.b32.xlu0 %v1077, 32
        %v1806 = vpop.permute.xlu0 %1805
        %1807 = vrot.lane.b32.xlu0 %v1080, 32
        %v1808 = vpop.permute.xlu0 %1807
        %1809 = vrot.lane.b32.xlu0 %v1082, 32
        %v1810 = vpop.permute.xlu0 %1809
        %1811 = vrot.lane.b32.xlu0 %v1092, 32
        %v1812 = vpop.permute.xlu0 %1811
        %1813 = vrot.lane.b32.xlu0 %v1094, 32
        %v1814 = vpop.permute.xlu0 %1813
        %1815 = vrot.lane.b32.xlu0 %v1007, 32
        %v1816 = vpop.permute.xlu0 %1815
        %v1848 = vsel %vm388, 0.0, %v1096
        %v1849 = vsel %vm388, %v864, %v1098
        %v1850 = vsel %vm388, %v724, %v1100
        %v1851 = vsel %vm388, %v865, %v1102
        %v1852 = vsel %vm388, %v730, %v1104
        %v1853 = vsel %vm388, %v866, %v1106
        %v1854 = vsel %vm388, %v736, %v1108
        %v1855 = vsel %vm388, %v867, %v1110
        %v1856 = vsel %vm388, %v742, %v1112
        %v1857 = vsel %vm388, %v868, %v1114
        %v1858 = vsel %vm388, %v748, %v1116
        %v1859 = vsel %vm388, %v869, %v1118
        %v1860 = vsel %vm388, %v754, %v1120
        %v1861 = vsel %vm388, %v870, %v1122
        %v1862 = vsel %vm388, %v760, %v1124
        %v1863 = vsel %vm388, %v871, %v1126
        %v1864 = vsel %vm388, %v766, %v1128
        %v1865 = vsel %vm388, %v872, %v1130
        %v1866 = vsel %vm388, %v772, %v1132
        %v1867 = vsel %vm388, %v873, %v1134
        %v1868 = vsel %vm388, %v778, %v1136
        %v1869 = vsel %vm388, %v874, %v1138
        %v1870 = vsel %vm388, %v784, %v1140
        %v1871 = vsel %vm388, %v875, %v1142
        %v1872 = vsel %vm388, %v790, %v1144
        %v1873 = vsel %vm388, %v876, %v1146
        %v1874 = vsel %vm388, %v796, %v1148
        %v1875 = vsel %vm388, %v877, %v1150
        %v1876 = vsel %vm388, %v802, %v1152
        %v1877 = vsel %vm388, %v878, %v1154
        %v1878 = vsel %vm388, %v808, %v1156
        %vm1879 = vcmask 64512
        %v1880 = vsel %vm1879, %v1848, %v1189
        %v1881 = vsel %vm1879, %v1849, %v1191
        %v1882 = vsel %vm1879, %v1850, %v1193
        %v1883 = vsel %vm1879, %v1851, %v1195
        %v1884 = vsel %vm1879, %v1852, %v1197
        %v1885 = vsel %vm1879, %v1853, %v1199
        %v1886 = vsel %vm1879, %v1854, %v1201
        %v1887 = vsel %vm1879, %v1855, %v1203
        %v1888 = vsel %vm1879, %v1856, %v1205
        %v1889 = vsel %vm1879, %v1857, %v1207
        %v1890 = vsel %vm1879, %v1858, %v1209
        %v1891 = vsel %vm1879, %v1859, %v1211
        %v1892 = vsel %vm1879, %v1860, %v1213
        %v1893 = vsel %vm1879, %v1861, %v1215
        %v1894 = vsel %vm1879, %v1862, %v1217
        %v1895 = vsel %vm1879, %v1863, %v1219
        %v1896 = vsel %vm1879, %v1864, %v1221
        %v1897 = vsel %vm1879, %v1865, %v1223
        %v1898 = vsel %vm1879, %v1866, %v1225
        %v1899 = vsel %vm1879, %v1867, %v1227
        %v1900 = vsel %vm1879, %v1868, %v1229
        %v1901 = vsel %vm1879, %v1869, %v1231
        %v1902 = vsel %vm1879, %v1870, %v1233
        %v1903 = vsel %vm1879, %v1871, %v1235
        %v1904 = vsel %vm1879, %v1872, %v1237
        %v1905 = vsel %vm1879, %v1873, %v1239
        %v1906 = vsel %vm1879, %v1874, %v1241
        %v1907 = vsel %vm1879, %v1875, %v1243
        %v1908 = vsel %vm1879, %v1876, %v1245
        %v1909 = vsel %vm1879, %v1877, %v1247
        %v1910 = vsel %vm1879, %v1878, %v1249
        %vm1911 = vcmask 97280
        %v1912 = vsel %vm1911, %v1880, %v1282
        %v1913 = vsel %vm1911, %v1880, %v1284
        %v1914 = vsel %vm1911, %v1881, %v1286
        %v1915 = vsel %vm1911, %v1882, %v1288
        %v1916 = vsel %vm1911, %v1883, %v1290
        %v1917 = vsel %vm1911, %v1884, %v1292
        %v1918 = vsel %vm1911, %v1885, %v1294
        %v1919 = vsel %vm1911, %v1886, %v1296
        %v1920 = vsel %vm1911, %v1887, %v1298
        %v1921 = vsel %vm1911, %v1888, %v1300
        %v1922 = vsel %vm1911, %v1889, %v1302
        %v1923 = vsel %vm1911, %v1890, %v1304
        %v1924 = vsel %vm1911, %v1891, %v1306
        %v1925 = vsel %vm1911, %v1892, %v1308
        %v1926 = vsel %vm1911, %v1893, %v1310
        %v1927 = vsel %vm1911, %v1894, %v1312
        %v1928 = vsel %vm1911, %v1895, %v1314
        %v1929 = vsel %vm1911, %v1896, %v1316
        %v1930 = vsel %vm1911, %v1897, %v1318
        %v1931 = vsel %vm1911, %v1898, %v1320
        %v1932 = vsel %vm1911, %v1899, %v1322
        %v1933 = vsel %vm1911, %v1900, %v1324
        %v1934 = vsel %vm1911, %v1901, %v1326
        %v1935 = vsel %vm1911, %v1902, %v1328
        %v1936 = vsel %vm1911, %v1903, %v1330
        %v1937 = vsel %vm1911, %v1904, %v1332
        %v1938 = vsel %vm1911, %v1905, %v1334
        %v1939 = vsel %vm1911, %v1906, %v1336
        %v1940 = vsel %vm1911, %v1907, %v1338
        %v1941 = vsel %vm1911, %v1908, %v1340
        %v1942 = vsel %vm1911, %v1909, %v1342
        %v1943 = vsel %vm1911, %v1910, %v1344
        %vm1944 = vcmask 130048
        %v1945 = vsel %vm1944, %v1912, %v1378
        %v1946 = vsel %vm1944, %v1913, %v1380
        %v1947 = vsel %vm1944, %v1914, %v1382
        %v1948 = vsel %vm1944, %v1915, %v1384
        %v1949 = vsel %vm1944, %v1916, %v1386
        %v1950 = vsel %vm1944, %v1917, %v1388
        %v1951 = vsel %vm1944, %v1918, %v1390
        %v1952 = vsel %vm1944, %v1919, %v1392
        %v1953 = vsel %vm1944, %v1920, %v1394
        %v1954 = vsel %vm1944, %v1921, %v1396
        %v1955 = vsel %vm1944, %v1922, %v1398
        %v1956 = vsel %vm1944, %v1923, %v1400
        %v1957 = vsel %vm1944, %v1924, %v1402
        %v1958 = vsel %vm1944, %v1925, %v1404
        %v1959 = vsel %vm1944, %v1926, %v1406
        %v1960 = vsel %vm1944, %v1927, %v1408
        %v1961 = vsel %vm1944, %v1928, %v1410
        %v1962 = vsel %vm1944, %v1929, %v1412
        %v1963 = vsel %vm1944, %v1930, %v1414
        %v1964 = vsel %vm1944, %v1931, %v1416
        %v1965 = vsel %vm1944, %v1932, %v1418
        %v1966 = vsel %vm1944, %v1933, %v1420
        %v1967 = vsel %vm1944, %v1934, %v1422
        %v1968 = vsel %vm1944, %v1935, %v1424
        %v1969 = vsel %vm1944, %v1936, %v1426
        %v1970 = vsel %vm1944, %v1937, %v1428
        %v1971 = vsel %vm1944, %v1938, %v1430
        %v1972 = vsel %vm1944, %v1939, %v1432
        %v1973 = vsel %vm1944, %v1940, %v1434
        %v1974 = vsel %vm1944, %v1941, %v1436
        %v1975 = vsel %vm1944, %v1942, %v1438
        %v1976 = vsel %vm1944, %v1943, %v1440
        %vm1977 = vcmask 162816
        %v1978 = vsel %vm1977, %v1945, %v1474
        %v1979 = vsel %vm1977, %v1946, %v1476
        %v1980 = vsel %vm1977, %v1947, %v1478
        %v1981 = vsel %vm1977, %v1948, %v1480
        %v1982 = vsel %vm1977, %v1949, %v1482
        %v1983 = vsel %vm1977, %v1950, %v1484
        %v1984 = vsel %vm1977, %v1951, %v1486
        %v1985 = vsel %vm1977, %v1952, %v1488
        %v1986 = vsel %vm1977, %v1953, %v1490
        %v1987 = vsel %vm1977, %v1954, %v1492
        %v1988 = vsel %vm1977, %v1955, %v1494
        %v1989 = vsel %vm1977, %v1956, %v1496
        %v1990 = vsel %vm1977, %v1957, %v1498
        %v1991 = vsel %vm1977, %v1958, %v1500
        %v1992 = vsel %vm1977, %v1959, %v1502
        %v1993 = vsel %vm1977, %v1960, %v1504
        %v1994 = vsel %vm1977, %v1961, %v1506
        %v1995 = vsel %vm1977, %v1962, %v1508
        %v1996 = vsel %vm1977, %v1963, %v1510
        %v1997 = vsel %vm1977, %v1964, %v1512
        %v1998 = vsel %vm1977, %v1965, %v1514
        %v1999 = vsel %vm1977, %v1966, %v1516
        %v2000 = vsel %vm1977, %v1967, %v1518
        %v2001 = vsel %vm1977, %v1968, %v1520
        %v2002 = vsel %vm1977, %v1969, %v1522
        %v2003 = vsel %vm1977, %v1970, %v1524
        %v2004 = vsel %vm1977, %v1971, %v1526
        %v2005 = vsel %vm1977, %v1972, %v1528
        %v2006 = vsel %vm1977, %v1973, %v1530
        %v2007 = vsel %vm1977, %v1974, %v1532
        %v2008 = vsel %vm1977, %v1975, %v1534
        %v2009 = vsel %vm1977, %v1976, %v1536
        %vm2010 = vcmask 195584
        %v2011 = vsel %vm2010, %v1978, %v1570
        %v2012 = vsel %vm2010, %v1979, %v1572
        %v2013 = vsel %vm2010, %v1980, %v1574
        %v2014 = vsel %vm2010, %v1981, %v1576
        %v2015 = vsel %vm2010, %v1982, %v1578
        %v2016 = vsel %vm2010, %v1983, %v1580
        %v2017 = vsel %vm2010, %v1984, %v1582
        %v2018 = vsel %vm2010, %v1985, %v1584
        %v2019 = vsel %vm2010, %v1986, %v1586
        %v2020 = vsel %vm2010, %v1987, %v1588
        %v2021 = vsel %vm2010, %v1988, %v1590
        %v2022 = vsel %vm2010, %v1989, %v1592
        %v2023 = vsel %vm2010, %v1990, %v1594
        %v2024 = vsel %vm2010, %v1991, %v1596
        %v2025 = vsel %vm2010, %v1992, %v1598
        %v2026 = vsel %vm2010, %v1993, %v1600
        %v2027 = vsel %vm2010, %v1994, %v1602
        %v2028 = vsel %vm2010, %v1995, %v1604
        %v2029 = vsel %vm2010, %v1996, %v1606
        %v2030 = vsel %vm2010, %v1997, %v1608
        %v2031 = vsel %vm2010, %v1998, %v1610
        %v2032 = vsel %vm2010, %v1999, %v1612
        %v2033 = vsel %vm2010, %v2000, %v1614
        %v2034 = vsel %vm2010, %v2001, %v1616
        %v2035 = vsel %vm2010, %v2002, %v1618
        %v2036 = vsel %vm2010, %v2003, %v1620
        %v2037 = vsel %vm2010, %v2004, %v1622
        %v2038 = vsel %vm2010, %v2005, %v1624
        %v2039 = vsel %vm2010, %v2006, %v1626
        %v2040 = vsel %vm2010, %v2007, %v1628
        %v2041 = vsel %vm2010, %v2008, %v1630
        %v2042 = vsel %vm2010, %v2009, %v1630
        %vm2043 = vcmask 228352
        %v2044 = vsel %vm2043, %v2011, %v1663
        %v2045 = vsel %vm2043, %v2012, %v1665
        %v2046 = vsel %vm2043, %v2013, %v1667
        %v2047 = vsel %vm2043, %v2014, %v1669
        %v2048 = vsel %vm2043, %v2015, %v1671
        %v2049 = vsel %vm2043, %v2016, %v1673
        %v2050 = vsel %vm2043, %v2017, %v1675
        %v2051 = vsel %vm2043, %v2018, %v1677
        %v2052 = vsel %vm2043, %v2019, %v1679
        %v2053 = vsel %vm2043, %v2020, %v1681
        %v2054 = vsel %vm2043, %v2021, %v1683
        %v2055 = vsel %vm2043, %v2022, %v1685
        %v2056 = vsel %vm2043, %v2023, %v1687
        %v2057 = vsel %vm2043, %v2024, %v1689
        %v2058 = vsel %vm2043, %v2025, %v1691
        %v2059 = vsel %vm2043, %v2026, %v1693
        %v2060 = vsel %vm2043, %v2027, %v1695
        %v2061 = vsel %vm2043, %v2028, %v1697
        %v2062 = vsel %vm2043, %v2029, %v1699
        %v2063 = vsel %vm2043, %v2030, %v1701
        %v2064 = vsel %vm2043, %v2031, %v1703
        %v2065 = vsel %vm2043, %v2032, %v1705
        %v2066 = vsel %vm2043, %v2033, %v1707
        %v2067 = vsel %vm2043, %v2034, %v1709
        %v2068 = vsel %vm2043, %v2035, %v1711
        %v2069 = vsel %vm2043, %v2036, %v1713
        %v2070 = vsel %vm2043, %v2037, %v1715
        %v2071 = vsel %vm2043, %v2038, %v1717
        %v2072 = vsel %vm2043, %v2039, %v1719
        %v2073 = vsel %vm2043, %v2040, %v1721
        %v2074 = vsel %vm2043, %v2041, %v1723
        %v2075 = vsel %vm2043, %v2042, %v1723
        %vm2076 = vcmask 261120
        %v2077 = vsel %vm2076, %v2044, %v1756
        %v2078 = vsel %vm2076, %v2045, %v1758
        %v2079 = vsel %vm2076, %v2046, %v1760
        %v2080 = vsel %vm2076, %v2047, %v1762
        %v2081 = vsel %vm2076, %v2048, %v1764
        %v2082 = vsel %vm2076, %v2049, %v1766
        %v2083 = vsel %vm2076, %v2050, %v1768
        %v2084 = vsel %vm2076, %v2051, %v1770
        %v2085 = vsel %vm2076, %v2052, %v1772
        %v2086 = vsel %vm2076, %v2053, %v1774
        %v2087 = vsel %vm2076, %v2054, %v1776
        %v2088 = vsel %vm2076, %v2055, %v1778
        %v2089 = vsel %vm2076, %v2056, %v1780
        %v2090 = vsel %vm2076, %v2057, %v1782
        %v2091 = vsel %vm2076, %v2058, %v1784
        %v2092 = vsel %vm2076, %v2059, %v1786
        %v2093 = vsel %vm2076, %v2060, %v1788
        %v2094 = vsel %vm2076, %v2061, %v1790
        %v2095 = vsel %vm2076, %v2062, %v1792
        %v2096 = vsel %vm2076, %v2063, %v1794
        %v2097 = vsel %vm2076, %v2064, %v1796
        %v2098 = vsel %vm2076, %v2065, %v1798
        %v2099 = vsel %vm2076, %v2066, %v1800
        %v2100 = vsel %vm2076, %v2067, %v1802
        %v2101 = vsel %vm2076, %v2068, %v1804
        %v2102 = vsel %vm2076, %v2069, %v1806
        %v2103 = vsel %vm2076, %v2070, %v1808
        %v2104 = vsel %vm2076, %v2071, %v1810
        %v2105 = vsel %vm2076, %v2072, %v1812
        %v2106 = vsel %vm2076, %v2073, %v1814
        %v2107 = vsel %vm2076, %v2074, %v1816
        %v2108 = vsel %vm2076, %v2075, %v1816
        %v2109 = vpack.c.bf16 %v2078, %v2077
        %v2110 = vpack.c.bf16 %v2080, %v2079
        %v2111 = vpack.c.bf16 %v2082, %v2081
        %v2112 = vpack.c.bf16 %v2084, %v2083
        %v2113 = vpack.c.bf16 %v2086, %v2085
        %v2114 = vpack.c.bf16 %v2088, %v2087
        %v2115 = vpack.c.bf16 %v2090, %v2089
        %v2116 = vpack.c.bf16 %v2092, %v2091
        %v2117 = vpack.c.bf16 %v2094, %v2093
        %v2118 = vpack.c.bf16 %v2096, %v2095
        %v2119 = vpack.c.bf16 %v2098, %v2097
        %v2120 = vpack.c.bf16 %v2100, %v2099
        %v2121 = vpack.c.bf16 %v2102, %v2101
        %v2122 = vpack.c.bf16 %v2104, %v2103
        %v2123 = vpack.c.bf16 %v2106, %v2105
        %v2124 = vpack.c.bf16 %v2108, %v2107
        %v2126 = vlaneseq
        %v2127 = vshrl.u32 %v2126, 7
        %v2128 = vsub.s32 0, %v2127
        %v2129 = vrot.slane %v639, %v2128
        %v2136 = vunpack.c.l.b16 %v634
        %v2137 = vunpack.c.l.b16 %v635
        %v2138 = vunpack.c.l.b16 %v636
        %v2139 = vunpack.c.l.b16 %v637
        %v2140 = vunpack.c.l.b16 %v638
        %v2141 = vpack.c.b16 %v2137, %v2136
        %v2142 = vpack.c.b16 %v2139, %v2138
        %v2143 = vpack.c.b16 %v2140, %v2140
        %vm2146 = vcmask 293888
        %v2148 = vsel %vm2146, %v2109, 0
        %v2151 = vsel %vm2146, %v2110, 0
        %v2154 = vsel %vm2146, %v2111, 0
        %v2157 = vsel %vm2146, %v2112, 0
        %v2160 = vsel %vm2146, %v2113, 0
        %v2163 = vsel %vm2146, %v2114, 0
        %v2166 = vsel %vm2146, %v2115, 0
        %v2169 = vsel %vm2146, %v2116, 0
        %v2172 = vsel %vm2146, %v2117, 0
        %v2175 = vsel %vm2146, %v2118, 0
        %v2178 = vsel %vm2146, %v2119, 0
        %v2181 = vsel %vm2146, %v2120, 0
        %v2184 = vsel %vm2146, %v2121, 0
        %v2187 = vsel %vm2146, %v2122, 0
        %v2190 = vsel %vm2146, %v2123, 0
        %v2193 = vsel %vm2146, %v2124, 0
        %v2196 = vsel %vm437, %v2143, 0
        %2198 = vmatprep.subr.bf16.mxu0 0
        %2199 = vmatpush1.bf16.msra.mxu0 %v2141
        %2200 = vmatprep.subr.bf16.mxu0 0
        %2201 = vmatpush1.bf16.msra.mxu0 %v2142
        %2202 = vmatprep.subr.bf16.mxu0 0
        %2203 = vmatpush1.bf16.msra.mxu0 %v2196
        %2204 = vmatprep.subr.bf16.mxu0 0
        %2205 = vmatpush1.bf16.msra.mxu0 0
        %2206 = vmatprep.subr.bf16.mxu0 0
        %2207 = vmatpush1.bf16.msra.mxu0 0
        %2208 = vmatprep.subr.bf16.mxu0 0
        %2209 = vmatpush1.bf16.msra.mxu0 0
        %2210 = vmatprep.subr.bf16.mxu0 0
        %2211 = vmatpush1.bf16.msra.mxu0 0
        %2212 = vmatprep.subr.bf16.mxu0 0
        %2213 = vmatpush1.bf16.msra.mxu0 0
        %2214 = vmatprep.subr.bf16.mxu0 0
        %2215 = vmatpush1.bf16.msra.mxu0 0
        %2216 = vmatprep.subr.bf16.mxu0 0
        %2217 = vmatpush1.bf16.msra.mxu0 0
        %2218 = vmatprep.subr.bf16.mxu0 0
        %2219 = vmatpush1.bf16.msra.mxu0 0
        %2220 = vmatprep.subr.bf16.mxu0 0
        %2221 = vmatpush1.bf16.msra.mxu0 0
        %2222 = vmatprep.subr.bf16.mxu0 0
        %2223 = vmatpush1.bf16.msra.mxu0 0
        %2224 = vmatprep.subr.bf16.mxu0 0
        %2225 = vmatpush1.bf16.msra.mxu0 0
        %2226 = vmatprep.subr.bf16.mxu0 0
        %2227 = vmatpush1.bf16.msra.mxu0 0
        %2228 = vmatprep.subr.bf16.mxu0 0
        %2229 = vmatpush1.bf16.msra.mxu0 0
        %2230 = vmatprep.mubr.bf16.mxu0 0
        %2231 = vmatmul.mubr.bf16.gmra.mrb[0].mxu0 %v2148
        %v2232 = vpop.f32.mrb[0].mxu0
        %v2233 = vadd.f32 %v2129, %v2232
        %v2234 = vpop.f32.mrb[0].mxu0
        %v2235 = vpop.f32.mrb[0].mxu0
        %v2236 = vadd.f32 %v2129, %v2235
        %v2237 = vpop.f32.mrb[0].mxu0
        %2238 = vmatprep.mubr.bf16.mxu0 0
        %2239 = vmatmul.mubr.bf16.gmra.mrb[0].mxu0 %v2151
        %v2240 = vpop.f32.mrb[0].mxu0
        %v2241 = vadd.f32 %v2129, %v2240
        %v2242 = vpop.f32.mrb[0].mxu0
        %v2243 = vpop.f32.mrb[0].mxu0
        %v2244 = vadd.f32 %v2129, %v2243
        %v2245 = vpop.f32.mrb[0].mxu0
        %2246 = vmatprep.mubr.bf16.mxu0 0
        %2247 = vmatmul.mubr.bf16.gmra.mrb[0].mxu0 %v2154
        %v2248 = vpop.f32.mrb[0].mxu0
        %v2249 = vadd.f32 %v2129, %v2248
        %v2250 = vpop.f32.mrb[0].mxu0
        %v2251 = vpop.f32.mrb[0].mxu0
        %v2252 = vadd.f32 %v2129, %v2251
        %v2253 = vpop.f32.mrb[0].mxu0
        %2254 = vmatprep.mubr.bf16.mxu0 0
        %2255 = vmatmul.mubr.bf16.gmra.mrb[0].mxu0 %v2157
        %v2256 = vpop.f32.mrb[0].mxu0
        %v2257 = vadd.f32 %v2129, %v2256
        %v2258 = vpop.f32.mrb[0].mxu0
        %v2259 = vpop.f32.mrb[0].mxu0
        %v2260 = vadd.f32 %v2129, %v2259
        %v2261 = vpop.f32.mrb[0].mxu0
        %2262 = vmatprep.mubr.bf16.mxu0 0
        %2263 = vmatmul.mubr.bf16.gmra.mrb[0].mxu0 %v2160
        %v2264 = vpop.f32.mrb[0].mxu0
        %v2265 = vadd.f32 %v2129, %v2264
        %v2266 = vpop.f32.mrb[0].mxu0
        %v2267 = vpop.f32.mrb[0].mxu0
        %v2268 = vadd.f32 %v2129, %v2267
        %v2269 = vpop.f32.mrb[0].mxu0
        %2270 = vmatprep.mubr.bf16.mxu0 0
        %2271 = vmatmul.mubr.bf16.gmra.mrb[0].mxu0 %v2163
        %v2272 = vpop.f32.mrb[0].mxu0
        %v2273 = vadd.f32 %v2129, %v2272
        %v2274 = vpop.f32.mrb[0].mxu0
        %v2275 = vpop.f32.mrb[0].mxu0
        %v2276 = vadd.f32 %v2129, %v2275
        %v2277 = vpop.f32.mrb[0].mxu0
        %2278 = vmatprep.mubr.bf16.mxu0 0
        %2279 = vmatmul.mubr.bf16.gmra.mrb[0].mxu0 %v2166
        %v2280 = vpop.f32.mrb[0].mxu0
        %v2281 = vadd.f32 %v2129, %v2280
        %v2282 = vpop.f32.mrb[0].mxu0
        %v2283 = vpop.f32.mrb[0].mxu0
        %v2284 = vadd.f32 %v2129, %v2283
        %v2285 = vpop.f32.mrb[0].mxu0
        %2286 = vmatprep.mubr.bf16.mxu0 0
        %2287 = vmatmul.mubr.bf16.gmra.mrb[0].mxu0 %v2169
        %v2288 = vpop.f32.mrb[0].mxu0
        %v2289 = vadd.f32 %v2129, %v2288
        %v2290 = vpop.f32.mrb[0].mxu0
        %v2291 = vpop.f32.mrb[0].mxu0
        %v2292 = vadd.f32 %v2129, %v2291
        %v2293 = vpop.f32.mrb[0].mxu0
        %2294 = vmatprep.mubr.bf16.mxu0 0
        %2295 = vmatmul.mubr.bf16.gmra.mrb[0].mxu0 %v2172
        %v2296 = vpop.f32.mrb[0].mxu0
        %v2297 = vadd.f32 %v2129, %v2296
        %v2298 = vpop.f32.mrb[0].mxu0
        %v2299 = vpop.f32.mrb[0].mxu0
        %v2300 = vadd.f32 %v2129, %v2299
        %v2301 = vpop.f32.mrb[0].mxu0
        %2302 = vmatprep.mubr.bf16.mxu0 0
        %2303 = vmatmul.mubr.bf16.gmra.mrb[0].mxu0 %v2175
        %v2304 = vpop.f32.mrb[0].mxu0
        %v2305 = vadd.f32 %v2129, %v2304
        %v2306 = vpop.f32.mrb[0].mxu0
        %v2307 = vpop.f32.mrb[0].mxu0
        %v2308 = vadd.f32 %v2129, %v2307
        %v2309 = vpop.f32.mrb[0].mxu0
        %2310 = vmatprep.mubr.bf16.mxu0 0
        %2311 = vmatmul.mubr.bf16.gmra.mrb[0].mxu0 %v2178
        %v2312 = vpop.f32.mrb[0].mxu0
        %v2313 = vadd.f32 %v2129, %v2312
        %v2314 = vpop.f32.mrb[0].mxu0
        %v2315 = vpop.f32.mrb[0].mxu0
        %v2316 = vadd.f32 %v2129, %v2315
        %v2317 = vpop.f32.mrb[0].mxu0
        %2318 = vmatprep.mubr.bf16.mxu0 0
        %2319 = vmatmul.mubr.bf16.gmra.mrb[0].mxu0 %v2181
        %v2320 = vpop.f32.mrb[0].mxu0
        %v2321 = vadd.f32 %v2129, %v2320
        %v2322 = vpop.f32.mrb[0].mxu0
        %v2323 = vpop.f32.mrb[0].mxu0
        %v2324 = vadd.f32 %v2129, %v2323
        %v2325 = vpop.f32.mrb[0].mxu0
        %2326 = vmatprep.mubr.bf16.mxu0 0
        %2327 = vmatmul.mubr.bf16.gmra.mrb[0].mxu0 %v2184
        %v2328 = vpop.f32.mrb[0].mxu0
        %v2329 = vadd.f32 %v2129, %v2328
        %v2330 = vpop.f32.mrb[0].mxu0
        %v2331 = vpop.f32.mrb[0].mxu0
        %v2332 = vadd.f32 %v2129, %v2331
        %v2333 = vpop.f32.mrb[0].mxu0
        %2334 = vmatprep.mubr.bf16.mxu0 0
        %2335 = vmatmul.mubr.bf16.gmra.mrb[0].mxu0 %v2187
        %v2336 = vpop.f32.mrb[0].mxu0
        %v2337 = vadd.f32 %v2129, %v2336
        %v2338 = vpop.f32.mrb[0].mxu0
        %v2339 = vpop.f32.mrb[0].mxu0
        %v2340 = vadd.f32 %v2129, %v2339
        %v2341 = vpop.f32.mrb[0].mxu0
        %2342 = vmatprep.mubr.bf16.mxu0 0
        %2343 = vmatmul.mubr.bf16.gmra.mrb[0].mxu0 %v2190
        %v2344 = vpop.f32.mrb[0].mxu0
        %v2345 = vadd.f32 %v2129, %v2344
        %v2346 = vpop.f32.mrb[0].mxu0
        %v2347 = vpop.f32.mrb[0].mxu0
        %v2348 = vadd.f32 %v2129, %v2347
        %v2349 = vpop.f32.mrb[0].mxu0
        %2350 = vmatprep.mubr.bf16.mxu0 0
        %2351 = vmatmul.mubr.bf16.gmra.mrb[0].mxu0 %v2193
        %v2352 = vpop.f32.mrb[0].mxu0
        %v2353 = vadd.f32 %v2129, %v2352
        %v2354 = vpop.f32.mrb[0].mxu0
        %v2355 = vpop.f32.mrb[0].mxu0
        %v2356 = vadd.f32 %v2129, %v2355
        %v2357 = vpop.f32.mrb[0].mxu0
        %2358 = vdwg.mxu0
        %v2359 = vmax.f32 %v2233, 0.0
        %v2360 = vmax.f32 %v2236, 0.0
        %v2361 = vmax.f32 %v2241, 0.0
        %v2362 = vmax.f32 %v2244, 0.0
        %v2363 = vmax.f32 %v2249, 0.0
        %v2364 = vmax.f32 %v2252, 0.0
        %v2365 = vmax.f32 %v2257, 0.0
        %v2366 = vmax.f32 %v2260, 0.0
        %v2367 = vmax.f32 %v2265, 0.0
        %v2368 = vmax.f32 %v2268, 0.0
        %v2369 = vmax.f32 %v2273, 0.0
        %v2370 = vmax.f32 %v2276, 0.0
        %v2371 = vmax.f32 %v2281, 0.0
        %v2372 = vmax.f32 %v2284, 0.0
        %v2373 = vmax.f32 %v2289, 0.0
        %v2374 = vmax.f32 %v2292, 0.0
        %v2375 = vmax.f32 %v2297, 0.0
        %v2376 = vmax.f32 %v2300, 0.0
        %v2377 = vmax.f32 %v2305, 0.0
        %v2378 = vmax.f32 %v2308, 0.0
        %v2379 = vmax.f32 %v2313, 0.0
        %v2380 = vmax.f32 %v2316, 0.0
        %v2381 = vmax.f32 %v2321, 0.0
        %v2382 = vmax.f32 %v2324, 0.0
        %v2383 = vmax.f32 %v2329, 0.0
        %v2384 = vmax.f32 %v2332, 0.0
        %v2385 = vmax.f32 %v2337, 0.0
        %v2386 = vmax.f32 %v2340, 0.0
        %v2387 = vmax.f32 %v2345, 0.0
        %v2388 = vmax.f32 %v2348, 0.0
        %v2389 = vmax.f32 %v2353, 0.0
        %v2390 = vmax.f32 %v2356, 0.0
        %v2391 = vld [vmem:[%s5] sm:$0xf]
        %v2392 = vld [vmem:[%s5 + $0x4] sm:$0xf]
        %v2393 = vld [vmem:[%s5 + $0x8] sm:$0xf]
        %v2394 = vld [vmem:[%s5 + $0xc] sm:$0xf]
        %v2395 = vld [vmem:[%s5 + $0x10] sm:$0xf]
        %v2396 = vld [vmem:[%s5 + $0x14] sm:$0xf]
        %v2397 = vld [vmem:[%s5 + $0x18] sm:$0xf]
        %v2398 = vld [vmem:[%s5 + $0x1c] sm:$0xf]
        %v2399 = vld [vmem:[%s5 + $0x20] sm:$0xf]
        %v2400 = vld [vmem:[%s5 + $0x24] sm:$0xf]
        %v2401 = vld [vmem:[%s5 + $0x28] sm:$0xf]
        %v2402 = vld [vmem:[%s5 + $0x2c] sm:$0xf]
        %v2403 = vld [vmem:[%s5 + $0x30] sm:$0x3]
        %v2404 = vld [vmem:[%s6] sm:$0x1]
        %v2405 = vrot.slane %v602, 6
        %v2406 = vrot.slane %v603, 6
        %v2407 = vsel %vm437, %v2405, %v2406
        %v2408 = vrot.slane %v604, 6
        %v2409 = vrot.slane %v605, 6
        %v2410 = vsel %vm437, %v2408, %v2409
        %v2411 = vrot.slane %v606, 6
        %v2412 = vrot.slane %v607, 6
        %v2413 = vsel %vm437, %v2411, %v2412
        %v2414 = vrot.slane %v608, 6
        %v2415 = vrot.slane %v609, 6
        %v2416 = vsel %vm437, %v2414, %v2415
        %v2417 = vrot.slane %v610, 6
        %v2418 = vrot.slane %v611, 6
        %v2419 = vsel %vm437, %v2417, %v2418
        %v2420 = vrot.slane %v612, 6
        %v2421 = vrot.slane %v613, 6
        %v2422 = vsel %vm437, %v2420, %v2421
        %v2423 = vrot.slane %v614, 6
        %v2424 = vrot.slane %v615, 6
        %v2425 = vsel %vm437, %v2423, %v2424
        %v2426 = vrot.slane %v616, 6
        %v2427 = vrot.slane %v617, 6
        %v2428 = vsel %vm437, %v2426, %v2427
        %v2429 = vrot.slane %v618, 6
        %v2430 = vrot.slane %v619, 6
        %v2431 = vsel %vm437, %v2429, %v2430
        %v2432 = vrot.slane %v620, 6
        %v2433 = vrot.slane %v621, 6
        %v2434 = vsel %vm437, %v2432, %v2433
        %v2435 = vrot.slane %v622, 6
        %v2436 = vrot.slane %v623, 6
        %v2437 = vsel %vm437, %v2435, %v2436
        %v2438 = vrot.slane %v624, 6
        %v2439 = vrot.slane %v625, 6
        %v2440 = vsel %vm437, %v2438, %v2439
        %v2441 = vrot.slane %v626, 6
        %v2442 = vrot.slane %v627, 6
        %v2443 = vsel %vm437, %v2441, %v2442
        %v2444 = vrot.slane %v628, 6
        %v2445 = vrot.slane %v629, 6
        %v2446 = vsel %vm437, %v2444, %v2445
        %v2447 = vrot.slane %v630, 6
        %v2448 = vrot.slane %v631, 6
        %v2449 = vsel %vm437, %v2447, %v2448
        %v2450 = vrot.slane %v632, 6
        %v2451 = vrot.slane %v633, 6
        %v2452 = vsel %vm437, %v2450, %v2451
        %2453 = vrot.lane.b32.xlu0 %v2405, 116
        %v2454 = vpop.permute.xlu0 %2453
        %2455 = vrot.lane.b32.xlu0 %v2407, 116
        %v2456 = vpop.permute.xlu0 %2455
        %2457 = vrot.lane.b32.xlu0 %v2406, 116
        %v2458 = vpop.permute.xlu0 %2457
        %2459 = vrot.lane.b32.xlu0 %v2408, 116
        %v2460 = vpop.permute.xlu0 %2459
        %2461 = vrot.lane.b32.xlu0 %v2410, 116
        %v2462 = vpop.permute.xlu0 %2461
        %2463 = vrot.lane.b32.xlu0 %v2409, 116
        %v2464 = vpop.permute.xlu0 %2463
        %2465 = vrot.lane.b32.xlu0 %v2411, 116
        %v2466 = vpop.permute.xlu0 %2465
        %2467 = vrot.lane.b32.xlu0 %v2413, 116
        %v2468 = vpop.permute.xlu0 %2467
        %2469 = vrot.lane.b32.xlu0 %v2412, 116
        %v2470 = vpop.permute.xlu0 %2469
        %2471 = vrot.lane.b32.xlu0 %v2414, 116
        %v2472 = vpop.permute.xlu0 %2471
        %2473 = vrot.lane.b32.xlu0 %v2416, 116
        %v2474 = vpop.permute.xlu0 %2473
        %2475 = vrot.lane.b32.xlu0 %v2415, 116
        %v2476 = vpop.permute.xlu0 %2475
        %2477 = vrot.lane.b32.xlu0 %v2417, 116
        %v2478 = vpop.permute.xlu0 %2477
        %2479 = vrot.lane.b32.xlu0 %v2419, 116
        %v2480 = vpop.permute.xlu0 %2479
        %2481 = vrot.lane.b32.xlu0 %v2418, 116
        %v2482 = vpop.permute.xlu0 %2481
        %2483 = vrot.lane.b32.xlu0 %v2420, 116
        %v2484 = vpop.permute.xlu0 %2483
        %2485 = vrot.lane.b32.xlu0 %v2422, 116
        %v2486 = vpop.permute.xlu0 %2485
        %2487 = vrot.lane.b32.xlu0 %v2421, 116
        %v2488 = vpop.permute.xlu0 %2487
        %2489 = vrot.lane.b32.xlu0 %v2423, 116
        %v2490 = vpop.permute.xlu0 %2489
        %2491 = vrot.lane.b32.xlu0 %v2425, 116
        %v2492 = vpop.permute.xlu0 %2491
        %2493 = vrot.lane.b32.xlu0 %v2424, 116
        %v2494 = vpop.permute.xlu0 %2493
        %2495 = vrot.lane.b32.xlu0 %v2426, 116
        %v2496 = vpop.permute.xlu0 %2495
        %2497 = vrot.lane.b32.xlu0 %v2428, 116
        %v2498 = vpop.permute.xlu0 %2497
        %2499 = vrot.lane.b32.xlu0 %v2427, 116
        %v2500 = vpop.permute.xlu0 %2499
        %2501 = vrot.lane.b32.xlu0 %v2429, 116
        %v2502 = vpop.permute.xlu0 %2501
        %2503 = vrot.lane.b32.xlu0 %v2431, 116
        %v2504 = vpop.permute.xlu0 %2503
        %2505 = vrot.lane.b32.xlu0 %v2430, 116
        %v2506 = vpop.permute.xlu0 %2505
        %2507 = vrot.lane.b32.xlu0 %v2432, 116
        %v2508 = vpop.permute.xlu0 %2507
        %2509 = vrot.lane.b32.xlu0 %v2434, 116
        %v2510 = vpop.permute.xlu0 %2509
        %2511 = vrot.lane.b32.xlu0 %v2433, 116
        %v2512 = vpop.permute.xlu0 %2511
        %2513 = vrot.lane.b32.xlu0 %v2435, 116
        %v2514 = vpop.permute.xlu0 %2513
        %2515 = vrot.lane.b32.xlu0 %v2437, 116
        %v2516 = vpop.permute.xlu0 %2515
        %2517 = vrot.lane.b32.xlu0 %v2436, 116
        %v2518 = vpop.permute.xlu0 %2517
        %2519 = vrot.lane.b32.xlu0 %v2438, 116
        %v2520 = vpop.permute.xlu0 %2519
        %2521 = vrot.lane.b32.xlu0 %v2440, 116
        %v2522 = vpop.permute.xlu0 %2521
        %2523 = vrot.lane.b32.xlu0 %v2439, 116
        %v2524 = vpop.permute.xlu0 %2523
        %2525 = vrot.lane.b32.xlu0 %v2441, 116
        %v2526 = vpop.permute.xlu0 %2525
        %2527 = vrot.lane.b32.xlu0 %v2443, 116
        %v2528 = vpop.permute.xlu0 %2527
        %2529 = vrot.lane.b32.xlu0 %v2442, 116
        %v2530 = vpop.permute.xlu0 %2529
        %2531 = vrot.lane.b32.xlu0 %v2444, 116
        %v2532 = vpop.permute.xlu0 %2531
        %2533 = vrot.lane.b32.xlu0 %v2446, 116
        %v2534 = vpop.permute.xlu0 %2533
        %2535 = vrot.lane.b32.xlu0 %v2445, 116
        %v2536 = vpop.permute.xlu0 %2535
        %2537 = vrot.lane.b32.xlu0 %v2447, 116
        %v2538 = vpop.permute.xlu0 %2537
        %2539 = vrot.lane.b32.xlu0 %v2449, 116
        %v2540 = vpop.permute.xlu0 %2539
        %2541 = vrot.lane.b32.xlu0 %v2448, 116
        %v2542 = vpop.permute.xlu0 %2541
        %2543 = vrot.lane.b32.xlu0 %v2450, 116
        %v2544 = vpop.permute.xlu0 %2543
        %2545 = vrot.lane.b32.xlu0 %v2452, 116
        %v2546 = vpop.permute.xlu0 %2545
        %2547 = vrot.lane.b32.xlu0 %v2451, 116
        %v2548 = vpop.permute.xlu0 %2547
        %v2595 = vsel %vm437, 0.0, %v2454
        %v2596 = vsel %vm437, 0.0, %v2460
        %v2597 = vsel %vm437, 0.0, %v2466
        %v2598 = vsel %vm437, 0.0, %v2472
        %v2599 = vsel %vm437, 0.0, %v2478
        %v2600 = vsel %vm437, 0.0, %v2484
        %v2601 = vsel %vm437, 0.0, %v2490
        %v2602 = vsel %vm437, 0.0, %v2496
        %v2603 = vsel %vm437, 0.0, %v2502
        %v2604 = vsel %vm437, 0.0, %v2508
        %v2605 = vsel %vm437, 0.0, %v2514
        %v2606 = vsel %vm437, 0.0, %v2520
        %v2607 = vsel %vm437, 0.0, %v2526
        %v2608 = vsel %vm437, 0.0, %v2532
        %v2609 = vsel %vm437, 0.0, %v2538
        %v2610 = vsel %vm437, 0.0, %v2544
        %v2611 = vsel %vm437, %v2458, 0.0
        %v2612 = vsel %vm437, %v2464, 0.0
        %v2613 = vsel %vm437, %v2470, 0.0
        %v2614 = vsel %vm437, %v2476, 0.0
        %v2615 = vsel %vm437, %v2482, 0.0
        %v2616 = vsel %vm437, %v2488, 0.0
        %v2617 = vsel %vm437, %v2494, 0.0
        %v2618 = vsel %vm437, %v2500, 0.0
        %v2619 = vsel %vm437, %v2506, 0.0
        %v2620 = vsel %vm437, %v2512, 0.0
        %v2621 = vsel %vm437, %v2518, 0.0
        %v2622 = vsel %vm437, %v2524, 0.0
        %v2623 = vsel %vm437, %v2530, 0.0
        %v2624 = vsel %vm437, %v2536, 0.0
        %v2625 = vsel %vm437, %v2542, 0.0
        %v2626 = vsel %vm437, %v2548, 0.0
        %v2655 = vrot.slane %v2595, 1
        %v2656 = vrot.slane %v2456, 1
        %v2657 = vsel %vm927, %v2655, %v2656
        %v2658 = vrot.slane %v2611, 1
        %v2659 = vsel %vm927, %v2656, %v2658
        %v2660 = vrot.slane %v2596, 1
        %v2661 = vrot.slane %v2462, 1
        %v2662 = vsel %vm927, %v2660, %v2661
        %v2663 = vrot.slane %v2612, 1
        %v2664 = vsel %vm927, %v2661, %v2663
        %v2665 = vrot.slane %v2597, 1
        %v2666 = vrot.slane %v2468, 1
        %v2667 = vsel %vm927, %v2665, %v2666
        %v2668 = vrot.slane %v2613, 1
        %v2669 = vsel %vm927, %v2666, %v2668
        %v2670 = vrot.slane %v2598, 1
        %v2671 = vrot.slane %v2474, 1
        %v2672 = vsel %vm927, %v2670, %v2671
        %v2673 = vrot.slane %v2614, 1
        %v2674 = vsel %vm927, %v2671, %v2673
        %v2675 = vrot.slane %v2599, 1
        %v2676 = vrot.slane %v2480, 1
        %v2677 = vsel %vm927, %v2675, %v2676
        %v2678 = vrot.slane %v2615, 1
        %v2679 = vsel %vm927, %v2676, %v2678
        %v2680 = vrot.slane %v2600, 1
        %v2681 = vrot.slane %v2486, 1
        %v2682 = vsel %vm927, %v2680, %v2681
        %v2683 = vrot.slane %v2616, 1
        %v2684 = vsel %vm927, %v2681, %v2683
        %v2685 = vrot.slane %v2601, 1
        %v2686 = vrot.slane %v2492, 1
        %v2687 = vsel %vm927, %v2685, %v2686
        %v2688 = vrot.slane %v2617, 1
        %v2689 = vsel %vm927, %v2686, %v2688
        %v2690 = vrot.slane %v2602, 1
        %v2691 = vrot.slane %v2498, 1
        %v2692 = vsel %vm927, %v2690, %v2691
        %v2693 = vrot.slane %v2618, 1
        %v2694 = vsel %vm927, %v2691, %v2693
        %v2695 = vrot.slane %v2603, 1
        %v2696 = vrot.slane %v2504, 1
        %v2697 = vsel %vm927, %v2695, %v2696
        %v2698 = vrot.slane %v2619, 1
        %v2699 = vsel %vm927, %v2696, %v2698
        %v2700 = vrot.slane %v2604, 1
        %v2701 = vrot.slane %v2510, 1
        %v2702 = vsel %vm927, %v2700, %v2701
        %v2703 = vrot.slane %v2620, 1
        %v2704 = vsel %vm927, %v2701, %v2703
        %v2705 = vrot.slane %v2605, 1
        %v2706 = vrot.slane %v2516, 1
        %v2707 = vsel %vm927, %v2705, %v2706
        %v2708 = vrot.slane %v2621, 1
        %v2709 = vsel %vm927, %v2706, %v2708
        %v2710 = vrot.slane %v2606, 1
        %v2711 = vrot.slane %v2522, 1
        %v2712 = vsel %vm927, %v2710, %v2711
        %v2713 = vrot.slane %v2622, 1
        %v2714 = vsel %vm927, %v2711, %v2713
        %v2715 = vrot.slane %v2607, 1
        %v2716 = vrot.slane %v2528, 1
        %v2717 = vsel %vm927, %v2715, %v2716
        %v2718 = vrot.slane %v2623, 1
        %v2719 = vsel %vm927, %v2716, %v2718
        %v2720 = vrot.slane %v2608, 1
        %v2721 = vrot.slane %v2534, 1
        %v2722 = vsel %vm927, %v2720, %v2721
        %v2723 = vrot.slane %v2624, 1
        %v2724 = vsel %vm927, %v2721, %v2723
        %v2725 = vrot.slane %v2595, 2
        %v2726 = vrot.slane %v2456, 2
        %v2727 = vsel %vm1005, %v2725, %v2726
        %v2728 = vrot.slane %v2611, 2
        %v2729 = vsel %vm1005, %v2726, %v2728
        %v2730 = vrot.slane %v2596, 2
        %v2731 = vrot.slane %v2462, 2
        %v2732 = vsel %vm1005, %v2730, %v2731
        %v2733 = vrot.slane %v2612, 2
        %v2734 = vsel %vm1005, %v2731, %v2733
        %v2735 = vrot.slane %v2597, 2
        %v2736 = vrot.slane %v2468, 2
        %v2737 = vsel %vm1005, %v2735, %v2736
        %v2738 = vrot.slane %v2613, 2
        %v2739 = vsel %vm1005, %v2736, %v2738
        %v2740 = vrot.slane %v2598, 2
        %v2741 = vrot.slane %v2474, 2
        %v2742 = vsel %vm1005, %v2740, %v2741
        %v2743 = vrot.slane %v2614, 2
        %v2744 = vsel %vm1005, %v2741, %v2743
        %v2745 = vrot.slane %v2599, 2
        %v2746 = vrot.slane %v2480, 2
        %v2747 = vsel %vm1005, %v2745, %v2746
        %v2748 = vrot.slane %v2615, 2
        %v2749 = vsel %vm1005, %v2746, %v2748
        %v2750 = vrot.slane %v2600, 2
        %v2751 = vrot.slane %v2486, 2
        %v2752 = vsel %vm1005, %v2750, %v2751
        %v2753 = vrot.slane %v2616, 2
        %v2754 = vsel %vm1005, %v2751, %v2753
        %v2755 = vrot.slane %v2601, 2
        %v2756 = vrot.slane %v2492, 2
        %v2757 = vsel %vm1005, %v2755, %v2756
        %v2758 = vrot.slane %v2617, 2
        %v2759 = vsel %vm1005, %v2756, %v2758
        %v2760 = vrot.slane %v2602, 2
        %v2761 = vrot.slane %v2498, 2
        %v2762 = vsel %vm1005, %v2760, %v2761
        %v2763 = vrot.slane %v2618, 2
        %v2764 = vsel %vm1005, %v2761, %v2763
        %v2765 = vrot.slane %v2603, 2
        %v2766 = vrot.slane %v2504, 2
        %v2767 = vsel %vm1005, %v2765, %v2766
        %v2768 = vrot.slane %v2619, 2
        %v2769 = vsel %vm1005, %v2766, %v2768
        %v2770 = vrot.slane %v2604, 2
        %v2771 = vrot.slane %v2510, 2
        %v2772 = vsel %vm1005, %v2770, %v2771
        %v2773 = vrot.slane %v2620, 2
        %v2774 = vsel %vm1005, %v2771, %v2773
        %v2775 = vrot.slane %v2605, 2
        %v2776 = vrot.slane %v2516, 2
        %v2777 = vsel %vm1005, %v2775, %v2776
        %v2778 = vrot.slane %v2621, 2
        %v2779 = vsel %vm1005, %v2776, %v2778
        %v2780 = vrot.slane %v2606, 2
        %v2781 = vrot.slane %v2522, 2
        %v2782 = vsel %vm1005, %v2780, %v2781
        %v2783 = vrot.slane %v2622, 2
        %v2784 = vsel %vm1005, %v2781, %v2783
        %v2785 = vrot.slane %v2607, 2
        %v2786 = vrot.slane %v2528, 2
        %v2787 = vsel %vm1005, %v2785, %v2786
        %v2788 = vrot.slane %v2623, 2
        %v2789 = vsel %vm1005, %v2786, %v2788
        %v2790 = vrot.slane %v2608, 2
        %v2791 = vrot.slane %v2534, 2
        %v2792 = vsel %vm1005, %v2790, %v2791
        %v2793 = vrot.slane %v2624, 2
        %v2794 = vsel %vm1005, %v2791, %v2793
        %vm2795 = vcmask 1044480
        %v2796 = vrot.slane 0.0, 3
        %v2797 = vsel %vm2795, %v2796, %v2796
        %v2798 = vrot.slane %v2595, 3
        %v2799 = vrot.slane %v2456, 3
        %v2800 = vsel %vm2795, %v2798, %v2799
        %v2801 = vrot.slane %v2611, 3
        %v2802 = vsel %vm2795, %v2799, %v2801
        %v2803 = vrot.slane %v2596, 3
        %v2804 = vrot.slane %v2462, 3
        %v2805 = vsel %vm2795, %v2803, %v2804
        %v2806 = vrot.slane %v2612, 3
        %v2807 = vsel %vm2795, %v2804, %v2806
        %v2808 = vrot.slane %v2597, 3
        %v2809 = vrot.slane %v2468, 3
        %v2810 = vsel %vm2795, %v2808, %v2809
        %v2811 = vrot.slane %v2613, 3
        %v2812 = vsel %vm2795, %v2809, %v2811
        %v2813 = vrot.slane %v2598, 3
        %v2814 = vrot.slane %v2474, 3
        %v2815 = vsel %vm2795, %v2813, %v2814
        %v2816 = vrot.slane %v2614, 3
        %v2817 = vsel %vm2795, %v2814, %v2816
        %v2818 = vrot.slane %v2599, 3
        %v2819 = vrot.slane %v2480, 3
        %v2820 = vsel %vm2795, %v2818, %v2819
        %v2821 = vrot.slane %v2615, 3
        %v2822 = vsel %vm2795, %v2819, %v2821
        %v2823 = vrot.slane %v2600, 3
        %v2824 = vrot.slane %v2486, 3
        %v2825 = vsel %vm2795, %v2823, %v2824
        %v2826 = vrot.slane %v2616, 3
        %v2827 = vsel %vm2795, %v2824, %v2826
        %v2828 = vrot.slane %v2601, 3
        %v2829 = vrot.slane %v2492, 3
        %v2830 = vsel %vm2795, %v2828, %v2829
        %v2831 = vrot.slane %v2617, 3
        %v2832 = vsel %vm2795, %v2829, %v2831
        %v2833 = vrot.slane %v2602, 3
        %v2834 = vrot.slane %v2498, 3
        %v2835 = vsel %vm2795, %v2833, %v2834
        %v2836 = vrot.slane %v2618, 3
        %v2837 = vsel %vm2795, %v2834, %v2836
        %v2838 = vrot.slane %v2603, 3
        %v2839 = vrot.slane %v2504, 3
        %v2840 = vsel %vm2795, %v2838, %v2839
        %v2841 = vrot.slane %v2619, 3
        %v2842 = vsel %vm2795, %v2839, %v2841
        %v2843 = vrot.slane %v2604, 3
        %v2844 = vrot.slane %v2510, 3
        %v2845 = vsel %vm2795, %v2843, %v2844
        %v2846 = vrot.slane %v2620, 3
        %v2847 = vsel %vm2795, %v2844, %v2846
        %v2848 = vrot.slane %v2605, 3
        %v2849 = vrot.slane %v2516, 3
        %v2850 = vsel %vm2795, %v2848, %v2849
        %v2851 = vrot.slane %v2621, 3
        %v2852 = vsel %vm2795, %v2849, %v2851
        %v2853 = vrot.slane %v2606, 3
        %v2854 = vrot.slane %v2522, 3
        %v2855 = vsel %vm2795, %v2853, %v2854
        %v2856 = vrot.slane %v2622, 3
        %v2857 = vsel %vm2795, %v2854, %v2856
        %v2858 = vrot.slane %v2607, 3
        %v2859 = vrot.slane %v2528, 3
        %v2860 = vsel %vm2795, %v2858, %v2859
        %v2861 = vrot.slane %v2623, 3
        %v2862 = vsel %vm2795, %v2859, %v2861
        %v2863 = vrot.slane %v2608, 3
        %v2864 = vrot.slane %v2534, 3
        %v2865 = vsel %vm2795, %v2863, %v2864
        %v2866 = vrot.slane %v2624, 3
        %v2867 = vsel %vm2795, %v2864, %v2866
        %vm2868 = vcmask 1043456
        %v2869 = vrot.slane 0.0, 4
        %v2870 = vsel %vm2868, %v2869, %v2869
        %v2871 = vrot.slane %v2595, 4
        %v2872 = vrot.slane %v2456, 4
        %v2873 = vsel %vm2868, %v2871, %v2872
        %v2874 = vrot.slane %v2611, 4
        %v2875 = vsel %vm2868, %v2872, %v2874
        %v2876 = vrot.slane %v2596, 4
        %v2877 = vrot.slane %v2462, 4
        %v2878 = vsel %vm2868, %v2876, %v2877
        %v2879 = vrot.slane %v2612, 4
        %v2880 = vsel %vm2868, %v2877, %v2879
        %v2881 = vrot.slane %v2597, 4
        %v2882 = vrot.slane %v2468, 4
        %v2883 = vsel %vm2868, %v2881, %v2882
        %v2884 = vrot.slane %v2613, 4
        %v2885 = vsel %vm2868, %v2882, %v2884
        %v2886 = vrot.slane %v2598, 4
        %v2887 = vrot.slane %v2474, 4
        %v2888 = vsel %vm2868, %v2886, %v2887
        %v2889 = vrot.slane %v2614, 4
        %v2890 = vsel %vm2868, %v2887, %v2889
        %v2891 = vrot.slane %v2599, 4
        %v2892 = vrot.slane %v2480, 4
        %v2893 = vsel %vm2868, %v2891, %v2892
        %v2894 = vrot.slane %v2615, 4
        %v2895 = vsel %vm2868, %v2892, %v2894
        %v2896 = vrot.slane %v2600, 4
        %v2897 = vrot.slane %v2486, 4
        %v2898 = vsel %vm2868, %v2896, %v2897
        %v2899 = vrot.slane %v2616, 4
        %v2900 = vsel %vm2868, %v2897, %v2899
        %v2901 = vrot.slane %v2601, 4
        %v2902 = vrot.slane %v2492, 4
        %v2903 = vsel %vm2868, %v2901, %v2902
        %v2904 = vrot.slane %v2617, 4
        %v2905 = vsel %vm2868, %v2902, %v2904
        %v2906 = vrot.slane %v2602, 4
        %v2907 = vrot.slane %v2498, 4
        %v2908 = vsel %vm2868, %v2906, %v2907
        %v2909 = vrot.slane %v2618, 4
        %v2910 = vsel %vm2868, %v2907, %v2909
        %v2911 = vrot.slane %v2603, 4
        %v2912 = vrot.slane %v2504, 4
        %v2913 = vsel %vm2868, %v2911, %v2912
        %v2914 = vrot.slane %v2619, 4
        %v2915 = vsel %vm2868, %v2912, %v2914
        %v2916 = vrot.slane %v2604, 4
        %v2917 = vrot.slane %v2510, 4
        %v2918 = vsel %vm2868, %v2916, %v2917
        %v2919 = vrot.slane %v2620, 4
        %v2920 = vsel %vm2868, %v2917, %v2919
        %v2921 = vrot.slane %v2605, 4
        %v2922 = vrot.slane %v2516, 4
        %v2923 = vsel %vm2868, %v2921, %v2922
        %v2924 = vrot.slane %v2621, 4
        %v2925 = vsel %vm2868, %v2922, %v2924
        %v2926 = vrot.slane %v2606, 4
        %v2927 = vrot.slane %v2522, 4
        %v2928 = vsel %vm2868, %v2926, %v2927
        %v2929 = vrot.slane %v2622, 4
        %v2930 = vsel %vm2868, %v2927, %v2929
        %v2931 = vrot.slane %v2607, 4
        %v2932 = vrot.slane %v2528, 4
        %v2933 = vsel %vm2868, %v2931, %v2932
        %v2934 = vrot.slane %v2623, 4
        %v2935 = vsel %vm2868, %v2932, %v2934
        %v2936 = vrot.slane %v2608, 4
        %v2937 = vrot.slane %v2534, 4
        %v2938 = vsel %vm2868, %v2936, %v2937
        %v2939 = vrot.slane %v2624, 4
        %v2940 = vsel %vm2868, %v2937, %v2939
        %v2943 = vrot.slane %v2609, 1
        %v2944 = vrot.slane %v2540, 1
        %v2945 = vsel %vm927, %v2943, %v2944
        %v2946 = vrot.slane %v2625, 1
        %v2947 = vsel %vm927, %v2944, %v2946
        %v2948 = vrot.slane %v2609, 2
        %v2949 = vrot.slane %v2540, 2
        %v2950 = vsel %vm1005, %v2948, %v2949
        %v2951 = vrot.slane %v2625, 2
        %v2952 = vsel %vm1005, %v2949, %v2951
        %v2953 = vrot.slane %v2609, 3
        %v2954 = vrot.slane %v2540, 3
        %v2955 = vsel %vm2795, %v2953, %v2954
        %v2956 = vrot.slane %v2625, 3
        %v2957 = vsel %vm2795, %v2954, %v2956
        %v2958 = vrot.slane %v2609, 4
        %v2959 = vrot.slane %v2540, 4
        %v2960 = vsel %vm2868, %v2958, %v2959
        %v2961 = vrot.slane %v2625, 4
        %v2962 = vsel %vm2868, %v2959, %v2961
        %v2965 = vrot.slane %v2610, 1
        %v2966 = vrot.slane %v2546, 1
        %v2967 = vsel %vm927, %v2965, %v2966
        %v2968 = vrot.slane %v2626, 1
        %v2969 = vsel %vm927, %v2966, %v2968
        %v2970 = vrot.slane %v2610, 2
        %v2971 = vrot.slane %v2546, 2
        %v2972 = vsel %vm1005, %v2970, %v2971
        %v2973 = vrot.slane %v2626, 2
        %v2974 = vsel %vm1005, %v2971, %v2973
        %v2975 = vrot.slane %v2610, 3
        %v2976 = vrot.slane %v2546, 3
        %v2977 = vsel %vm2795, %v2975, %v2976
        %v2978 = vrot.slane %v2626, 3
        %v2979 = vsel %vm2795, %v2976, %v2978
        %v2980 = vrot.slane %v2610, 4
        %v2981 = vrot.slane %v2546, 4
        %v2982 = vsel %vm2868, %v2980, %v2981
        %v2983 = vrot.slane %v2626, 4
        %v2984 = vsel %vm2868, %v2981, %v2983
        %3016 = vrot.lane.b32.xlu0 %v2657, 4
        %v3017 = vpop.permute.xlu0 %3016
        %3018 = vrot.lane.b32.xlu0 %v2659, 4
        %v3019 = vpop.permute.xlu0 %3018
        %3020 = vrot.lane.b32.xlu0 %v2662, 4
        %v3021 = vpop.permute.xlu0 %3020
        %3022 = vrot.lane.b32.xlu0 %v2664, 4
        %v3023 = vpop.permute.xlu0 %3022
        %3024 = vrot.lane.b32.xlu0 %v2667, 4
        %v3025 = vpop.permute.xlu0 %3024
        %3026 = vrot.lane.b32.xlu0 %v2669, 4
        %v3027 = vpop.permute.xlu0 %3026
        %3028 = vrot.lane.b32.xlu0 %v2672, 4
        %v3029 = vpop.permute.xlu0 %3028
        %3030 = vrot.lane.b32.xlu0 %v2674, 4
        %v3031 = vpop.permute.xlu0 %3030
        %3032 = vrot.lane.b32.xlu0 %v2677, 4
        %v3033 = vpop.permute.xlu0 %3032
        %3034 = vrot.lane.b32.xlu0 %v2679, 4
        %v3035 = vpop.permute.xlu0 %3034
        %3036 = vrot.lane.b32.xlu0 %v2682, 4
        %v3037 = vpop.permute.xlu0 %3036
        %3038 = vrot.lane.b32.xlu0 %v2684, 4
        %v3039 = vpop.permute.xlu0 %3038
        %3040 = vrot.lane.b32.xlu0 %v2687, 4
        %v3041 = vpop.permute.xlu0 %3040
        %3042 = vrot.lane.b32.xlu0 %v2689, 4
        %v3043 = vpop.permute.xlu0 %3042
        %3044 = vrot.lane.b32.xlu0 %v2692, 4
        %v3045 = vpop.permute.xlu0 %3044
        %3046 = vrot.lane.b32.xlu0 %v2694, 4
        %v3047 = vpop.permute.xlu0 %3046
        %3048 = vrot.lane.b32.xlu0 %v2697, 4
        %v3049 = vpop.permute.xlu0 %3048
        %3050 = vrot.lane.b32.xlu0 %v2699, 4
        %v3051 = vpop.permute.xlu0 %3050
        %3052 = vrot.lane.b32.xlu0 %v2702, 4
        %v3053 = vpop.permute.xlu0 %3052
        %3054 = vrot.lane.b32.xlu0 %v2704, 4
        %v3055 = vpop.permute.xlu0 %3054
        %3056 = vrot.lane.b32.xlu0 %v2707, 4
        %v3057 = vpop.permute.xlu0 %3056
        %3058 = vrot.lane.b32.xlu0 %v2709, 4
        %v3059 = vpop.permute.xlu0 %3058
        %3060 = vrot.lane.b32.xlu0 %v2712, 4
        %v3061 = vpop.permute.xlu0 %3060
        %3062 = vrot.lane.b32.xlu0 %v2714, 4
        %v3063 = vpop.permute.xlu0 %3062
        %3064 = vrot.lane.b32.xlu0 %v2717, 4
        %v3065 = vpop.permute.xlu0 %3064
        %3066 = vrot.lane.b32.xlu0 %v2719, 4
        %v3067 = vpop.permute.xlu0 %3066
        %3068 = vrot.lane.b32.xlu0 %v2722, 4
        %v3069 = vpop.permute.xlu0 %3068
        %3070 = vrot.lane.b32.xlu0 %v2724, 4
        %v3071 = vpop.permute.xlu0 %3070
        %3100 = vrot.lane.b32.xlu0 %v2727, 8
        %v3101 = vpop.permute.xlu0 %3100
        %3102 = vrot.lane.b32.xlu0 %v2729, 8
        %v3103 = vpop.permute.xlu0 %3102
        %3104 = vrot.lane.b32.xlu0 %v2732, 8
        %v3105 = vpop.permute.xlu0 %3104
        %3106 = vrot.lane.b32.xlu0 %v2734, 8
        %v3107 = vpop.permute.xlu0 %3106
        %3108 = vrot.lane.b32.xlu0 %v2737, 8
        %v3109 = vpop.permute.xlu0 %3108
        %3110 = vrot.lane.b32.xlu0 %v2739, 8
        %v3111 = vpop.permute.xlu0 %3110
        %3112 = vrot.lane.b32.xlu0 %v2742, 8
        %v3113 = vpop.permute.xlu0 %3112
        %3114 = vrot.lane.b32.xlu0 %v2744, 8
        %v3115 = vpop.permute.xlu0 %3114
        %3116 = vrot.lane.b32.xlu0 %v2747, 8
        %v3117 = vpop.permute.xlu0 %3116
        %3118 = vrot.lane.b32.xlu0 %v2749, 8
        %v3119 = vpop.permute.xlu0 %3118
        %3120 = vrot.lane.b32.xlu0 %v2752, 8
        %v3121 = vpop.permute.xlu0 %3120
        %3122 = vrot.lane.b32.xlu0 %v2754, 8
        %v3123 = vpop.permute.xlu0 %3122
        %3124 = vrot.lane.b32.xlu0 %v2757, 8
        %v3125 = vpop.permute.xlu0 %3124
        %3126 = vrot.lane.b32.xlu0 %v2759, 8
        %v3127 = vpop.permute.xlu0 %3126
        %3128 = vrot.lane.b32.xlu0 %v2762, 8
        %v3129 = vpop.permute.xlu0 %3128
        %3130 = vrot.lane.b32.xlu0 %v2764, 8
        %v3131 = vpop.permute.xlu0 %3130
        %3132 = vrot.lane.b32.xlu0 %v2767, 8
        %v3133 = vpop.permute.xlu0 %3132
        %3134 = vrot.lane.b32.xlu0 %v2769, 8
        %v3135 = vpop.permute.xlu0 %3134
        %3136 = vrot.lane.b32.xlu0 %v2772, 8
        %v3137 = vpop.permute.xlu0 %3136
        %3138 = vrot.lane.b32.xlu0 %v2774, 8
        %v3139 = vpop.permute.xlu0 %3138
        %3140 = vrot.lane.b32.xlu0 %v2777, 8
        %v3141 = vpop.permute.xlu0 %3140
        %3142 = vrot.lane.b32.xlu0 %v2779, 8
        %v3143 = vpop.permute.xlu0 %3142
        %3144 = vrot.lane.b32.xlu0 %v2782, 8
        %v3145 = vpop.permute.xlu0 %3144
        %3146 = vrot.lane.b32.xlu0 %v2784, 8
        %v3147 = vpop.permute.xlu0 %3146
        %3148 = vrot.lane.b32.xlu0 %v2787, 8
        %v3149 = vpop.permute.xlu0 %3148
        %3150 = vrot.lane.b32.xlu0 %v2789, 8
        %v3151 = vpop.permute.xlu0 %3150
        %3152 = vrot.lane.b32.xlu0 %v2792, 8
        %v3153 = vpop.permute.xlu0 %3152
        %3154 = vrot.lane.b32.xlu0 %v2794, 8
        %v3155 = vpop.permute.xlu0 %3154
        %3184 = vrot.lane.b32.xlu0 %v2797, 12
        %v3185 = vpop.permute.xlu0 %3184
        %3186 = vrot.lane.b32.xlu0 %v2800, 12
        %v3187 = vpop.permute.xlu0 %3186
        %3188 = vrot.lane.b32.xlu0 %v2802, 12
        %v3189 = vpop.permute.xlu0 %3188
        %3190 = vrot.lane.b32.xlu0 %v2805, 12
        %v3191 = vpop.permute.xlu0 %3190
        %3192 = vrot.lane.b32.xlu0 %v2807, 12
        %v3193 = vpop.permute.xlu0 %3192
        %3194 = vrot.lane.b32.xlu0 %v2810, 12
        %v3195 = vpop.permute.xlu0 %3194
        %3196 = vrot.lane.b32.xlu0 %v2812, 12
        %v3197 = vpop.permute.xlu0 %3196
        %3198 = vrot.lane.b32.xlu0 %v2815, 12
        %v3199 = vpop.permute.xlu0 %3198
        %3200 = vrot.lane.b32.xlu0 %v2817, 12
        %v3201 = vpop.permute.xlu0 %3200
        %3202 = vrot.lane.b32.xlu0 %v2820, 12
        %v3203 = vpop.permute.xlu0 %3202
        %3204 = vrot.lane.b32.xlu0 %v2822, 12
        %v3205 = vpop.permute.xlu0 %3204
        %3206 = vrot.lane.b32.xlu0 %v2825, 12
        %v3207 = vpop.permute.xlu0 %3206
        %3208 = vrot.lane.b32.xlu0 %v2827, 12
        %v3209 = vpop.permute.xlu0 %3208
        %3210 = vrot.lane.b32.xlu0 %v2830, 12
        %v3211 = vpop.permute.xlu0 %3210
        %3212 = vrot.lane.b32.xlu0 %v2832, 12
        %v3213 = vpop.permute.xlu0 %3212
        %3214 = vrot.lane.b32.xlu0 %v2835, 12
        %v3215 = vpop.permute.xlu0 %3214
        %3216 = vrot.lane.b32.xlu0 %v2837, 12
        %v3217 = vpop.permute.xlu0 %3216
        %3218 = vrot.lane.b32.xlu0 %v2840, 12
        %v3219 = vpop.permute.xlu0 %3218
        %3220 = vrot.lane.b32.xlu0 %v2842, 12
        %v3221 = vpop.permute.xlu0 %3220
        %3222 = vrot.lane.b32.xlu0 %v2845, 12
        %v3223 = vpop.permute.xlu0 %3222
        %3224 = vrot.lane.b32.xlu0 %v2847, 12
        %v3225 = vpop.permute.xlu0 %3224
        %3226 = vrot.lane.b32.xlu0 %v2850, 12
        %v3227 = vpop.permute.xlu0 %3226
        %3228 = vrot.lane.b32.xlu0 %v2852, 12
        %v3229 = vpop.permute.xlu0 %3228
        %3230 = vrot.lane.b32.xlu0 %v2855, 12
        %v3231 = vpop.permute.xlu0 %3230
        %3232 = vrot.lane.b32.xlu0 %v2857, 12
        %v3233 = vpop.permute.xlu0 %3232
        %3234 = vrot.lane.b32.xlu0 %v2860, 12
        %v3235 = vpop.permute.xlu0 %3234
        %3236 = vrot.lane.b32.xlu0 %v2862, 12
        %v3237 = vpop.permute.xlu0 %3236
        %3238 = vrot.lane.b32.xlu0 %v2865, 12
        %v3239 = vpop.permute.xlu0 %3238
        %3240 = vrot.lane.b32.xlu0 %v2867, 12
        %v3241 = vpop.permute.xlu0 %3240
        %3271 = vrot.lane.b32.xlu0 %v2870, 16
        %v3272 = vpop.permute.xlu0 %3271
        %3273 = vrot.lane.b32.xlu0 %v2873, 16
        %v3274 = vpop.permute.xlu0 %3273
        %3275 = vrot.lane.b32.xlu0 %v2875, 16
        %v3276 = vpop.permute.xlu0 %3275
        %3277 = vrot.lane.b32.xlu0 %v2878, 16
        %v3278 = vpop.permute.xlu0 %3277
        %3279 = vrot.lane.b32.xlu0 %v2880, 16
        %v3280 = vpop.permute.xlu0 %3279
        %3281 = vrot.lane.b32.xlu0 %v2883, 16
        %v3282 = vpop.permute.xlu0 %3281
        %3283 = vrot.lane.b32.xlu0 %v2885, 16
        %v3284 = vpop.permute.xlu0 %3283
        %3285 = vrot.lane.b32.xlu0 %v2888, 16
        %v3286 = vpop.permute.xlu0 %3285
        %3287 = vrot.lane.b32.xlu0 %v2890, 16
        %v3288 = vpop.permute.xlu0 %3287
        %3289 = vrot.lane.b32.xlu0 %v2893, 16
        %v3290 = vpop.permute.xlu0 %3289
        %3291 = vrot.lane.b32.xlu0 %v2895, 16
        %v3292 = vpop.permute.xlu0 %3291
        %3293 = vrot.lane.b32.xlu0 %v2898, 16
        %v3294 = vpop.permute.xlu0 %3293
        %3295 = vrot.lane.b32.xlu0 %v2900, 16
        %v3296 = vpop.permute.xlu0 %3295
        %3297 = vrot.lane.b32.xlu0 %v2903, 16
        %v3298 = vpop.permute.xlu0 %3297
        %3299 = vrot.lane.b32.xlu0 %v2905, 16
        %v3300 = vpop.permute.xlu0 %3299
        %3301 = vrot.lane.b32.xlu0 %v2908, 16
        %v3302 = vpop.permute.xlu0 %3301
        %3303 = vrot.lane.b32.xlu0 %v2910, 16
        %v3304 = vpop.permute.xlu0 %3303
        %3305 = vrot.lane.b32.xlu0 %v2913, 16
        %v3306 = vpop.permute.xlu0 %3305
        %3307 = vrot.lane.b32.xlu0 %v2915, 16
        %v3308 = vpop.permute.xlu0 %3307
        %3309 = vrot.lane.b32.xlu0 %v2918, 16
        %v3310 = vpop.permute.xlu0 %3309
        %3311 = vrot.lane.b32.xlu0 %v2920, 16
        %v3312 = vpop.permute.xlu0 %3311
        %3313 = vrot.lane.b32.xlu0 %v2923, 16
        %v3314 = vpop.permute.xlu0 %3313
        %3315 = vrot.lane.b32.xlu0 %v2925, 16
        %v3316 = vpop.permute.xlu0 %3315
        %3317 = vrot.lane.b32.xlu0 %v2928, 16
        %v3318 = vpop.permute.xlu0 %3317
        %3319 = vrot.lane.b32.xlu0 %v2930, 16
        %v3320 = vpop.permute.xlu0 %3319
        %3321 = vrot.lane.b32.xlu0 %v2933, 16
        %v3322 = vpop.permute.xlu0 %3321
        %3323 = vrot.lane.b32.xlu0 %v2935, 16
        %v3324 = vpop.permute.xlu0 %3323
        %3325 = vrot.lane.b32.xlu0 %v2938, 16
        %v3326 = vpop.permute.xlu0 %3325
        %3327 = vrot.lane.b32.xlu0 %v2940, 16
        %v3328 = vpop.permute.xlu0 %3327
        %3358 = vrot.lane.b32.xlu0 0.0, 20
        %v3359 = vpop.permute.xlu0 %3358
        %3360 = vrot.lane.b32.xlu0 %v2595, 20
        %v3361 = vpop.permute.xlu0 %3360
        %3362 = vrot.lane.b32.xlu0 %v2456, 20
        %v3363 = vpop.permute.xlu0 %3362
        %3364 = vrot.lane.b32.xlu0 %v2596, 20
        %v3365 = vpop.permute.xlu0 %3364
        %3366 = vrot.lane.b32.xlu0 %v2462, 20
        %v3367 = vpop.permute.xlu0 %3366
        %3368 = vrot.lane.b32.xlu0 %v2597, 20
        %v3369 = vpop.permute.xlu0 %3368
        %3370 = vrot.lane.b32.xlu0 %v2468, 20
        %v3371 = vpop.permute.xlu0 %3370
        %3372 = vrot.lane.b32.xlu0 %v2598, 20
        %v3373 = vpop.permute.xlu0 %3372
        %3374 = vrot.lane.b32.xlu0 %v2474, 20
        %v3375 = vpop.permute.xlu0 %3374
        %3376 = vrot.lane.b32.xlu0 %v2599, 20
        %v3377 = vpop.permute.xlu0 %3376
        %3378 = vrot.lane.b32.xlu0 %v2480, 20
        %v3379 = vpop.permute.xlu0 %3378
        %3380 = vrot.lane.b32.xlu0 %v2600, 20
        %v3381 = vpop.permute.xlu0 %3380
        %3382 = vrot.lane.b32.xlu0 %v2486, 20
        %v3383 = vpop.permute.xlu0 %3382
        %3384 = vrot.lane.b32.xlu0 %v2601, 20
        %v3385 = vpop.permute.xlu0 %3384
        %3386 = vrot.lane.b32.xlu0 %v2492, 20
        %v3387 = vpop.permute.xlu0 %3386
        %3388 = vrot.lane.b32.xlu0 %v2602, 20
        %v3389 = vpop.permute.xlu0 %3388
        %3390 = vrot.lane.b32.xlu0 %v2498, 20
        %v3391 = vpop.permute.xlu0 %3390
        %3392 = vrot.lane.b32.xlu0 %v2603, 20
        %v3393 = vpop.permute.xlu0 %3392
        %3394 = vrot.lane.b32.xlu0 %v2504, 20
        %v3395 = vpop.permute.xlu0 %3394
        %3396 = vrot.lane.b32.xlu0 %v2604, 20
        %v3397 = vpop.permute.xlu0 %3396
        %3398 = vrot.lane.b32.xlu0 %v2510, 20
        %v3399 = vpop.permute.xlu0 %3398
        %3400 = vrot.lane.b32.xlu0 %v2605, 20
        %v3401 = vpop.permute.xlu0 %3400
        %3402 = vrot.lane.b32.xlu0 %v2516, 20
        %v3403 = vpop.permute.xlu0 %3402
        %3404 = vrot.lane.b32.xlu0 %v2606, 20
        %v3405 = vpop.permute.xlu0 %3404
        %3406 = vrot.lane.b32.xlu0 %v2522, 20
        %v3407 = vpop.permute.xlu0 %3406
        %3408 = vrot.lane.b32.xlu0 %v2607, 20
        %v3409 = vpop.permute.xlu0 %3408
        %3410 = vrot.lane.b32.xlu0 %v2528, 20
        %v3411 = vpop.permute.xlu0 %3410
        %3412 = vrot.lane.b32.xlu0 %v2608, 20
        %v3413 = vpop.permute.xlu0 %3412
        %3414 = vrot.lane.b32.xlu0 %v2534, 20
        %v3415 = vpop.permute.xlu0 %3414
        %3416 = vrot.lane.b32.xlu0 %v2609, 20
        %v3417 = vpop.permute.xlu0 %3416
        %3418 = vrot.lane.b32.xlu0 %v2540, 20
        %v3419 = vpop.permute.xlu0 %3418
        %3451 = vrot.lane.b32.xlu0 %v929, 24
        %v3452 = vpop.permute.xlu0 %3451
        %3453 = vrot.lane.b32.xlu0 %v2657, 24
        %v3454 = vpop.permute.xlu0 %3453
        %3455 = vrot.lane.b32.xlu0 %v2659, 24
        %v3456 = vpop.permute.xlu0 %3455
        %3457 = vrot.lane.b32.xlu0 %v2662, 24
        %v3458 = vpop.permute.xlu0 %3457
        %3459 = vrot.lane.b32.xlu0 %v2664, 24
        %v3460 = vpop.permute.xlu0 %3459
        %3461 = vrot.lane.b32.xlu0 %v2667, 24
        %v3462 = vpop.permute.xlu0 %3461
        %3463 = vrot.lane.b32.xlu0 %v2669, 24
        %v3464 = vpop.permute.xlu0 %3463
        %3465 = vrot.lane.b32.xlu0 %v2672, 24
        %v3466 = vpop.permute.xlu0 %3465
        %3467 = vrot.lane.b32.xlu0 %v2674, 24
        %v3468 = vpop.permute.xlu0 %3467
        %3469 = vrot.lane.b32.xlu0 %v2677, 24
        %v3470 = vpop.permute.xlu0 %3469
        %3471 = vrot.lane.b32.xlu0 %v2679, 24
        %v3472 = vpop.permute.xlu0 %3471
        %3473 = vrot.lane.b32.xlu0 %v2682, 24
        %v3474 = vpop.permute.xlu0 %3473
        %3475 = vrot.lane.b32.xlu0 %v2684, 24
        %v3476 = vpop.permute.xlu0 %3475
        %3477 = vrot.lane.b32.xlu0 %v2687, 24
        %v3478 = vpop.permute.xlu0 %3477
        %3479 = vrot.lane.b32.xlu0 %v2689, 24
        %v3480 = vpop.permute.xlu0 %3479
        %3481 = vrot.lane.b32.xlu0 %v2692, 24
        %v3482 = vpop.permute.xlu0 %3481
        %3483 = vrot.lane.b32.xlu0 %v2694, 24
        %v3484 = vpop.permute.xlu0 %3483
        %3485 = vrot.lane.b32.xlu0 %v2697, 24
        %v3486 = vpop.permute.xlu0 %3485
        %3487 = vrot.lane.b32.xlu0 %v2699, 24
        %v3488 = vpop.permute.xlu0 %3487
        %3489 = vrot.lane.b32.xlu0 %v2702, 24
        %v3490 = vpop.permute.xlu0 %3489
        %3491 = vrot.lane.b32.xlu0 %v2704, 24
        %v3492 = vpop.permute.xlu0 %3491
        %3493 = vrot.lane.b32.xlu0 %v2707, 24
        %v3494 = vpop.permute.xlu0 %3493
        %3495 = vrot.lane.b32.xlu0 %v2709, 24
        %v3496 = vpop.permute.xlu0 %3495
        %3497 = vrot.lane.b32.xlu0 %v2712, 24
        %v3498 = vpop.permute.xlu0 %3497
        %3499 = vrot.lane.b32.xlu0 %v2714, 24
        %v3500 = vpop.permute.xlu0 %3499
        %3501 = vrot.lane.b32.xlu0 %v2717, 24
        %v3502 = vpop.permute.xlu0 %3501
        %3503 = vrot.lane.b32.xlu0 %v2719, 24
        %v3504 = vpop.permute.xlu0 %3503
        %3505 = vrot.lane.b32.xlu0 %v2722, 24
        %v3506 = vpop.permute.xlu0 %3505
        %3507 = vrot.lane.b32.xlu0 %v2724, 24
        %v3508 = vpop.permute.xlu0 %3507
        %3509 = vrot.lane.b32.xlu0 %v2945, 24
        %v3510 = vpop.permute.xlu0 %3509
        %3511 = vrot.lane.b32.xlu0 %v2947, 24
        %v3512 = vpop.permute.xlu0 %3511
        %3544 = vrot.lane.b32.xlu0 %v1007, 28
        %v3545 = vpop.permute.xlu0 %3544
        %3546 = vrot.lane.b32.xlu0 %v2727, 28
        %v3547 = vpop.permute.xlu0 %3546
        %3548 = vrot.lane.b32.xlu0 %v2729, 28
        %v3549 = vpop.permute.xlu0 %3548
        %3550 = vrot.lane.b32.xlu0 %v2732, 28
        %v3551 = vpop.permute.xlu0 %3550
        %3552 = vrot.lane.b32.xlu0 %v2734, 28
        %v3553 = vpop.permute.xlu0 %3552
        %3554 = vrot.lane.b32.xlu0 %v2737, 28
        %v3555 = vpop.permute.xlu0 %3554
        %3556 = vrot.lane.b32.xlu0 %v2739, 28
        %v3557 = vpop.permute.xlu0 %3556
        %3558 = vrot.lane.b32.xlu0 %v2742, 28
        %v3559 = vpop.permute.xlu0 %3558
        %3560 = vrot.lane.b32.xlu0 %v2744, 28
        %v3561 = vpop.permute.xlu0 %3560
        %3562 = vrot.lane.b32.xlu0 %v2747, 28
        %v3563 = vpop.permute.xlu0 %3562
        %3564 = vrot.lane.b32.xlu0 %v2749, 28
        %v3565 = vpop.permute.xlu0 %3564
        %3566 = vrot.lane.b32.xlu0 %v2752, 28
        %v3567 = vpop.permute.xlu0 %3566
        %3568 = vrot.lane.b32.xlu0 %v2754, 28
        %v3569 = vpop.permute.xlu0 %3568
        %3570 = vrot.lane.b32.xlu0 %v2757, 28
        %v3571 = vpop.permute.xlu0 %3570
        %3572 = vrot.lane.b32.xlu0 %v2759, 28
        %v3573 = vpop.permute.xlu0 %3572
        %3574 = vrot.lane.b32.xlu0 %v2762, 28
        %v3575 = vpop.permute.xlu0 %3574
        %3576 = vrot.lane.b32.xlu0 %v2764, 28
        %v3577 = vpop.permute.xlu0 %3576
        %3578 = vrot.lane.b32.xlu0 %v2767, 28
        %v3579 = vpop.permute.xlu0 %3578
        %3580 = vrot.lane.b32.xlu0 %v2769, 28
        %v3581 = vpop.permute.xlu0 %3580
        %3582 = vrot.lane.b32.xlu0 %v2772, 28
        %v3583 = vpop.permute.xlu0 %3582
        %3584 = vrot.lane.b32.xlu0 %v2774, 28
        %v3585 = vpop.permute.xlu0 %3584
        %3586 = vrot.lane.b32.xlu0 %v2777, 28
        %v3587 = vpop.permute.xlu0 %3586
        %3588 = vrot.lane.b32.xlu0 %v2779, 28
        %v3589 = vpop.permute.xlu0 %3588
        %3590 = vrot.lane.b32.xlu0 %v2782, 28
        %v3591 = vpop.permute.xlu0 %3590
        %3592 = vrot.lane.b32.xlu0 %v2784, 28
        %v3593 = vpop.permute.xlu0 %3592
        %3594 = vrot.lane.b32.xlu0 %v2787, 28
        %v3595 = vpop.permute.xlu0 %3594
        %3596 = vrot.lane.b32.xlu0 %v2789, 28
        %v3597 = vpop.permute.xlu0 %3596
        %3598 = vrot.lane.b32.xlu0 %v2792, 28
        %v3599 = vpop.permute.xlu0 %3598
        %3600 = vrot.lane.b32.xlu0 %v2794, 28
        %v3601 = vpop.permute.xlu0 %3600
        %3602 = vrot.lane.b32.xlu0 %v2950, 28
        %v3603 = vpop.permute.xlu0 %3602
        %3604 = vrot.lane.b32.xlu0 %v2952, 28
        %v3605 = vpop.permute.xlu0 %3604
        %3637 = vrot.lane.b32.xlu0 %v2797, 32
        %v3638 = vpop.permute.xlu0 %3637
        %3639 = vrot.lane.b32.xlu0 %v2800, 32
        %v3640 = vpop.permute.xlu0 %3639
        %3641 = vrot.lane.b32.xlu0 %v2802, 32
        %v3642 = vpop.permute.xlu0 %3641
        %3643 = vrot.lane.b32.xlu0 %v2805, 32
        %v3644 = vpop.permute.xlu0 %3643
        %3645 = vrot.lane.b32.xlu0 %v2807, 32
        %v3646 = vpop.permute.xlu0 %3645
        %3647 = vrot.lane.b32.xlu0 %v2810, 32
        %v3648 = vpop.permute.xlu0 %3647
        %3649 = vrot.lane.b32.xlu0 %v2812, 32
        %v3650 = vpop.permute.xlu0 %3649
        %3651 = vrot.lane.b32.xlu0 %v2815, 32
        %v3652 = vpop.permute.xlu0 %3651
        %3653 = vrot.lane.b32.xlu0 %v2817, 32
        %v3654 = vpop.permute.xlu0 %3653
        %3655 = vrot.lane.b32.xlu0 %v2820, 32
        %v3656 = vpop.permute.xlu0 %3655
        %3657 = vrot.lane.b32.xlu0 %v2822, 32
        %v3658 = vpop.permute.xlu0 %3657
        %3659 = vrot.lane.b32.xlu0 %v2825, 32
        %v3660 = vpop.permute.xlu0 %3659
        %3661 = vrot.lane.b32.xlu0 %v2827, 32
        %v3662 = vpop.permute.xlu0 %3661
        %3663 = vrot.lane.b32.xlu0 %v2830, 32
        %v3664 = vpop.permute.xlu0 %3663
        %3665 = vrot.lane.b32.xlu0 %v2832, 32
        %v3666 = vpop.permute.xlu0 %3665
        %3667 = vrot.lane.b32.xlu0 %v2835, 32
        %v3668 = vpop.permute.xlu0 %3667
        %3669 = vrot.lane.b32.xlu0 %v2837, 32
        %v3670 = vpop.permute.xlu0 %3669
        %3671 = vrot.lane.b32.xlu0 %v2840, 32
        %v3672 = vpop.permute.xlu0 %3671
        %3673 = vrot.lane.b32.xlu0 %v2842, 32
        %v3674 = vpop.permute.xlu0 %3673
        %3675 = vrot.lane.b32.xlu0 %v2845, 32
        %v3676 = vpop.permute.xlu0 %3675
        %3677 = vrot.lane.b32.xlu0 %v2847, 32
        %v3678 = vpop.permute.xlu0 %3677
        %3679 = vrot.lane.b32.xlu0 %v2850, 32
        %v3680 = vpop.permute.xlu0 %3679
        %3681 = vrot.lane.b32.xlu0 %v2852, 32
        %v3682 = vpop.permute.xlu0 %3681
        %3683 = vrot.lane.b32.xlu0 %v2855, 32
        %v3684 = vpop.permute.xlu0 %3683
        %3685 = vrot.lane.b32.xlu0 %v2857, 32
        %v3686 = vpop.permute.xlu0 %3685
        %3687 = vrot.lane.b32.xlu0 %v2860, 32
        %v3688 = vpop.permute.xlu0 %3687
        %3689 = vrot.lane.b32.xlu0 %v2862, 32
        %v3690 = vpop.permute.xlu0 %3689
        %3691 = vrot.lane.b32.xlu0 %v2865, 32
        %v3692 = vpop.permute.xlu0 %3691
        %3693 = vrot.lane.b32.xlu0 %v2867, 32
        %v3694 = vpop.permute.xlu0 %3693
        %3695 = vrot.lane.b32.xlu0 %v2955, 32
        %v3696 = vpop.permute.xlu0 %3695
        %3697 = vrot.lane.b32.xlu0 %v2957, 32
        %v3698 = vpop.permute.xlu0 %3697
        %3730 = vrot.lane.b32.xlu0 %v2870, 36
        %v3731 = vpop.permute.xlu0 %3730
        %3732 = vrot.lane.b32.xlu0 %v2873, 36
        %v3733 = vpop.permute.xlu0 %3732
        %3734 = vrot.lane.b32.xlu0 %v2875, 36
        %v3735 = vpop.permute.xlu0 %3734
        %3736 = vrot.lane.b32.xlu0 %v2878, 36
        %v3737 = vpop.permute.xlu0 %3736
        %3738 = vrot.lane.b32.xlu0 %v2880, 36
        %v3739 = vpop.permute.xlu0 %3738
        %3740 = vrot.lane.b32.xlu0 %v2883, 36
        %v3741 = vpop.permute.xlu0 %3740
        %3742 = vrot.lane.b32.xlu0 %v2885, 36
        %v3743 = vpop.permute.xlu0 %3742
        %3744 = vrot.lane.b32.xlu0 %v2888, 36
        %v3745 = vpop.permute.xlu0 %3744
        %3746 = vrot.lane.b32.xlu0 %v2890, 36
        %v3747 = vpop.permute.xlu0 %3746
        %3748 = vrot.lane.b32.xlu0 %v2893, 36
        %v3749 = vpop.permute.xlu0 %3748
        %3750 = vrot.lane.b32.xlu0 %v2895, 36
        %v3751 = vpop.permute.xlu0 %3750
        %3752 = vrot.lane.b32.xlu0 %v2898, 36
        %v3753 = vpop.permute.xlu0 %3752
        %3754 = vrot.lane.b32.xlu0 %v2900, 36
        %v3755 = vpop.permute.xlu0 %3754
        %3756 = vrot.lane.b32.xlu0 %v2903, 36
        %v3757 = vpop.permute.xlu0 %3756
        %3758 = vrot.lane.b32.xlu0 %v2905, 36
        %v3759 = vpop.permute.xlu0 %3758
        %3760 = vrot.lane.b32.xlu0 %v2908, 36
        %v3761 = vpop.permute.xlu0 %3760
        %3762 = vrot.lane.b32.xlu0 %v2910, 36
        %v3763 = vpop.permute.xlu0 %3762
        %3764 = vrot.lane.b32.xlu0 %v2913, 36
        %v3765 = vpop.permute.xlu0 %3764
        %3766 = vrot.lane.b32.xlu0 %v2915, 36
        %v3767 = vpop.permute.xlu0 %3766
        %3768 = vrot.lane.b32.xlu0 %v2918, 36
        %v3769 = vpop.permute.xlu0 %3768
        %3770 = vrot.lane.b32.xlu0 %v2920, 36
        %v3771 = vpop.permute.xlu0 %3770
        %3772 = vrot.lane.b32.xlu0 %v2923, 36
        %v3773 = vpop.permute.xlu0 %3772
        %3774 = vrot.lane.b32.xlu0 %v2925, 36
        %v3775 = vpop.permute.xlu0 %3774
        %3776 = vrot.lane.b32.xlu0 %v2928, 36
        %v3777 = vpop.permute.xlu0 %3776
        %3778 = vrot.lane.b32.xlu0 %v2930, 36
        %v3779 = vpop.permute.xlu0 %3778
        %3780 = vrot.lane.b32.xlu0 %v2933, 36
        %v3781 = vpop.permute.xlu0 %3780
        %3782 = vrot.lane.b32.xlu0 %v2935, 36
        %v3783 = vpop.permute.xlu0 %3782
        %3784 = vrot.lane.b32.xlu0 %v2938, 36
        %v3785 = vpop.permute.xlu0 %3784
        %3786 = vrot.lane.b32.xlu0 %v2940, 36
        %v3787 = vpop.permute.xlu0 %3786
        %3788 = vrot.lane.b32.xlu0 %v2960, 36
        %v3789 = vpop.permute.xlu0 %3788
        %3790 = vrot.lane.b32.xlu0 %v2962, 36
        %v3791 = vpop.permute.xlu0 %3790
        %3823 = vrot.lane.b32.xlu0 %v2595, 40
        %v3824 = vpop.permute.xlu0 %3823
        %3825 = vrot.lane.b32.xlu0 %v2456, 40
        %v3826 = vpop.permute.xlu0 %3825
        %3827 = vrot.lane.b32.xlu0 %v2596, 40
        %v3828 = vpop.permute.xlu0 %3827
        %3829 = vrot.lane.b32.xlu0 %v2462, 40
        %v3830 = vpop.permute.xlu0 %3829
        %3831 = vrot.lane.b32.xlu0 %v2597, 40
        %v3832 = vpop.permute.xlu0 %3831
        %3833 = vrot.lane.b32.xlu0 %v2468, 40
        %v3834 = vpop.permute.xlu0 %3833
        %3835 = vrot.lane.b32.xlu0 %v2598, 40
        %v3836 = vpop.permute.xlu0 %3835
        %3837 = vrot.lane.b32.xlu0 %v2474, 40
        %v3838 = vpop.permute.xlu0 %3837
        %3839 = vrot.lane.b32.xlu0 %v2599, 40
        %v3840 = vpop.permute.xlu0 %3839
        %3841 = vrot.lane.b32.xlu0 %v2480, 40
        %v3842 = vpop.permute.xlu0 %3841
        %3843 = vrot.lane.b32.xlu0 %v2600, 40
        %v3844 = vpop.permute.xlu0 %3843
        %3845 = vrot.lane.b32.xlu0 %v2486, 40
        %v3846 = vpop.permute.xlu0 %3845
        %3847 = vrot.lane.b32.xlu0 %v2601, 40
        %v3848 = vpop.permute.xlu0 %3847
        %3849 = vrot.lane.b32.xlu0 %v2492, 40
        %v3850 = vpop.permute.xlu0 %3849
        %3851 = vrot.lane.b32.xlu0 %v2602, 40
        %v3852 = vpop.permute.xlu0 %3851
        %3853 = vrot.lane.b32.xlu0 %v2498, 40
        %v3854 = vpop.permute.xlu0 %3853
        %3855 = vrot.lane.b32.xlu0 %v2603, 40
        %v3856 = vpop.permute.xlu0 %3855
        %3857 = vrot.lane.b32.xlu0 %v2504, 40
        %v3858 = vpop.permute.xlu0 %3857
        %3859 = vrot.lane.b32.xlu0 %v2604, 40
        %v3860 = vpop.permute.xlu0 %3859
        %3861 = vrot.lane.b32.xlu0 %v2510, 40
        %v3862 = vpop.permute.xlu0 %3861
        %3863 = vrot.lane.b32.xlu0 %v2605, 40
        %v3864 = vpop.permute.xlu0 %3863
        %3865 = vrot.lane.b32.xlu0 %v2516, 40
        %v3866 = vpop.permute.xlu0 %3865
        %3867 = vrot.lane.b32.xlu0 %v2606, 40
        %v3868 = vpop.permute.xlu0 %3867
        %3869 = vrot.lane.b32.xlu0 %v2522, 40
        %v3870 = vpop.permute.xlu0 %3869
        %3871 = vrot.lane.b32.xlu0 %v2607, 40
        %v3872 = vpop.permute.xlu0 %3871
        %3873 = vrot.lane.b32.xlu0 %v2528, 40
        %v3874 = vpop.permute.xlu0 %3873
        %3875 = vrot.lane.b32.xlu0 %v2608, 40
        %v3876 = vpop.permute.xlu0 %3875
        %3877 = vrot.lane.b32.xlu0 %v2534, 40
        %v3878 = vpop.permute.xlu0 %3877
        %3879 = vrot.lane.b32.xlu0 %v2609, 40
        %v3880 = vpop.permute.xlu0 %3879
        %3881 = vrot.lane.b32.xlu0 %v2540, 40
        %v3882 = vpop.permute.xlu0 %3881
        %3883 = vrot.lane.b32.xlu0 %v2610, 40
        %v3884 = vpop.permute.xlu0 %3883
        %3885 = vrot.lane.b32.xlu0 %v2546, 40
        %v3886 = vpop.permute.xlu0 %3885
        %3919 = vrot.lane.b32.xlu0 %v2657, 44
        %v3920 = vpop.permute.xlu0 %3919
        %3921 = vrot.lane.b32.xlu0 %v2659, 44
        %v3922 = vpop.permute.xlu0 %3921
        %3923 = vrot.lane.b32.xlu0 %v2662, 44
        %v3924 = vpop.permute.xlu0 %3923
        %3925 = vrot.lane.b32.xlu0 %v2664, 44
        %v3926 = vpop.permute.xlu0 %3925
        %3927 = vrot.lane.b32.xlu0 %v2667, 44
        %v3928 = vpop.permute.xlu0 %3927
        %3929 = vrot.lane.b32.xlu0 %v2669, 44
        %v3930 = vpop.permute.xlu0 %3929
        %3931 = vrot.lane.b32.xlu0 %v2672, 44
        %v3932 = vpop.permute.xlu0 %3931
        %3933 = vrot.lane.b32.xlu0 %v2674, 44
        %v3934 = vpop.permute.xlu0 %3933
        %3935 = vrot.lane.b32.xlu0 %v2677, 44
        %v3936 = vpop.permute.xlu0 %3935
        %3937 = vrot.lane.b32.xlu0 %v2679, 44
        %v3938 = vpop.permute.xlu0 %3937
        %3939 = vrot.lane.b32.xlu0 %v2682, 44
        %v3940 = vpop.permute.xlu0 %3939
        %3941 = vrot.lane.b32.xlu0 %v2684, 44
        %v3942 = vpop.permute.xlu0 %3941
        %3943 = vrot.lane.b32.xlu0 %v2687, 44
        %v3944 = vpop.permute.xlu0 %3943
        %3945 = vrot.lane.b32.xlu0 %v2689, 44
        %v3946 = vpop.permute.xlu0 %3945
        %3947 = vrot.lane.b32.xlu0 %v2692, 44
        %v3948 = vpop.permute.xlu0 %3947
        %3949 = vrot.lane.b32.xlu0 %v2694, 44
        %v3950 = vpop.permute.xlu0 %3949
        %3951 = vrot.lane.b32.xlu0 %v2697, 44
        %v3952 = vpop.permute.xlu0 %3951
        %3953 = vrot.lane.b32.xlu0 %v2699, 44
        %v3954 = vpop.permute.xlu0 %3953
        %3955 = vrot.lane.b32.xlu0 %v2702, 44
        %v3956 = vpop.permute.xlu0 %3955
        %3957 = vrot.lane.b32.xlu0 %v2704, 44
        %v3958 = vpop.permute.xlu0 %3957
        %3959 = vrot.lane.b32.xlu0 %v2707, 44
        %v3960 = vpop.permute.xlu0 %3959
        %3961 = vrot.lane.b32.xlu0 %v2709, 44
        %v3962 = vpop.permute.xlu0 %3961
        %3963 = vrot.lane.b32.xlu0 %v2712, 44
        %v3964 = vpop.permute.xlu0 %3963
        %3965 = vrot.lane.b32.xlu0 %v2714, 44
        %v3966 = vpop.permute.xlu0 %3965
        %3967 = vrot.lane.b32.xlu0 %v2717, 44
        %v3968 = vpop.permute.xlu0 %3967
        %3969 = vrot.lane.b32.xlu0 %v2719, 44
        %v3970 = vpop.permute.xlu0 %3969
        %3971 = vrot.lane.b32.xlu0 %v2722, 44
        %v3972 = vpop.permute.xlu0 %3971
        %3973 = vrot.lane.b32.xlu0 %v2724, 44
        %v3974 = vpop.permute.xlu0 %3973
        %3975 = vrot.lane.b32.xlu0 %v2945, 44
        %v3976 = vpop.permute.xlu0 %3975
        %3977 = vrot.lane.b32.xlu0 %v2947, 44
        %v3978 = vpop.permute.xlu0 %3977
        %3979 = vrot.lane.b32.xlu0 %v2967, 44
        %v3980 = vpop.permute.xlu0 %3979
        %3981 = vrot.lane.b32.xlu0 %v2969, 44
        %v3982 = vpop.permute.xlu0 %3981
        %4015 = vrot.lane.b32.xlu0 %v2727, 48
        %v4016 = vpop.permute.xlu0 %4015
        %4017 = vrot.lane.b32.xlu0 %v2729, 48
        %v4018 = vpop.permute.xlu0 %4017
        %4019 = vrot.lane.b32.xlu0 %v2732, 48
        %v4020 = vpop.permute.xlu0 %4019
        %4021 = vrot.lane.b32.xlu0 %v2734, 48
        %v4022 = vpop.permute.xlu0 %4021
        %4023 = vrot.lane.b32.xlu0 %v2737, 48
        %v4024 = vpop.permute.xlu0 %4023
        %4025 = vrot.lane.b32.xlu0 %v2739, 48
        %v4026 = vpop.permute.xlu0 %4025
        %4027 = vrot.lane.b32.xlu0 %v2742, 48
        %v4028 = vpop.permute.xlu0 %4027
        %4029 = vrot.lane.b32.xlu0 %v2744, 48
        %v4030 = vpop.permute.xlu0 %4029
        %4031 = vrot.lane.b32.xlu0 %v2747, 48
        %v4032 = vpop.permute.xlu0 %4031
        %4033 = vrot.lane.b32.xlu0 %v2749, 48
        %v4034 = vpop.permute.xlu0 %4033
        %4035 = vrot.lane.b32.xlu0 %v2752, 48
        %v4036 = vpop.permute.xlu0 %4035
        %4037 = vrot.lane.b32.xlu0 %v2754, 48
        %v4038 = vpop.permute.xlu0 %4037
        %4039 = vrot.lane.b32.xlu0 %v2757, 48
        %v4040 = vpop.permute.xlu0 %4039
        %4041 = vrot.lane.b32.xlu0 %v2759, 48
        %v4042 = vpop.permute.xlu0 %4041
        %4043 = vrot.lane.b32.xlu0 %v2762, 48
        %v4044 = vpop.permute.xlu0 %4043
        %4045 = vrot.lane.b32.xlu0 %v2764, 48
        %v4046 = vpop.permute.xlu0 %4045
        %4047 = vrot.lane.b32.xlu0 %v2767, 48
        %v4048 = vpop.permute.xlu0 %4047
        %4049 = vrot.lane.b32.xlu0 %v2769, 48
        %v4050 = vpop.permute.xlu0 %4049
        %4051 = vrot.lane.b32.xlu0 %v2772, 48
        %v4052 = vpop.permute.xlu0 %4051
        %4053 = vrot.lane.b32.xlu0 %v2774, 48
        %v4054 = vpop.permute.xlu0 %4053
        %4055 = vrot.lane.b32.xlu0 %v2777, 48
        %v4056 = vpop.permute.xlu0 %4055
        %4057 = vrot.lane.b32.xlu0 %v2779, 48
        %v4058 = vpop.permute.xlu0 %4057
        %4059 = vrot.lane.b32.xlu0 %v2782, 48
        %v4060 = vpop.permute.xlu0 %4059
        %4061 = vrot.lane.b32.xlu0 %v2784, 48
        %v4062 = vpop.permute.xlu0 %4061
        %4063 = vrot.lane.b32.xlu0 %v2787, 48
        %v4064 = vpop.permute.xlu0 %4063
        %4065 = vrot.lane.b32.xlu0 %v2789, 48
        %v4066 = vpop.permute.xlu0 %4065
        %4067 = vrot.lane.b32.xlu0 %v2792, 48
        %v4068 = vpop.permute.xlu0 %4067
        %4069 = vrot.lane.b32.xlu0 %v2794, 48
        %v4070 = vpop.permute.xlu0 %4069
        %4071 = vrot.lane.b32.xlu0 %v2950, 48
        %v4072 = vpop.permute.xlu0 %4071
        %4073 = vrot.lane.b32.xlu0 %v2952, 48
        %v4074 = vpop.permute.xlu0 %4073
        %4075 = vrot.lane.b32.xlu0 %v2972, 48
        %v4076 = vpop.permute.xlu0 %4075
        %4077 = vrot.lane.b32.xlu0 %v2974, 48
        %v4078 = vpop.permute.xlu0 %4077
        %4111 = vrot.lane.b32.xlu0 %v2800, 52
        %v4112 = vpop.permute.xlu0 %4111
        %4113 = vrot.lane.b32.xlu0 %v2802, 52
        %v4114 = vpop.permute.xlu0 %4113
        %4115 = vrot.lane.b32.xlu0 %v2805, 52
        %v4116 = vpop.permute.xlu0 %4115
        %4117 = vrot.lane.b32.xlu0 %v2807, 52
        %v4118 = vpop.permute.xlu0 %4117
        %4119 = vrot.lane.b32.xlu0 %v2810, 52
        %v4120 = vpop.permute.xlu0 %4119
        %4121 = vrot.lane.b32.xlu0 %v2812, 52
        %v4122 = vpop.permute.xlu0 %4121
        %4123 = vrot.lane.b32.xlu0 %v2815, 52
        %v4124 = vpop.permute.xlu0 %4123
        %4125 = vrot.lane.b32.xlu0 %v2817, 52
        %v4126 = vpop.permute.xlu0 %4125
        %4127 = vrot.lane.b32.xlu0 %v2820, 52
        %v4128 = vpop.permute.xlu0 %4127
        %4129 = vrot.lane.b32.xlu0 %v2822, 52
        %v4130 = vpop.permute.xlu0 %4129
        %4131 = vrot.lane.b32.xlu0 %v2825, 52
        %v4132 = vpop.permute.xlu0 %4131
        %4133 = vrot.lane.b32.xlu0 %v2827, 52
        %v4134 = vpop.permute.xlu0 %4133
        %4135 = vrot.lane.b32.xlu0 %v2830, 52
        %v4136 = vpop.permute.xlu0 %4135
        %4137 = vrot.lane.b32.xlu0 %v2832, 52
        %v4138 = vpop.permute.xlu0 %4137
        %4139 = vrot.lane.b32.xlu0 %v2835, 52
        %v4140 = vpop.permute.xlu0 %4139
        %4141 = vrot.lane.b32.xlu0 %v2837, 52
        %v4142 = vpop.permute.xlu0 %4141
        %4143 = vrot.lane.b32.xlu0 %v2840, 52
        %v4144 = vpop.permute.xlu0 %4143
        %4145 = vrot.lane.b32.xlu0 %v2842, 52
        %v4146 = vpop.permute.xlu0 %4145
        %4147 = vrot.lane.b32.xlu0 %v2845, 52
        %v4148 = vpop.permute.xlu0 %4147
        %4149 = vrot.lane.b32.xlu0 %v2847, 52
        %v4150 = vpop.permute.xlu0 %4149
        %4151 = vrot.lane.b32.xlu0 %v2850, 52
        %v4152 = vpop.permute.xlu0 %4151
        %4153 = vrot.lane.b32.xlu0 %v2852, 52
        %v4154 = vpop.permute.xlu0 %4153
        %4155 = vrot.lane.b32.xlu0 %v2855, 52
        %v4156 = vpop.permute.xlu0 %4155
        %4157 = vrot.lane.b32.xlu0 %v2857, 52
        %v4158 = vpop.permute.xlu0 %4157
        %4159 = vrot.lane.b32.xlu0 %v2860, 52
        %v4160 = vpop.permute.xlu0 %4159
        %4161 = vrot.lane.b32.xlu0 %v2862, 52
        %v4162 = vpop.permute.xlu0 %4161
        %4163 = vrot.lane.b32.xlu0 %v2865, 52
        %v4164 = vpop.permute.xlu0 %4163
        %4165 = vrot.lane.b32.xlu0 %v2867, 52
        %v4166 = vpop.permute.xlu0 %4165
        %4167 = vrot.lane.b32.xlu0 %v2955, 52
        %v4168 = vpop.permute.xlu0 %4167
        %4169 = vrot.lane.b32.xlu0 %v2957, 52
        %v4170 = vpop.permute.xlu0 %4169
        %4171 = vrot.lane.b32.xlu0 %v2977, 52
        %v4172 = vpop.permute.xlu0 %4171
        %4173 = vrot.lane.b32.xlu0 %v2979, 52
        %v4174 = vpop.permute.xlu0 %4173
        %4207 = vrot.lane.b32.xlu0 %v2873, 56
        %v4208 = vpop.permute.xlu0 %4207
        %4209 = vrot.lane.b32.xlu0 %v2875, 56
        %v4210 = vpop.permute.xlu0 %4209
        %4211 = vrot.lane.b32.xlu0 %v2878, 56
        %v4212 = vpop.permute.xlu0 %4211
        %4213 = vrot.lane.b32.xlu0 %v2880, 56
        %v4214 = vpop.permute.xlu0 %4213
        %4215 = vrot.lane.b32.xlu0 %v2883, 56
        %v4216 = vpop.permute.xlu0 %4215
        %4217 = vrot.lane.b32.xlu0 %v2885, 56
        %v4218 = vpop.permute.xlu0 %4217
        %4219 = vrot.lane.b32.xlu0 %v2888, 56
        %v4220 = vpop.permute.xlu0 %4219
        %4221 = vrot.lane.b32.xlu0 %v2890, 56
        %v4222 = vpop.permute.xlu0 %4221
        %4223 = vrot.lane.b32.xlu0 %v2893, 56
        %v4224 = vpop.permute.xlu0 %4223
        %4225 = vrot.lane.b32.xlu0 %v2895, 56
        %v4226 = vpop.permute.xlu0 %4225
        %4227 = vrot.lane.b32.xlu0 %v2898, 56
        %v4228 = vpop.permute.xlu0 %4227
        %4229 = vrot.lane.b32.xlu0 %v2900, 56
        %v4230 = vpop.permute.xlu0 %4229
        %4231 = vrot.lane.b32.xlu0 %v2903, 56
        %v4232 = vpop.permute.xlu0 %4231
        %4233 = vrot.lane.b32.xlu0 %v2905, 56
        %v4234 = vpop.permute.xlu0 %4233
        %4235 = vrot.lane.b32.xlu0 %v2908, 56
        %v4236 = vpop.permute.xlu0 %4235
        %4237 = vrot.lane.b32.xlu0 %v2910, 56
        %v4238 = vpop.permute.xlu0 %4237
        %4239 = vrot.lane.b32.xlu0 %v2913, 56
        %v4240 = vpop.permute.xlu0 %4239
        %4241 = vrot.lane.b32.xlu0 %v2915, 56
        %v4242 = vpop.permute.xlu0 %4241
        %4243 = vrot.lane.b32.xlu0 %v2918, 56
        %v4244 = vpop.permute.xlu0 %4243
        %4245 = vrot.lane.b32.xlu0 %v2920, 56
        %v4246 = vpop.permute.xlu0 %4245
        %4247 = vrot.lane.b32.xlu0 %v2923, 56
        %v4248 = vpop.permute.xlu0 %4247
        %4249 = vrot.lane.b32.xlu0 %v2925, 56
        %v4250 = vpop.permute.xlu0 %4249
        %4251 = vrot.lane.b32.xlu0 %v2928, 56
        %v4252 = vpop.permute.xlu0 %4251
        %4253 = vrot.lane.b32.xlu0 %v2930, 56
        %v4254 = vpop.permute.xlu0 %4253
        %4255 = vrot.lane.b32.xlu0 %v2933, 56
        %v4256 = vpop.permute.xlu0 %4255
        %4257 = vrot.lane.b32.xlu0 %v2935, 56
        %v4258 = vpop.permute.xlu0 %4257
        %4259 = vrot.lane.b32.xlu0 %v2938, 56
        %v4260 = vpop.permute.xlu0 %4259
        %4261 = vrot.lane.b32.xlu0 %v2940, 56
        %v4262 = vpop.permute.xlu0 %4261
        %4263 = vrot.lane.b32.xlu0 %v2960, 56
        %v4264 = vpop.permute.xlu0 %4263
        %4265 = vrot.lane.b32.xlu0 %v2962, 56
        %v4266 = vpop.permute.xlu0 %4265
        %4267 = vrot.lane.b32.xlu0 %v2982, 56
        %v4268 = vpop.permute.xlu0 %4267
        %4269 = vrot.lane.b32.xlu0 %v2984, 56
        %v4270 = vpop.permute.xlu0 %4269
        %4303 = vrot.lane.b32.xlu0 %v2596, 60
        %v4304 = vpop.permute.xlu0 %4303
        %4305 = vrot.lane.b32.xlu0 %v2462, 60
        %v4306 = vpop.permute.xlu0 %4305
        %4307 = vrot.lane.b32.xlu0 %v2597, 60
        %v4308 = vpop.permute.xlu0 %4307
        %4309 = vrot.lane.b32.xlu0 %v2468, 60
        %v4310 = vpop.permute.xlu0 %4309
        %4311 = vrot.lane.b32.xlu0 %v2598, 60
        %v4312 = vpop.permute.xlu0 %4311
        %4313 = vrot.lane.b32.xlu0 %v2474, 60
        %v4314 = vpop.permute.xlu0 %4313
        %4315 = vrot.lane.b32.xlu0 %v2599, 60
        %v4316 = vpop.permute.xlu0 %4315
        %4317 = vrot.lane.b32.xlu0 %v2480, 60
        %v4318 = vpop.permute.xlu0 %4317
        %4319 = vrot.lane.b32.xlu0 %v2600, 60
        %v4320 = vpop.permute.xlu0 %4319
        %4321 = vrot.lane.b32.xlu0 %v2486, 60
        %v4322 = vpop.permute.xlu0 %4321
        %4323 = vrot.lane.b32.xlu0 %v2601, 60
        %v4324 = vpop.permute.xlu0 %4323
        %4325 = vrot.lane.b32.xlu0 %v2492, 60
        %v4326 = vpop.permute.xlu0 %4325
        %4327 = vrot.lane.b32.xlu0 %v2602, 60
        %v4328 = vpop.permute.xlu0 %4327
        %4329 = vrot.lane.b32.xlu0 %v2498, 60
        %v4330 = vpop.permute.xlu0 %4329
        %4331 = vrot.lane.b32.xlu0 %v2603, 60
        %v4332 = vpop.permute.xlu0 %4331
        %4333 = vrot.lane.b32.xlu0 %v2504, 60
        %v4334 = vpop.permute.xlu0 %4333
        %4335 = vrot.lane.b32.xlu0 %v2604, 60
        %v4336 = vpop.permute.xlu0 %4335
        %4337 = vrot.lane.b32.xlu0 %v2510, 60
        %v4338 = vpop.permute.xlu0 %4337
        %4339 = vrot.lane.b32.xlu0 %v2605, 60
        %v4340 = vpop.permute.xlu0 %4339
        %4341 = vrot.lane.b32.xlu0 %v2516, 60
        %v4342 = vpop.permute.xlu0 %4341
        %4343 = vrot.lane.b32.xlu0 %v2606, 60
        %v4344 = vpop.permute.xlu0 %4343
        %4345 = vrot.lane.b32.xlu0 %v2522, 60
        %v4346 = vpop.permute.xlu0 %4345
        %4347 = vrot.lane.b32.xlu0 %v2607, 60
        %v4348 = vpop.permute.xlu0 %4347
        %4349 = vrot.lane.b32.xlu0 %v2528, 60
        %v4350 = vpop.permute.xlu0 %4349
        %4351 = vrot.lane.b32.xlu0 %v2608, 60
        %v4352 = vpop.permute.xlu0 %4351
        %4353 = vrot.lane.b32.xlu0 %v2534, 60
        %v4354 = vpop.permute.xlu0 %4353
        %4355 = vrot.lane.b32.xlu0 %v2609, 60
        %v4356 = vpop.permute.xlu0 %4355
        %4357 = vrot.lane.b32.xlu0 %v2540, 60
        %v4358 = vpop.permute.xlu0 %4357
        %4359 = vrot.lane.b32.xlu0 %v2610, 60
        %v4360 = vpop.permute.xlu0 %4359
        %4361 = vrot.lane.b32.xlu0 %v2546, 60
        %v4362 = vpop.permute.xlu0 %4361
        %4363 = vrot.lane.b32.xlu0 0.0, 60
        %v4364 = vpop.permute.xlu0 %4363
        %v4396 = vsel %vm388, %v2595, %v3017
        %v4397 = vsel %vm388, %v2456, %v3019
        %v4398 = vsel %vm388, %v2596, %v3021
        %v4399 = vsel %vm388, %v2462, %v3023
        %v4400 = vsel %vm388, %v2597, %v3025
        %v4401 = vsel %vm388, %v2468, %v3027
        %v4402 = vsel %vm388, %v2598, %v3029
        %v4403 = vsel %vm388, %v2474, %v3031
        %v4404 = vsel %vm388, %v2599, %v3033
        %v4405 = vsel %vm388, %v2480, %v3035
        %v4406 = vsel %vm388, %v2600, %v3037
        %v4407 = vsel %vm388, %v2486, %v3039
        %v4408 = vsel %vm388, %v2601, %v3041
        %v4409 = vsel %vm388, %v2492, %v3043
        %v4410 = vsel %vm388, %v2602, %v3045
        %v4411 = vsel %vm388, %v2498, %v3047
        %v4412 = vsel %vm388, %v2603, %v3049
        %v4413 = vsel %vm388, %v2504, %v3051
        %v4414 = vsel %vm388, %v2604, %v3053
        %v4415 = vsel %vm388, %v2510, %v3055
        %v4416 = vsel %vm388, %v2605, %v3057
        %v4417 = vsel %vm388, %v2516, %v3059
        %v4418 = vsel %vm388, %v2606, %v3061
        %v4419 = vsel %vm388, %v2522, %v3063
        %v4420 = vsel %vm388, %v2607, %v3065
        %v4421 = vsel %vm388, %v2528, %v3067
        %v4422 = vsel %vm388, %v2608, %v3069
        %v4423 = vsel %vm388, %v2534, %v3071
        %v4424 = vsel %vm1879, %v4396, %v3101
        %v4425 = vsel %vm1879, %v4397, %v3103
        %v4426 = vsel %vm1879, %v4398, %v3105
        %v4427 = vsel %vm1879, %v4399, %v3107
        %v4428 = vsel %vm1879, %v4400, %v3109
        %v4429 = vsel %vm1879, %v4401, %v3111
        %v4430 = vsel %vm1879, %v4402, %v3113
        %v4431 = vsel %vm1879, %v4403, %v3115
        %v4432 = vsel %vm1879, %v4404, %v3117
        %v4433 = vsel %vm1879, %v4405, %v3119
        %v4434 = vsel %vm1879, %v4406, %v3121
        %v4435 = vsel %vm1879, %v4407, %v3123
        %v4436 = vsel %vm1879, %v4408, %v3125
        %v4437 = vsel %vm1879, %v4409, %v3127
        %v4438 = vsel %vm1879, %v4410, %v3129
        %v4439 = vsel %vm1879, %v4411, %v3131
        %v4440 = vsel %vm1879, %v4412, %v3133
        %v4441 = vsel %vm1879, %v4413, %v3135
        %v4442 = vsel %vm1879, %v4414, %v3137
        %v4443 = vsel %vm1879, %v4415, %v3139
        %v4444 = vsel %vm1879, %v4416, %v3141
        %v4445 = vsel %vm1879, %v4417, %v3143
        %v4446 = vsel %vm1879, %v4418, %v3145
        %v4447 = vsel %vm1879, %v4419, %v3147
        %v4448 = vsel %vm1879, %v4420, %v3149
        %v4449 = vsel %vm1879, %v4421, %v3151
        %v4450 = vsel %vm1879, %v4422, %v3153
        %v4451 = vsel %vm1879, %v4423, %v3155
        %v4452 = vsel %vm1911, %v1880, %v3185
        %v4453 = vsel %vm1911, %v4424, %v3187
        %v4454 = vsel %vm1911, %v4425, %v3189
        %v4455 = vsel %vm1911, %v4426, %v3191
        %v4456 = vsel %vm1911, %v4427, %v3193
        %v4457 = vsel %vm1911, %v4428, %v3195
        %v4458 = vsel %vm1911, %v4429, %v3197
        %v4459 = vsel %vm1911, %v4430, %v3199
        %v4460 = vsel %vm1911, %v4431, %v3201
        %v4461 = vsel %vm1911, %v4432, %v3203
        %v4462 = vsel %vm1911, %v4433, %v3205
        %v4463 = vsel %vm1911, %v4434, %v3207
        %v4464 = vsel %vm1911, %v4435, %v3209
        %v4465 = vsel %vm1911, %v4436, %v3211
        %v4466 = vsel %vm1911, %v4437, %v3213
        %v4467 = vsel %vm1911, %v4438, %v3215
        %v4468 = vsel %vm1911, %v4439, %v3217
        %v4469 = vsel %vm1911, %v4440, %v3219
        %v4470 = vsel %vm1911, %v4441, %v3221
        %v4471 = vsel %vm1911, %v4442, %v3223
        %v4472 = vsel %vm1911, %v4443, %v3225
        %v4473 = vsel %vm1911, %v4444, %v3227
        %v4474 = vsel %vm1911, %v4445, %v3229
        %v4475 = vsel %vm1911, %v4446, %v3231
        %v4476 = vsel %vm1911, %v4447, %v3233
        %v4477 = vsel %vm1911, %v4448, %v3235
        %v4478 = vsel %vm1911, %v4449, %v3237
        %v4479 = vsel %vm1911, %v4450, %v3239
        %v4480 = vsel %vm1911, %v4451, %v3241
        %v4481 = vsel %vm1944, %v4452, %v3272
        %v4482 = vsel %vm1944, %v4453, %v3274
        %v4483 = vsel %vm1944, %v4454, %v3276
        %v4484 = vsel %vm1944, %v4455, %v3278
        %v4485 = vsel %vm1944, %v4456, %v3280
        %v4486 = vsel %vm1944, %v4457, %v3282
        %v4487 = vsel %vm1944, %v4458, %v3284
        %v4488 = vsel %vm1944, %v4459, %v3286
        %v4489 = vsel %vm1944, %v4460, %v3288
        %v4490 = vsel %vm1944, %v4461, %v3290
        %v4491 = vsel %vm1944, %v4462, %v3292
        %v4492 = vsel %vm1944, %v4463, %v3294
        %v4493 = vsel %vm1944, %v4464, %v3296
        %v4494 = vsel %vm1944, %v4465, %v3298
        %v4495 = vsel %vm1944, %v4466, %v3300
        %v4496 = vsel %vm1944, %v4467, %v3302
        %v4497 = vsel %vm1944, %v4468, %v3304
        %v4498 = vsel %vm1944, %v4469, %v3306
        %v4499 = vsel %vm1944, %v4470, %v3308
        %v4500 = vsel %vm1944, %v4471, %v3310
        %v4501 = vsel %vm1944, %v4472, %v3312
        %v4502 = vsel %vm1944, %v4473, %v3314
        %v4503 = vsel %vm1944, %v4474, %v3316
        %v4504 = vsel %vm1944, %v4475, %v3318
        %v4505 = vsel %vm1944, %v4476, %v3320
        %v4506 = vsel %vm1944, %v4477, %v3322
        %v4507 = vsel %vm1944, %v4478, %v3324
        %v4508 = vsel %vm1944, %v4479, %v3326
        %v4509 = vsel %vm1944, %v4480, %v3328
        %v4510 = vsel %vm1977, %v4481, %v3359
        %v4511 = vsel %vm1977, %v4481, %v3361
        %v4512 = vsel %vm1977, %v4481, %v3363
        %v4513 = vsel %vm1977, %v4482, %v3365
        %v4514 = vsel %vm1977, %v4483, %v3367
        %v4515 = vsel %vm1977, %v4484, %v3369
        %v4516 = vsel %vm1977, %v4485, %v3371
        %v4517 = vsel %vm1977, %v4486, %v3373
        %v4518 = vsel %vm1977, %v4487, %v3375
        %v4519 = vsel %vm1977, %v4488, %v3377
        %v4520 = vsel %vm1977, %v4489, %v3379
        %v4521 = vsel %vm1977, %v4490, %v3381
        %v4522 = vsel %vm1977, %v4491, %v3383
        %v4523 = vsel %vm1977, %v4492, %v3385
        %v4524 = vsel %vm1977, %v4493, %v3387
        %v4525 = vsel %vm1977, %v4494, %v3389
        %v4526 = vsel %vm1977, %v4495, %v3391
        %v4527 = vsel %vm1977, %v4496, %v3393
        %v4528 = vsel %vm1977, %v4497, %v3395
        %v4529 = vsel %vm1977, %v4498, %v3397
        %v4530 = vsel %vm1977, %v4499, %v3399
        %v4531 = vsel %vm1977, %v4500, %v3401
        %v4532 = vsel %vm1977, %v4501, %v3403
        %v4533 = vsel %vm1977, %v4502, %v3405
        %v4534 = vsel %vm1977, %v4503, %v3407
        %v4535 = vsel %vm1977, %v4504, %v3409
        %v4536 = vsel %vm1977, %v4505, %v3411
        %v4537 = vsel %vm1977, %v4506, %v3413
        %v4538 = vsel %vm1977, %v4507, %v3415
        %v4539 = vsel %vm1977, %v4508, %v3417
        %v4540 = vsel %vm1977, %v4509, %v3419
        %v4541 = vsel %vm2010, %v4510, %v3452
        %v4542 = vsel %vm2010, %v4511, %v3454
        %v4543 = vsel %vm2010, %v4512, %v3456
        %v4544 = vsel %vm2010, %v4513, %v3458
        %v4545 = vsel %vm2010, %v4514, %v3460
        %v4546 = vsel %vm2010, %v4515, %v3462
        %v4547 = vsel %vm2010, %v4516, %v3464
        %v4548 = vsel %vm2010, %v4517, %v3466
        %v4549 = vsel %vm2010, %v4518, %v3468
        %v4550 = vsel %vm2010, %v4519, %v3470
        %v4551 = vsel %vm2010, %v4520, %v3472
        %v4552 = vsel %vm2010, %v4521, %v3474
        %v4553 = vsel %vm2010, %v4522, %v3476
        %v4554 = vsel %vm2010, %v4523, %v3478
        %v4555 = vsel %vm2010, %v4524, %v3480
        %v4556 = vsel %vm2010, %v4525, %v3482
        %v4557 = vsel %vm2010, %v4526, %v3484
        %v4558 = vsel %vm2010, %v4527, %v3486
        %v4559 = vsel %vm2010, %v4528, %v3488
        %v4560 = vsel %vm2010, %v4529, %v3490
        %v4561 = vsel %vm2010, %v4530, %v3492
        %v4562 = vsel %vm2010, %v4531, %v3494
        %v4563 = vsel %vm2010, %v4532, %v3496
        %v4564 = vsel %vm2010, %v4533, %v3498
        %v4565 = vsel %vm2010, %v4534, %v3500
        %v4566 = vsel %vm2010, %v4535, %v3502
        %v4567 = vsel %vm2010, %v4536, %v3504
        %v4568 = vsel %vm2010, %v4537, %v3506
        %v4569 = vsel %vm2010, %v4538, %v3508
        %v4570 = vsel %vm2010, %v4539, %v3510
        %v4571 = vsel %vm2010, %v4540, %v3512
        %v4572 = vsel %vm2043, %v4541, %v3545
        %v4573 = vsel %vm2043, %v4542, %v3547
        %v4574 = vsel %vm2043, %v4543, %v3549
        %v4575 = vsel %vm2043, %v4544, %v3551
        %v4576 = vsel %vm2043, %v4545, %v3553
        %v4577 = vsel %vm2043, %v4546, %v3555
        %v4578 = vsel %vm2043, %v4547, %v3557
        %v4579 = vsel %vm2043, %v4548, %v3559
        %v4580 = vsel %vm2043, %v4549, %v3561
        %v4581 = vsel %vm2043, %v4550, %v3563
        %v4582 = vsel %vm2043, %v4551, %v3565
        %v4583 = vsel %vm2043, %v4552, %v3567
        %v4584 = vsel %vm2043, %v4553, %v3569
        %v4585 = vsel %vm2043, %v4554, %v3571
        %v4586 = vsel %vm2043, %v4555, %v3573
        %v4587 = vsel %vm2043, %v4556, %v3575
        %v4588 = vsel %vm2043, %v4557, %v3577
        %v4589 = vsel %vm2043, %v4558, %v3579
        %v4590 = vsel %vm2043, %v4559, %v3581
        %v4591 = vsel %vm2043, %v4560, %v3583
        %v4592 = vsel %vm2043, %v4561, %v3585
        %v4593 = vsel %vm2043, %v4562, %v3587
        %v4594 = vsel %vm2043, %v4563, %v3589
        %v4595 = vsel %vm2043, %v4564, %v3591
        %v4596 = vsel %vm2043, %v4565, %v3593
        %v4597 = vsel %vm2043, %v4566, %v3595
        %v4598 = vsel %vm2043, %v4567, %v3597
        %v4599 = vsel %vm2043, %v4568, %v3599
        %v4600 = vsel %vm2043, %v4569, %v3601
        %v4601 = vsel %vm2043, %v4570, %v3603
        %v4602 = vsel %vm2043, %v4571, %v3605
        %v4603 = vsel %vm2076, %v4572, %v3638
        %v4604 = vsel %vm2076, %v4573, %v3640
        %v4605 = vsel %vm2076, %v4574, %v3642
        %v4606 = vsel %vm2076, %v4575, %v3644
        %v4607 = vsel %vm2076, %v4576, %v3646
        %v4608 = vsel %vm2076, %v4577, %v3648
        %v4609 = vsel %vm2076, %v4578, %v3650
        %v4610 = vsel %vm2076, %v4579, %v3652
        %v4611 = vsel %vm2076, %v4580, %v3654
        %v4612 = vsel %vm2076, %v4581, %v3656
        %v4613 = vsel %vm2076, %v4582, %v3658
        %v4614 = vsel %vm2076, %v4583, %v3660
        %v4615 = vsel %vm2076, %v4584, %v3662
        %v4616 = vsel %vm2076, %v4585, %v3664
        %v4617 = vsel %vm2076, %v4586, %v3666
        %v4618 = vsel %vm2076, %v4587, %v3668
        %v4619 = vsel %vm2076, %v4588, %v3670
        %v4620 = vsel %vm2076, %v4589, %v3672
        %v4621 = vsel %vm2076, %v4590, %v3674
        %v4622 = vsel %vm2076, %v4591, %v3676
        %v4623 = vsel %vm2076, %v4592, %v3678
        %v4624 = vsel %vm2076, %v4593, %v3680
        %v4625 = vsel %vm2076, %v4594, %v3682
        %v4626 = vsel %vm2076, %v4595, %v3684
        %v4627 = vsel %vm2076, %v4596, %v3686
        %v4628 = vsel %vm2076, %v4597, %v3688
        %v4629 = vsel %vm2076, %v4598, %v3690
        %v4630 = vsel %vm2076, %v4599, %v3692
        %v4631 = vsel %vm2076, %v4600, %v3694
        %v4632 = vsel %vm2076, %v4601, %v3696
        %v4633 = vsel %vm2076, %v4602, %v3698
        %v4634 = vsel %vm2146, %v4603, %v3731
        %v4635 = vsel %vm2146, %v4604, %v3733
        %v4636 = vsel %vm2146, %v4605, %v3735
        %v4637 = vsel %vm2146, %v4606, %v3737
        %v4638 = vsel %vm2146, %v4607, %v3739
        %v4639 = vsel %vm2146, %v4608, %v3741
        %v4640 = vsel %vm2146, %v4609, %v3743
        %v4641 = vsel %vm2146, %v4610, %v3745
        %v4642 = vsel %vm2146, %v4611, %v3747
        %v4643 = vsel %vm2146, %v4612, %v3749
        %v4644 = vsel %vm2146, %v4613, %v3751
        %v4645 = vsel %vm2146, %v4614, %v3753
        %v4646 = vsel %vm2146, %v4615, %v3755
        %v4647 = vsel %vm2146, %v4616, %v3757
        %v4648 = vsel %vm2146, %v4617, %v3759
        %v4649 = vsel %vm2146, %v4618, %v3761
        %v4650 = vsel %vm2146, %v4619, %v3763
        %v4651 = vsel %vm2146, %v4620, %v3765
        %v4652 = vsel %vm2146, %v4621, %v3767
        %v4653 = vsel %vm2146, %v4622, %v3769
        %v4654 = vsel %vm2146, %v4623, %v3771
        %v4655 = vsel %vm2146, %v4624, %v3773
        %v4656 = vsel %vm2146, %v4625, %v3775
        %v4657 = vsel %vm2146, %v4626, %v3777
        %v4658 = vsel %vm2146, %v4627, %v3779
        %v4659 = vsel %vm2146, %v4628, %v3781
        %v4660 = vsel %vm2146, %v4629, %v3783
        %v4661 = vsel %vm2146, %v4630, %v3785
        %v4662 = vsel %vm2146, %v4631, %v3787
        %v4663 = vsel %vm2146, %v4632, %v3789
        %v4664 = vsel %vm2146, %v4633, %v3791
        %vm4665 = vcmask 326656
        %v4666 = vsel %vm4665, %v4634, %v3824
        %v4667 = vsel %vm4665, %v4634, %v3826
        %v4668 = vsel %vm4665, %v4635, %v3828
        %v4669 = vsel %vm4665, %v4636, %v3830
        %v4670 = vsel %vm4665, %v4637, %v3832
        %v4671 = vsel %vm4665, %v4638, %v3834
        %v4672 = vsel %vm4665, %v4639, %v3836
        %v4673 = vsel %vm4665, %v4640, %v3838
        %v4674 = vsel %vm4665, %v4641, %v3840
        %v4675 = vsel %vm4665, %v4642, %v3842
        %v4676 = vsel %vm4665, %v4643, %v3844
        %v4677 = vsel %vm4665, %v4644, %v3846
        %v4678 = vsel %vm4665, %v4645, %v3848
        %v4679 = vsel %vm4665, %v4646, %v3850
        %v4680 = vsel %vm4665, %v4647, %v3852
        %v4681 = vsel %vm4665, %v4648, %v3854
        %v4682 = vsel %vm4665, %v4649, %v3856
        %v4683 = vsel %vm4665, %v4650, %v3858
        %v4684 = vsel %vm4665, %v4651, %v3860
        %v4685 = vsel %vm4665, %v4652, %v3862
        %v4686 = vsel %vm4665, %v4653, %v3864
        %v4687 = vsel %vm4665, %v4654, %v3866
        %v4688 = vsel %vm4665, %v4655, %v3868
        %v4689 = vsel %vm4665, %v4656, %v3870
        %v4690 = vsel %vm4665, %v4657, %v3872
        %v4691 = vsel %vm4665, %v4658, %v3874
        %v4692 = vsel %vm4665, %v4659, %v3876
        %v4693 = vsel %vm4665, %v4660, %v3878
        %v4694 = vsel %vm4665, %v4661, %v3880
        %v4695 = vsel %vm4665, %v4662, %v3882
        %v4696 = vsel %vm4665, %v4663, %v3884
        %v4697 = vsel %vm4665, %v4664, %v3886
        %vm4698 = vcmask 359424
        %v4699 = vsel %vm4698, %v4666, %v3920
        %v4700 = vsel %vm4698, %v4667, %v3922
        %v4701 = vsel %vm4698, %v4668, %v3924
        %v4702 = vsel %vm4698, %v4669, %v3926
        %v4703 = vsel %vm4698, %v4670, %v3928
        %v4704 = vsel %vm4698, %v4671, %v3930
        %v4705 = vsel %vm4698, %v4672, %v3932
        %v4706 = vsel %vm4698, %v4673, %v3934
        %v4707 = vsel %vm4698, %v4674, %v3936
        %v4708 = vsel %vm4698, %v4675, %v3938
        %v4709 = vsel %vm4698, %v4676, %v3940
        %v4710 = vsel %vm4698, %v4677, %v3942
        %v4711 = vsel %vm4698, %v4678, %v3944
        %v4712 = vsel %vm4698, %v4679, %v3946
        %v4713 = vsel %vm4698, %v4680, %v3948
        %v4714 = vsel %vm4698, %v4681, %v3950
        %v4715 = vsel %vm4698, %v4682, %v3952
        %v4716 = vsel %vm4698, %v4683, %v3954
        %v4717 = vsel %vm4698, %v4684, %v3956
        %v4718 = vsel %vm4698, %v4685, %v3958
        %v4719 = vsel %vm4698, %v4686, %v3960
        %v4720 = vsel %vm4698, %v4687, %v3962
        %v4721 = vsel %vm4698, %v4688, %v3964
        %v4722 = vsel %vm4698, %v4689, %v3966
        %v4723 = vsel %vm4698, %v4690, %v3968
        %v4724 = vsel %vm4698, %v4691, %v3970
        %v4725 = vsel %vm4698, %v4692, %v3972
        %v4726 = vsel %vm4698, %v4693, %v3974
        %v4727 = vsel %vm4698, %v4694, %v3976
        %v4728 = vsel %vm4698, %v4695, %v3978
        %v4729 = vsel %vm4698, %v4696, %v3980
        %v4730 = vsel %vm4698, %v4697, %v3982
        %vm4731 = vcmask 392192
        %v4732 = vsel %vm4731, %v4699, %v4016
        %v4733 = vsel %vm4731, %v4700, %v4018
        %v4734 = vsel %vm4731, %v4701, %v4020
        %v4735 = vsel %vm4731, %v4702, %v4022
        %v4736 = vsel %vm4731, %v4703, %v4024
        %v4737 = vsel %vm4731, %v4704, %v4026
        %v4738 = vsel %vm4731, %v4705, %v4028
        %v4739 = vsel %vm4731, %v4706, %v4030
        %v4740 = vsel %vm4731, %v4707, %v4032
        %v4741 = vsel %vm4731, %v4708, %v4034
        %v4742 = vsel %vm4731, %v4709, %v4036
        %v4743 = vsel %vm4731, %v4710, %v4038
        %v4744 = vsel %vm4731, %v4711, %v4040
        %v4745 = vsel %vm4731, %v4712, %v4042
        %v4746 = vsel %vm4731, %v4713, %v4044
        %v4747 = vsel %vm4731, %v4714, %v4046
        %v4748 = vsel %vm4731, %v4715, %v4048
        %v4749 = vsel %vm4731, %v4716, %v4050
        %v4750 = vsel %vm4731, %v4717, %v4052
        %v4751 = vsel %vm4731, %v4718, %v4054
        %v4752 = vsel %vm4731, %v4719, %v4056
        %v4753 = vsel %vm4731, %v4720, %v4058
        %v4754 = vsel %vm4731, %v4721, %v4060
        %v4755 = vsel %vm4731, %v4722, %v4062
        %v4756 = vsel %vm4731, %v4723, %v4064
        %v4757 = vsel %vm4731, %v4724, %v4066
        %v4758 = vsel %vm4731, %v4725, %v4068
        %v4759 = vsel %vm4731, %v4726, %v4070
        %v4760 = vsel %vm4731, %v4727, %v4072
        %v4761 = vsel %vm4731, %v4728, %v4074
        %v4762 = vsel %vm4731, %v4729, %v4076
        %v4763 = vsel %vm4731, %v4730, %v4078
        %vm4764 = vcmask 424960
        %v4765 = vsel %vm4764, %v4732, %v4112
        %v4766 = vsel %vm4764, %v4733, %v4114
        %v4767 = vsel %vm4764, %v4734, %v4116
        %v4768 = vsel %vm4764, %v4735, %v4118
        %v4769 = vsel %vm4764, %v4736, %v4120
        %v4770 = vsel %vm4764, %v4737, %v4122
        %v4771 = vsel %vm4764, %v4738, %v4124
        %v4772 = vsel %vm4764, %v4739, %v4126
        %v4773 = vsel %vm4764, %v4740, %v4128
        %v4774 = vsel %vm4764, %v4741, %v4130
        %v4775 = vsel %vm4764, %v4742, %v4132
        %v4776 = vsel %vm4764, %v4743, %v4134
        %v4777 = vsel %vm4764, %v4744, %v4136
        %v4778 = vsel %vm4764, %v4745, %v4138
        %v4779 = vsel %vm4764, %v4746, %v4140
        %v4780 = vsel %vm4764, %v4747, %v4142
        %v4781 = vsel %vm4764, %v4748, %v4144
        %v4782 = vsel %vm4764, %v4749, %v4146
        %v4783 = vsel %vm4764, %v4750, %v4148
        %v4784 = vsel %vm4764, %v4751, %v4150
        %v4785 = vsel %vm4764, %v4752, %v4152
        %v4786 = vsel %vm4764, %v4753, %v4154
        %v4787 = vsel %vm4764, %v4754, %v4156
        %v4788 = vsel %vm4764, %v4755, %v4158
        %v4789 = vsel %vm4764, %v4756, %v4160
        %v4790 = vsel %vm4764, %v4757, %v4162
        %v4791 = vsel %vm4764, %v4758, %v4164
        %v4792 = vsel %vm4764, %v4759, %v4166
        %v4793 = vsel %vm4764, %v4760, %v4168
        %v4794 = vsel %vm4764, %v4761, %v4170
        %v4795 = vsel %vm4764, %v4762, %v4172
        %v4796 = vsel %vm4764, %v4763, %v4174
        %vm4797 = vcmask 457728
        %v4798 = vsel %vm4797, %v4765, %v4208
        %v4799 = vsel %vm4797, %v4766, %v4210
        %v4800 = vsel %vm4797, %v4767, %v4212
        %v4801 = vsel %vm4797, %v4768, %v4214
        %v4802 = vsel %vm4797, %v4769, %v4216
        %v4803 = vsel %vm4797, %v4770, %v4218
        %v4804 = vsel %vm4797, %v4771, %v4220
        %v4805 = vsel %vm4797, %v4772, %v4222
        %v4806 = vsel %vm4797, %v4773, %v4224
        %v4807 = vsel %vm4797, %v4774, %v4226
        %v4808 = vsel %vm4797, %v4775, %v4228
        %v4809 = vsel %vm4797, %v4776, %v4230
        %v4810 = vsel %vm4797, %v4777, %v4232
        %v4811 = vsel %vm4797, %v4778, %v4234
        %v4812 = vsel %vm4797, %v4779, %v4236
        %v4813 = vsel %vm4797, %v4780, %v4238
        %v4814 = vsel %vm4797, %v4781, %v4240
        %v4815 = vsel %vm4797, %v4782, %v4242
        %v4816 = vsel %vm4797, %v4783, %v4244
        %v4817 = vsel %vm4797, %v4784, %v4246
        %v4818 = vsel %vm4797, %v4785, %v4248
        %v4819 = vsel %vm4797, %v4786, %v4250
        %v4820 = vsel %vm4797, %v4787, %v4252
        %v4821 = vsel %vm4797, %v4788, %v4254
        %v4822 = vsel %vm4797, %v4789, %v4256
        %v4823 = vsel %vm4797, %v4790, %v4258
        %v4824 = vsel %vm4797, %v4791, %v4260
        %v4825 = vsel %vm4797, %v4792, %v4262
        %v4826 = vsel %vm4797, %v4793, %v4264
        %v4827 = vsel %vm4797, %v4794, %v4266
        %v4828 = vsel %vm4797, %v4795, %v4268
        %v4829 = vsel %vm4797, %v4796, %v4270
        %vm4830 = vcmask 490496
        %v4831 = vsel %vm4830, %v4798, %v4304
        %v4832 = vsel %vm4830, %v4799, %v4306
        %v4833 = vsel %vm4830, %v4800, %v4308
        %v4834 = vsel %vm4830, %v4801, %v4310
        %v4835 = vsel %vm4830, %v4802, %v4312
        %v4836 = vsel %vm4830, %v4803, %v4314
        %v4837 = vsel %vm4830, %v4804, %v4316
        %v4838 = vsel %vm4830, %v4805, %v4318
        %v4839 = vsel %vm4830, %v4806, %v4320
        %v4840 = vsel %vm4830, %v4807, %v4322
        %v4841 = vsel %vm4830, %v4808, %v4324
        %v4842 = vsel %vm4830, %v4809, %v4326
        %v4843 = vsel %vm4830, %v4810, %v4328
        %v4844 = vsel %vm4830, %v4811, %v4330
        %v4845 = vsel %vm4830, %v4812, %v4332
        %v4846 = vsel %vm4830, %v4813, %v4334
        %v4847 = vsel %vm4830, %v4814, %v4336
        %v4848 = vsel %vm4830, %v4815, %v4338
        %v4849 = vsel %vm4830, %v4816, %v4340
        %v4850 = vsel %vm4830, %v4817, %v4342
        %v4851 = vsel %vm4830, %v4818, %v4344
        %v4852 = vsel %vm4830, %v4819, %v4346
        %v4853 = vsel %vm4830, %v4820, %v4348
        %v4854 = vsel %vm4830, %v4821, %v4350
        %v4855 = vsel %vm4830, %v4822, %v4352
        %v4856 = vsel %vm4830, %v4823, %v4354
        %v4857 = vsel %vm4830, %v4824, %v4356
        %v4858 = vsel %vm4830, %v4825, %v4358
        %v4859 = vsel %vm4830, %v4826, %v4360
        %v4860 = vsel %vm4830, %v4827, %v4362
        %v4861 = vsel %vm4830, %v4828, %v4364
        %v4862 = vsel %vm4830, %v4829, %v4364
        %4863 = vrot.lane.b32.xlu0 %v2732, 4
        %v4864 = vpop.permute.xlu0 %4863
        %4865 = vrot.lane.b32.xlu0 %v2734, 4
        %v4866 = vpop.permute.xlu0 %4865
        %4867 = vrot.lane.b32.xlu0 %v2737, 4
        %v4868 = vpop.permute.xlu0 %4867
        %4869 = vrot.lane.b32.xlu0 %v2739, 4
        %v4870 = vpop.permute.xlu0 %4869
        %4871 = vrot.lane.b32.xlu0 %v2742, 4
        %v4872 = vpop.permute.xlu0 %4871
        %4873 = vrot.lane.b32.xlu0 %v2744, 4
        %v4874 = vpop.permute.xlu0 %4873
        %4875 = vrot.lane.b32.xlu0 %v2747, 4
        %v4876 = vpop.permute.xlu0 %4875
        %4877 = vrot.lane.b32.xlu0 %v2749, 4
        %v4878 = vpop.permute.xlu0 %4877
        %4879 = vrot.lane.b32.xlu0 %v2752, 4
        %v4880 = vpop.permute.xlu0 %4879
        %4881 = vrot.lane.b32.xlu0 %v2754, 4
        %v4882 = vpop.permute.xlu0 %4881
        %4883 = vrot.lane.b32.xlu0 %v2757, 4
        %v4884 = vpop.permute.xlu0 %4883
        %4885 = vrot.lane.b32.xlu0 %v2759, 4
        %v4886 = vpop.permute.xlu0 %4885
        %4887 = vrot.lane.b32.xlu0 %v2762, 4
        %v4888 = vpop.permute.xlu0 %4887
        %4889 = vrot.lane.b32.xlu0 %v2764, 4
        %v4890 = vpop.permute.xlu0 %4889
        %4891 = vrot.lane.b32.xlu0 %v2767, 4
        %v4892 = vpop.permute.xlu0 %4891
        %4893 = vrot.lane.b32.xlu0 %v2769, 4
        %v4894 = vpop.permute.xlu0 %4893
        %4895 = vrot.lane.b32.xlu0 %v2772, 4
        %v4896 = vpop.permute.xlu0 %4895
        %4897 = vrot.lane.b32.xlu0 %v2774, 4
        %v4898 = vpop.permute.xlu0 %4897
        %4899 = vrot.lane.b32.xlu0 %v2777, 4
        %v4900 = vpop.permute.xlu0 %4899
        %4901 = vrot.lane.b32.xlu0 %v2779, 4
        %v4902 = vpop.permute.xlu0 %4901
        %4903 = vrot.lane.b32.xlu0 %v2782, 4
        %v4904 = vpop.permute.xlu0 %4903
        %4905 = vrot.lane.b32.xlu0 %v2784, 4
        %v4906 = vpop.permute.xlu0 %4905
        %4907 = vrot.lane.b32.xlu0 %v2787, 4
        %v4908 = vpop.permute.xlu0 %4907
        %4909 = vrot.lane.b32.xlu0 %v2789, 4
        %v4910 = vpop.permute.xlu0 %4909
        %4911 = vrot.lane.b32.xlu0 %v2792, 4
        %v4912 = vpop.permute.xlu0 %4911
        %4913 = vrot.lane.b32.xlu0 %v2794, 4
        %v4914 = vpop.permute.xlu0 %4913
        %4915 = vrot.lane.b32.xlu0 %v2950, 4
        %v4916 = vpop.permute.xlu0 %4915
        %4917 = vrot.lane.b32.xlu0 %v2952, 4
        %v4918 = vpop.permute.xlu0 %4917
        %4919 = vrot.lane.b32.xlu0 %v2972, 4
        %v4920 = vpop.permute.xlu0 %4919
        %4921 = vrot.lane.b32.xlu0 %v2974, 4
        %v4922 = vpop.permute.xlu0 %4921
        %4923 = vrot.lane.b32.xlu0 %v1007, 4
        %v4924 = vpop.permute.xlu0 %4923
        %4956 = vrot.lane.b32.xlu0 %v2805, 8
        %v4957 = vpop.permute.xlu0 %4956
        %4958 = vrot.lane.b32.xlu0 %v2807, 8
        %v4959 = vpop.permute.xlu0 %4958
        %4960 = vrot.lane.b32.xlu0 %v2810, 8
        %v4961 = vpop.permute.xlu0 %4960
        %4962 = vrot.lane.b32.xlu0 %v2812, 8
        %v4963 = vpop.permute.xlu0 %4962
        %4964 = vrot.lane.b32.xlu0 %v2815, 8
        %v4965 = vpop.permute.xlu0 %4964
        %4966 = vrot.lane.b32.xlu0 %v2817, 8
        %v4967 = vpop.permute.xlu0 %4966
        %4968 = vrot.lane.b32.xlu0 %v2820, 8
        %v4969 = vpop.permute.xlu0 %4968
        %4970 = vrot.lane.b32.xlu0 %v2822, 8
        %v4971 = vpop.permute.xlu0 %4970
        %4972 = vrot.lane.b32.xlu0 %v2825, 8
        %v4973 = vpop.permute.xlu0 %4972
        %4974 = vrot.lane.b32.xlu0 %v2827, 8
        %v4975 = vpop.permute.xlu0 %4974
        %4976 = vrot.lane.b32.xlu0 %v2830, 8
        %v4977 = vpop.permute.xlu0 %4976
        %4978 = vrot.lane.b32.xlu0 %v2832, 8
        %v4979 = vpop.permute.xlu0 %4978
        %4980 = vrot.lane.b32.xlu0 %v2835, 8
        %v4981 = vpop.permute.xlu0 %4980
        %4982 = vrot.lane.b32.xlu0 %v2837, 8
        %v4983 = vpop.permute.xlu0 %4982
        %4984 = vrot.lane.b32.xlu0 %v2840, 8
        %v4985 = vpop.permute.xlu0 %4984
        %4986 = vrot.lane.b32.xlu0 %v2842, 8
        %v4987 = vpop.permute.xlu0 %4986
        %4988 = vrot.lane.b32.xlu0 %v2845, 8
        %v4989 = vpop.permute.xlu0 %4988
        %4990 = vrot.lane.b32.xlu0 %v2847, 8
        %v4991 = vpop.permute.xlu0 %4990
        %4992 = vrot.lane.b32.xlu0 %v2850, 8
        %v4993 = vpop.permute.xlu0 %4992
        %4994 = vrot.lane.b32.xlu0 %v2852, 8
        %v4995 = vpop.permute.xlu0 %4994
        %4996 = vrot.lane.b32.xlu0 %v2855, 8
        %v4997 = vpop.permute.xlu0 %4996
        %4998 = vrot.lane.b32.xlu0 %v2857, 8
        %v4999 = vpop.permute.xlu0 %4998
        %5000 = vrot.lane.b32.xlu0 %v2860, 8
        %v5001 = vpop.permute.xlu0 %5000
        %5002 = vrot.lane.b32.xlu0 %v2862, 8
        %v5003 = vpop.permute.xlu0 %5002
        %5004 = vrot.lane.b32.xlu0 %v2865, 8
        %v5005 = vpop.permute.xlu0 %5004
        %5006 = vrot.lane.b32.xlu0 %v2867, 8
        %v5007 = vpop.permute.xlu0 %5006
        %5008 = vrot.lane.b32.xlu0 %v2955, 8
        %v5009 = vpop.permute.xlu0 %5008
        %5010 = vrot.lane.b32.xlu0 %v2957, 8
        %v5011 = vpop.permute.xlu0 %5010
        %5012 = vrot.lane.b32.xlu0 %v2977, 8
        %v5013 = vpop.permute.xlu0 %5012
        %5014 = vrot.lane.b32.xlu0 %v2979, 8
        %v5015 = vpop.permute.xlu0 %5014
        %5016 = vrot.lane.b32.xlu0 %v2797, 8
        %v5017 = vpop.permute.xlu0 %5016
        %5049 = vrot.lane.b32.xlu0 %v2878, 12
        %v5050 = vpop.permute.xlu0 %5049
        %5051 = vrot.lane.b32.xlu0 %v2880, 12
        %v5052 = vpop.permute.xlu0 %5051
        %5053 = vrot.lane.b32.xlu0 %v2883, 12
        %v5054 = vpop.permute.xlu0 %5053
        %5055 = vrot.lane.b32.xlu0 %v2885, 12
        %v5056 = vpop.permute.xlu0 %5055
        %5057 = vrot.lane.b32.xlu0 %v2888, 12
        %v5058 = vpop.permute.xlu0 %5057
        %5059 = vrot.lane.b32.xlu0 %v2890, 12
        %v5060 = vpop.permute.xlu0 %5059
        %5061 = vrot.lane.b32.xlu0 %v2893, 12
        %v5062 = vpop.permute.xlu0 %5061
        %5063 = vrot.lane.b32.xlu0 %v2895, 12
        %v5064 = vpop.permute.xlu0 %5063
        %5065 = vrot.lane.b32.xlu0 %v2898, 12
        %v5066 = vpop.permute.xlu0 %5065
        %5067 = vrot.lane.b32.xlu0 %v2900, 12
        %v5068 = vpop.permute.xlu0 %5067
        %5069 = vrot.lane.b32.xlu0 %v2903, 12
        %v5070 = vpop.permute.xlu0 %5069
        %5071 = vrot.lane.b32.xlu0 %v2905, 12
        %v5072 = vpop.permute.xlu0 %5071
        %5073 = vrot.lane.b32.xlu0 %v2908, 12
        %v5074 = vpop.permute.xlu0 %5073
        %5075 = vrot.lane.b32.xlu0 %v2910, 12
        %v5076 = vpop.permute.xlu0 %5075
        %5077 = vrot.lane.b32.xlu0 %v2913, 12
        %v5078 = vpop.permute.xlu0 %5077
        %5079 = vrot.lane.b32.xlu0 %v2915, 12
        %v5080 = vpop.permute.xlu0 %5079
        %5081 = vrot.lane.b32.xlu0 %v2918, 12
        %v5082 = vpop.permute.xlu0 %5081
        %5083 = vrot.lane.b32.xlu0 %v2920, 12
        %v5084 = vpop.permute.xlu0 %5083
        %5085 = vrot.lane.b32.xlu0 %v2923, 12
        %v5086 = vpop.permute.xlu0 %5085
        %5087 = vrot.lane.b32.xlu0 %v2925, 12
        %v5088 = vpop.permute.xlu0 %5087
        %5089 = vrot.lane.b32.xlu0 %v2928, 12
        %v5090 = vpop.permute.xlu0 %5089
        %5091 = vrot.lane.b32.xlu0 %v2930, 12
        %v5092 = vpop.permute.xlu0 %5091
        %5093 = vrot.lane.b32.xlu0 %v2933, 12
        %v5094 = vpop.permute.xlu0 %5093
        %5095 = vrot.lane.b32.xlu0 %v2935, 12
        %v5096 = vpop.permute.xlu0 %5095
        %5097 = vrot.lane.b32.xlu0 %v2938, 12
        %v5098 = vpop.permute.xlu0 %5097
        %5099 = vrot.lane.b32.xlu0 %v2940, 12
        %v5100 = vpop.permute.xlu0 %5099
        %5101 = vrot.lane.b32.xlu0 %v2960, 12
        %v5102 = vpop.permute.xlu0 %5101
        %5103 = vrot.lane.b32.xlu0 %v2962, 12
        %v5104 = vpop.permute.xlu0 %5103
        %5105 = vrot.lane.b32.xlu0 %v2982, 12
        %v5106 = vpop.permute.xlu0 %5105
        %5107 = vrot.lane.b32.xlu0 %v2984, 12
        %v5108 = vpop.permute.xlu0 %5107
        %5109 = vrot.lane.b32.xlu0 %v2870, 12
        %v5110 = vpop.permute.xlu0 %5109
        %5142 = vrot.lane.b32.xlu0 %v2597, 16
        %v5143 = vpop.permute.xlu0 %5142
        %5144 = vrot.lane.b32.xlu0 %v2468, 16
        %v5145 = vpop.permute.xlu0 %5144
        %5146 = vrot.lane.b32.xlu0 %v2598, 16
        %v5147 = vpop.permute.xlu0 %5146
        %5148 = vrot.lane.b32.xlu0 %v2474, 16
        %v5149 = vpop.permute.xlu0 %5148
        %5150 = vrot.lane.b32.xlu0 %v2599, 16
        %v5151 = vpop.permute.xlu0 %5150
        %5152 = vrot.lane.b32.xlu0 %v2480, 16
        %v5153 = vpop.permute.xlu0 %5152
        %5154 = vrot.lane.b32.xlu0 %v2600, 16
        %v5155 = vpop.permute.xlu0 %5154
        %5156 = vrot.lane.b32.xlu0 %v2486, 16
        %v5157 = vpop.permute.xlu0 %5156
        %5158 = vrot.lane.b32.xlu0 %v2601, 16
        %v5159 = vpop.permute.xlu0 %5158
        %5160 = vrot.lane.b32.xlu0 %v2492, 16
        %v5161 = vpop.permute.xlu0 %5160
        %5162 = vrot.lane.b32.xlu0 %v2602, 16
        %v5163 = vpop.permute.xlu0 %5162
        %5164 = vrot.lane.b32.xlu0 %v2498, 16
        %v5165 = vpop.permute.xlu0 %5164
        %5166 = vrot.lane.b32.xlu0 %v2603, 16
        %v5167 = vpop.permute.xlu0 %5166
        %5168 = vrot.lane.b32.xlu0 %v2504, 16
        %v5169 = vpop.permute.xlu0 %5168
        %5170 = vrot.lane.b32.xlu0 %v2604, 16
        %v5171 = vpop.permute.xlu0 %5170
        %5172 = vrot.lane.b32.xlu0 %v2510, 16
        %v5173 = vpop.permute.xlu0 %5172
        %5174 = vrot.lane.b32.xlu0 %v2605, 16
        %v5175 = vpop.permute.xlu0 %5174
        %5176 = vrot.lane.b32.xlu0 %v2516, 16
        %v5177 = vpop.permute.xlu0 %5176
        %5178 = vrot.lane.b32.xlu0 %v2606, 16
        %v5179 = vpop.permute.xlu0 %5178
        %5180 = vrot.lane.b32.xlu0 %v2522, 16
        %v5181 = vpop.permute.xlu0 %5180
        %5182 = vrot.lane.b32.xlu0 %v2607, 16
        %v5183 = vpop.permute.xlu0 %5182
        %5184 = vrot.lane.b32.xlu0 %v2528, 16
        %v5185 = vpop.permute.xlu0 %5184
        %5186 = vrot.lane.b32.xlu0 %v2608, 16
        %v5187 = vpop.permute.xlu0 %5186
        %5188 = vrot.lane.b32.xlu0 %v2534, 16
        %v5189 = vpop.permute.xlu0 %5188
        %5190 = vrot.lane.b32.xlu0 %v2609, 16
        %v5191 = vpop.permute.xlu0 %5190
        %5192 = vrot.lane.b32.xlu0 %v2540, 16
        %v5193 = vpop.permute.xlu0 %5192
        %5194 = vrot.lane.b32.xlu0 %v2610, 16
        %v5195 = vpop.permute.xlu0 %5194
        %5196 = vrot.lane.b32.xlu0 %v2546, 16
        %v5197 = vpop.permute.xlu0 %5196
        %5198 = vrot.lane.b32.xlu0 0.0, 16
        %v5199 = vpop.permute.xlu0 %5198
        %5229 = vrot.lane.b32.xlu0 %v2667, 20
        %v5230 = vpop.permute.xlu0 %5229
        %5231 = vrot.lane.b32.xlu0 %v2669, 20
        %v5232 = vpop.permute.xlu0 %5231
        %5233 = vrot.lane.b32.xlu0 %v2672, 20
        %v5234 = vpop.permute.xlu0 %5233
        %5235 = vrot.lane.b32.xlu0 %v2674, 20
        %v5236 = vpop.permute.xlu0 %5235
        %5237 = vrot.lane.b32.xlu0 %v2677, 20
        %v5238 = vpop.permute.xlu0 %5237
        %5239 = vrot.lane.b32.xlu0 %v2679, 20
        %v5240 = vpop.permute.xlu0 %5239
        %5241 = vrot.lane.b32.xlu0 %v2682, 20
        %v5242 = vpop.permute.xlu0 %5241
        %5243 = vrot.lane.b32.xlu0 %v2684, 20
        %v5244 = vpop.permute.xlu0 %5243
        %5245 = vrot.lane.b32.xlu0 %v2687, 20
        %v5246 = vpop.permute.xlu0 %5245
        %5247 = vrot.lane.b32.xlu0 %v2689, 20
        %v5248 = vpop.permute.xlu0 %5247
        %5249 = vrot.lane.b32.xlu0 %v2692, 20
        %v5250 = vpop.permute.xlu0 %5249
        %5251 = vrot.lane.b32.xlu0 %v2694, 20
        %v5252 = vpop.permute.xlu0 %5251
        %5253 = vrot.lane.b32.xlu0 %v2697, 20
        %v5254 = vpop.permute.xlu0 %5253
        %5255 = vrot.lane.b32.xlu0 %v2699, 20
        %v5256 = vpop.permute.xlu0 %5255
        %5257 = vrot.lane.b32.xlu0 %v2702, 20
        %v5258 = vpop.permute.xlu0 %5257
        %5259 = vrot.lane.b32.xlu0 %v2704, 20
        %v5260 = vpop.permute.xlu0 %5259
        %5261 = vrot.lane.b32.xlu0 %v2707, 20
        %v5262 = vpop.permute.xlu0 %5261
        %5263 = vrot.lane.b32.xlu0 %v2709, 20
        %v5264 = vpop.permute.xlu0 %5263
        %5265 = vrot.lane.b32.xlu0 %v2712, 20
        %v5266 = vpop.permute.xlu0 %5265
        %5267 = vrot.lane.b32.xlu0 %v2714, 20
        %v5268 = vpop.permute.xlu0 %5267
        %5269 = vrot.lane.b32.xlu0 %v2717, 20
        %v5270 = vpop.permute.xlu0 %5269
        %5271 = vrot.lane.b32.xlu0 %v2719, 20
        %v5272 = vpop.permute.xlu0 %5271
        %5273 = vrot.lane.b32.xlu0 %v2722, 20
        %v5274 = vpop.permute.xlu0 %5273
        %5275 = vrot.lane.b32.xlu0 %v2724, 20
        %v5276 = vpop.permute.xlu0 %5275
        %5277 = vrot.lane.b32.xlu0 %v2945, 20
        %v5278 = vpop.permute.xlu0 %5277
        %5279 = vrot.lane.b32.xlu0 %v2947, 20
        %v5280 = vpop.permute.xlu0 %5279
        %5281 = vrot.lane.b32.xlu0 %v2967, 20
        %v5282 = vpop.permute.xlu0 %5281
        %5283 = vrot.lane.b32.xlu0 %v2969, 20
        %v5284 = vpop.permute.xlu0 %5283
        %5285 = vrot.lane.b32.xlu0 %v929, 20
        %v5286 = vpop.permute.xlu0 %5285
        %5316 = vrot.lane.b32.xlu0 %v2737, 24
        %v5317 = vpop.permute.xlu0 %5316
        %5318 = vrot.lane.b32.xlu0 %v2739, 24
        %v5319 = vpop.permute.xlu0 %5318
        %5320 = vrot.lane.b32.xlu0 %v2742, 24
        %v5321 = vpop.permute.xlu0 %5320
        %5322 = vrot.lane.b32.xlu0 %v2744, 24
        %v5323 = vpop.permute.xlu0 %5322
        %5324 = vrot.lane.b32.xlu0 %v2747, 24
        %v5325 = vpop.permute.xlu0 %5324
        %5326 = vrot.lane.b32.xlu0 %v2749, 24
        %v5327 = vpop.permute.xlu0 %5326
        %5328 = vrot.lane.b32.xlu0 %v2752, 24
        %v5329 = vpop.permute.xlu0 %5328
        %5330 = vrot.lane.b32.xlu0 %v2754, 24
        %v5331 = vpop.permute.xlu0 %5330
        %5332 = vrot.lane.b32.xlu0 %v2757, 24
        %v5333 = vpop.permute.xlu0 %5332
        %5334 = vrot.lane.b32.xlu0 %v2759, 24
        %v5335 = vpop.permute.xlu0 %5334
        %5336 = vrot.lane.b32.xlu0 %v2762, 24
        %v5337 = vpop.permute.xlu0 %5336
        %5338 = vrot.lane.b32.xlu0 %v2764, 24
        %v5339 = vpop.permute.xlu0 %5338
        %5340 = vrot.lane.b32.xlu0 %v2767, 24
        %v5341 = vpop.permute.xlu0 %5340
        %5342 = vrot.lane.b32.xlu0 %v2769, 24
        %v5343 = vpop.permute.xlu0 %5342
        %5344 = vrot.lane.b32.xlu0 %v2772, 24
        %v5345 = vpop.permute.xlu0 %5344
        %5346 = vrot.lane.b32.xlu0 %v2774, 24
        %v5347 = vpop.permute.xlu0 %5346
        %5348 = vrot.lane.b32.xlu0 %v2777, 24
        %v5349 = vpop.permute.xlu0 %5348
        %5350 = vrot.lane.b32.xlu0 %v2779, 24
        %v5351 = vpop.permute.xlu0 %5350
        %5352 = vrot.lane.b32.xlu0 %v2782, 24
        %v5353 = vpop.permute.xlu0 %5352
        %5354 = vrot.lane.b32.xlu0 %v2784, 24
        %v5355 = vpop.permute.xlu0 %5354
        %5356 = vrot.lane.b32.xlu0 %v2787, 24
        %v5357 = vpop.permute.xlu0 %5356
        %5358 = vrot.lane.b32.xlu0 %v2789, 24
        %v5359 = vpop.permute.xlu0 %5358
        %5360 = vrot.lane.b32.xlu0 %v2792, 24
        %v5361 = vpop.permute.xlu0 %5360
        %5362 = vrot.lane.b32.xlu0 %v2794, 24
        %v5363 = vpop.permute.xlu0 %5362
        %5364 = vrot.lane.b32.xlu0 %v2950, 24
        %v5365 = vpop.permute.xlu0 %5364
        %5366 = vrot.lane.b32.xlu0 %v2952, 24
        %v5367 = vpop.permute.xlu0 %5366
        %5368 = vrot.lane.b32.xlu0 %v2972, 24
        %v5369 = vpop.permute.xlu0 %5368
        %5370 = vrot.lane.b32.xlu0 %v2974, 24
        %v5371 = vpop.permute.xlu0 %5370
        %5372 = vrot.lane.b32.xlu0 %v1007, 24
        %v5373 = vpop.permute.xlu0 %5372
        %5403 = vrot.lane.b32.xlu0 %v2810, 28
        %v5404 = vpop.permute.xlu0 %5403
        %5405 = vrot.lane.b32.xlu0 %v2812, 28
        %v5406 = vpop.permute.xlu0 %5405
        %5407 = vrot.lane.b32.xlu0 %v2815, 28
        %v5408 = vpop.permute.xlu0 %5407
        %5409 = vrot.lane.b32.xlu0 %v2817, 28
        %v5410 = vpop.permute.xlu0 %5409
        %5411 = vrot.lane.b32.xlu0 %v2820, 28
        %v5412 = vpop.permute.xlu0 %5411
        %5413 = vrot.lane.b32.xlu0 %v2822, 28
        %v5414 = vpop.permute.xlu0 %5413
        %5415 = vrot.lane.b32.xlu0 %v2825, 28
        %v5416 = vpop.permute.xlu0 %5415
        %5417 = vrot.lane.b32.xlu0 %v2827, 28
        %v5418 = vpop.permute.xlu0 %5417
        %5419 = vrot.lane.b32.xlu0 %v2830, 28
        %v5420 = vpop.permute.xlu0 %5419
        %5421 = vrot.lane.b32.xlu0 %v2832, 28
        %v5422 = vpop.permute.xlu0 %5421
        %5423 = vrot.lane.b32.xlu0 %v2835, 28
        %v5424 = vpop.permute.xlu0 %5423
        %5425 = vrot.lane.b32.xlu0 %v2837, 28
        %v5426 = vpop.permute.xlu0 %5425
        %5427 = vrot.lane.b32.xlu0 %v2840, 28
        %v5428 = vpop.permute.xlu0 %5427
        %5429 = vrot.lane.b32.xlu0 %v2842, 28
        %v5430 = vpop.permute.xlu0 %5429
        %5431 = vrot.lane.b32.xlu0 %v2845, 28
        %v5432 = vpop.permute.xlu0 %5431
        %5433 = vrot.lane.b32.xlu0 %v2847, 28
        %v5434 = vpop.permute.xlu0 %5433
        %5435 = vrot.lane.b32.xlu0 %v2850, 28
        %v5436 = vpop.permute.xlu0 %5435
        %5437 = vrot.lane.b32.xlu0 %v2852, 28
        %v5438 = vpop.permute.xlu0 %5437
        %5439 = vrot.lane.b32.xlu0 %v2855, 28
        %v5440 = vpop.permute.xlu0 %5439
        %5441 = vrot.lane.b32.xlu0 %v2857, 28
        %v5442 = vpop.permute.xlu0 %5441
        %5443 = vrot.lane.b32.xlu0 %v2860, 28
        %v5444 = vpop.permute.xlu0 %5443
        %5445 = vrot.lane.b32.xlu0 %v2862, 28
        %v5446 = vpop.permute.xlu0 %5445
        %5447 = vrot.lane.b32.xlu0 %v2865, 28
        %v5448 = vpop.permute.xlu0 %5447
        %5449 = vrot.lane.b32.xlu0 %v2867, 28
        %v5450 = vpop.permute.xlu0 %5449
        %5451 = vrot.lane.b32.xlu0 %v2955, 28
        %v5452 = vpop.permute.xlu0 %5451
        %5453 = vrot.lane.b32.xlu0 %v2957, 28
        %v5454 = vpop.permute.xlu0 %5453
        %5455 = vrot.lane.b32.xlu0 %v2977, 28
        %v5456 = vpop.permute.xlu0 %5455
        %5457 = vrot.lane.b32.xlu0 %v2979, 28
        %v5458 = vpop.permute.xlu0 %5457
        %5459 = vrot.lane.b32.xlu0 %v2797, 28
        %v5460 = vpop.permute.xlu0 %5459
        %5490 = vrot.lane.b32.xlu0 %v2883, 32
        %v5491 = vpop.permute.xlu0 %5490
        %5492 = vrot.lane.b32.xlu0 %v2885, 32
        %v5493 = vpop.permute.xlu0 %5492
        %5494 = vrot.lane.b32.xlu0 %v2888, 32
        %v5495 = vpop.permute.xlu0 %5494
        %5496 = vrot.lane.b32.xlu0 %v2890, 32
        %v5497 = vpop.permute.xlu0 %5496
        %5498 = vrot.lane.b32.xlu0 %v2893, 32
        %v5499 = vpop.permute.xlu0 %5498
        %5500 = vrot.lane.b32.xlu0 %v2895, 32
        %v5501 = vpop.permute.xlu0 %5500
        %5502 = vrot.lane.b32.xlu0 %v2898, 32
        %v5503 = vpop.permute.xlu0 %5502
        %5504 = vrot.lane.b32.xlu0 %v2900, 32
        %v5505 = vpop.permute.xlu0 %5504
        %5506 = vrot.lane.b32.xlu0 %v2903, 32
        %v5507 = vpop.permute.xlu0 %5506
        %5508 = vrot.lane.b32.xlu0 %v2905, 32
        %v5509 = vpop.permute.xlu0 %5508
        %5510 = vrot.lane.b32.xlu0 %v2908, 32
        %v5511 = vpop.permute.xlu0 %5510
        %5512 = vrot.lane.b32.xlu0 %v2910, 32
        %v5513 = vpop.permute.xlu0 %5512
        %5514 = vrot.lane.b32.xlu0 %v2913, 32
        %v5515 = vpop.permute.xlu0 %5514
        %5516 = vrot.lane.b32.xlu0 %v2915, 32
        %v5517 = vpop.permute.xlu0 %5516
        %5518 = vrot.lane.b32.xlu0 %v2918, 32
        %v5519 = vpop.permute.xlu0 %5518
        %5520 = vrot.lane.b32.xlu0 %v2920, 32
        %v5521 = vpop.permute.xlu0 %5520
        %5522 = vrot.lane.b32.xlu0 %v2923, 32
        %v5523 = vpop.permute.xlu0 %5522
        %5524 = vrot.lane.b32.xlu0 %v2925, 32
        %v5525 = vpop.permute.xlu0 %5524
        %5526 = vrot.lane.b32.xlu0 %v2928, 32
        %v5527 = vpop.permute.xlu0 %5526
        %5528 = vrot.lane.b32.xlu0 %v2930, 32
        %v5529 = vpop.permute.xlu0 %5528
        %5530 = vrot.lane.b32.xlu0 %v2933, 32
        %v5531 = vpop.permute.xlu0 %5530
        %5532 = vrot.lane.b32.xlu0 %v2935, 32
        %v5533 = vpop.permute.xlu0 %5532
        %5534 = vrot.lane.b32.xlu0 %v2938, 32
        %v5535 = vpop.permute.xlu0 %5534
        %5536 = vrot.lane.b32.xlu0 %v2940, 32
        %v5537 = vpop.permute.xlu0 %5536
        %5538 = vrot.lane.b32.xlu0 %v2960, 32
        %v5539 = vpop.permute.xlu0 %5538
        %5540 = vrot.lane.b32.xlu0 %v2962, 32
        %v5541 = vpop.permute.xlu0 %5540
        %5542 = vrot.lane.b32.xlu0 %v2982, 32
        %v5543 = vpop.permute.xlu0 %5542
        %5544 = vrot.lane.b32.xlu0 %v2984, 32
        %v5545 = vpop.permute.xlu0 %5544
        %5546 = vrot.lane.b32.xlu0 %v2870, 32
        %v5547 = vpop.permute.xlu0 %5546
        %v5577 = vsel %vm388, %v2662, %v4864
        %v5578 = vsel %vm388, %v2664, %v4866
        %v5579 = vsel %vm388, %v2667, %v4868
        %v5580 = vsel %vm388, %v2669, %v4870
        %v5581 = vsel %vm388, %v2672, %v4872
        %v5582 = vsel %vm388, %v2674, %v4874
        %v5583 = vsel %vm388, %v2677, %v4876
        %v5584 = vsel %vm388, %v2679, %v4878
        %v5585 = vsel %vm388, %v2682, %v4880
        %v5586 = vsel %vm388, %v2684, %v4882
        %v5587 = vsel %vm388, %v2687, %v4884
        %v5588 = vsel %vm388, %v2689, %v4886
        %v5589 = vsel %vm388, %v2692, %v4888
        %v5590 = vsel %vm388, %v2694, %v4890
        %v5591 = vsel %vm388, %v2697, %v4892
        %v5592 = vsel %vm388, %v2699, %v4894
        %v5593 = vsel %vm388, %v2702, %v4896
        %v5594 = vsel %vm388, %v2704, %v4898
        %v5595 = vsel %vm388, %v2707, %v4900
        %v5596 = vsel %vm388, %v2709, %v4902
        %v5597 = vsel %vm388, %v2712, %v4904
        %v5598 = vsel %vm388, %v2714, %v4906
        %v5599 = vsel %vm388, %v2717, %v4908
        %v5600 = vsel %vm388, %v2719, %v4910
        %v5601 = vsel %vm388, %v2722, %v4912
        %v5602 = vsel %vm388, %v2724, %v4914
        %v5603 = vsel %vm388, %v2945, %v4916
        %v5604 = vsel %vm388, %v2947, %v4918
        %v5605 = vsel %vm388, %v2967, %v4920
        %v5606 = vsel %vm388, %v2969, %v4922
        %v5607 = vsel %vm388, %v929, %v4924
        %v5608 = vsel %vm1879, %v5577, %v4957
        %v5609 = vsel %vm1879, %v5578, %v4959
        %v5610 = vsel %vm1879, %v5579, %v4961
        %v5611 = vsel %vm1879, %v5580, %v4963
        %v5612 = vsel %vm1879, %v5581, %v4965
        %v5613 = vsel %vm1879, %v5582, %v4967
        %v5614 = vsel %vm1879, %v5583, %v4969
        %v5615 = vsel %vm1879, %v5584, %v4971
        %v5616 = vsel %vm1879, %v5585, %v4973
        %v5617 = vsel %vm1879, %v5586, %v4975
        %v5618 = vsel %vm1879, %v5587, %v4977
        %v5619 = vsel %vm1879, %v5588, %v4979
        %v5620 = vsel %vm1879, %v5589, %v4981
        %v5621 = vsel %vm1879, %v5590, %v4983
        %v5622 = vsel %vm1879, %v5591, %v4985
        %v5623 = vsel %vm1879, %v5592, %v4987
        %v5624 = vsel %vm1879, %v5593, %v4989
        %v5625 = vsel %vm1879, %v5594, %v4991
        %v5626 = vsel %vm1879, %v5595, %v4993
        %v5627 = vsel %vm1879, %v5596, %v4995
        %v5628 = vsel %vm1879, %v5597, %v4997
        %v5629 = vsel %vm1879, %v5598, %v4999
        %v5630 = vsel %vm1879, %v5599, %v5001
        %v5631 = vsel %vm1879, %v5600, %v5003
        %v5632 = vsel %vm1879, %v5601, %v5005
        %v5633 = vsel %vm1879, %v5602, %v5007
        %v5634 = vsel %vm1879, %v5603, %v5009
        %v5635 = vsel %vm1879, %v5604, %v5011
        %v5636 = vsel %vm1879, %v5605, %v5013
        %v5637 = vsel %vm1879, %v5606, %v5015
        %v5638 = vsel %vm1879, %v5607, %v5017
        %v5639 = vsel %vm1911, %v5608, %v5050
        %v5640 = vsel %vm1911, %v5609, %v5052
        %v5641 = vsel %vm1911, %v5610, %v5054
        %v5642 = vsel %vm1911, %v5611, %v5056
        %v5643 = vsel %vm1911, %v5612, %v5058
        %v5644 = vsel %vm1911, %v5613, %v5060
        %v5645 = vsel %vm1911, %v5614, %v5062
        %v5646 = vsel %vm1911, %v5615, %v5064
        %v5647 = vsel %vm1911, %v5616, %v5066
        %v5648 = vsel %vm1911, %v5617, %v5068
        %v5649 = vsel %vm1911, %v5618, %v5070
        %v5650 = vsel %vm1911, %v5619, %v5072
        %v5651 = vsel %vm1911, %v5620, %v5074
        %v5652 = vsel %vm1911, %v5621, %v5076
        %v5653 = vsel %vm1911, %v5622, %v5078
        %v5654 = vsel %vm1911, %v5623, %v5080
        %v5655 = vsel %vm1911, %v5624, %v5082
        %v5656 = vsel %vm1911, %v5625, %v5084
        %v5657 = vsel %vm1911, %v5626, %v5086
        %v5658 = vsel %vm1911, %v5627, %v5088
        %v5659 = vsel %vm1911, %v5628, %v5090
        %v5660 = vsel %vm1911, %v5629, %v5092
        %v5661 = vsel %vm1911, %v5630, %v5094
        %v5662 = vsel %vm1911, %v5631, %v5096
        %v5663 = vsel %vm1911, %v5632, %v5098
        %v5664 = vsel %vm1911, %v5633, %v5100
        %v5665 = vsel %vm1911, %v5634, %v5102
        %v5666 = vsel %vm1911, %v5635, %v5104
        %v5667 = vsel %vm1911, %v5636, %v5106
        %v5668 = vsel %vm1911, %v5637, %v5108
        %v5669 = vsel %vm1911, %v5638, %v5110
        %v5670 = vsel %vm1944, %v5639, %v5143
        %v5671 = vsel %vm1944, %v5640, %v5145
        %v5672 = vsel %vm1944, %v5641, %v5147
        %v5673 = vsel %vm1944, %v5642, %v5149
        %v5674 = vsel %vm1944, %v5643, %v5151
        %v5675 = vsel %vm1944, %v5644, %v5153
        %v5676 = vsel %vm1944, %v5645, %v5155
        %v5677 = vsel %vm1944, %v5646, %v5157
        %v5678 = vsel %vm1944, %v5647, %v5159
        %v5679 = vsel %vm1944, %v5648, %v5161
        %v5680 = vsel %vm1944, %v5649, %v5163
        %v5681 = vsel %vm1944, %v5650, %v5165
        %v5682 = vsel %vm1944, %v5651, %v5167
        %v5683 = vsel %vm1944, %v5652, %v5169
        %v5684 = vsel %vm1944, %v5653, %v5171
        %v5685 = vsel %vm1944, %v5654, %v5173
        %v5686 = vsel %vm1944, %v5655, %v5175
        %v5687 = vsel %vm1944, %v5656, %v5177
        %v5688 = vsel %vm1944, %v5657, %v5179
        %v5689 = vsel %vm1944, %v5658, %v5181
        %v5690 = vsel %vm1944, %v5659, %v5183
        %v5691 = vsel %vm1944, %v5660, %v5185
        %v5692 = vsel %vm1944, %v5661, %v5187
        %v5693 = vsel %vm1944, %v5662, %v5189
        %v5694 = vsel %vm1944, %v5663, %v5191
        %v5695 = vsel %vm1944, %v5664, %v5193
        %v5696 = vsel %vm1944, %v5665, %v5195
        %v5697 = vsel %vm1944, %v5666, %v5197
        %v5698 = vsel %vm1944, %v5667, %v5199
        %v5699 = vsel %vm1944, %v5668, %v5199
        %v5700 = vsel %vm1944, %v5669, %v5199
        %v5701 = vsel %vm1977, %v5670, %v5230
        %v5702 = vsel %vm1977, %v5671, %v5232
        %v5703 = vsel %vm1977, %v5672, %v5234
        %v5704 = vsel %vm1977, %v5673, %v5236
        %v5705 = vsel %vm1977, %v5674, %v5238
        %v5706 = vsel %vm1977, %v5675, %v5240
        %v5707 = vsel %vm1977, %v5676, %v5242
        %v5708 = vsel %vm1977, %v5677, %v5244
        %v5709 = vsel %vm1977, %v5678, %v5246
        %v5710 = vsel %vm1977, %v5679, %v5248
        %v5711 = vsel %vm1977, %v5680, %v5250
        %v5712 = vsel %vm1977, %v5681, %v5252
        %v5713 = vsel %vm1977, %v5682, %v5254
        %v5714 = vsel %vm1977, %v5683, %v5256
        %v5715 = vsel %vm1977, %v5684, %v5258
        %v5716 = vsel %vm1977, %v5685, %v5260
        %v5717 = vsel %vm1977, %v5686, %v5262
        %v5718 = vsel %vm1977, %v5687, %v5264
        %v5719 = vsel %vm1977, %v5688, %v5266
        %v5720 = vsel %vm1977, %v5689, %v5268
        %v5721 = vsel %vm1977, %v5690, %v5270
        %v5722 = vsel %vm1977, %v5691, %v5272
        %v5723 = vsel %vm1977, %v5692, %v5274
        %v5724 = vsel %vm1977, %v5693, %v5276
        %v5725 = vsel %vm1977, %v5694, %v5278
        %v5726 = vsel %vm1977, %v5695, %v5280
        %v5727 = vsel %vm1977, %v5696, %v5282
        %v5728 = vsel %vm1977, %v5697, %v5284
        %v5729 = vsel %vm1977, %v5698, %v5286
        %v5730 = vsel %vm1977, %v5699, %v5286
        %v5731 = vsel %vm1977, %v5700, %v5286
        %v5732 = vsel %vm2010, %v5701, %v5317
        %v5733 = vsel %vm2010, %v5702, %v5319
        %v5734 = vsel %vm2010, %v5703, %v5321
        %v5735 = vsel %vm2010, %v5704, %v5323
        %v5736 = vsel %vm2010, %v5705, %v5325
        %v5737 = vsel %vm2010, %v5706, %v5327
        %v5738 = vsel %vm2010, %v5707, %v5329
        %v5739 = vsel %vm2010, %v5708, %v5331
        %v5740 = vsel %vm2010, %v5709, %v5333
        %v5741 = vsel %vm2010, %v5710, %v5335
        %v5742 = vsel %vm2010, %v5711, %v5337
        %v5743 = vsel %vm2010, %v5712, %v5339
        %v5744 = vsel %vm2010, %v5713, %v5341
        %v5745 = vsel %vm2010, %v5714, %v5343
        %v5746 = vsel %vm2010, %v5715, %v5345
        %v5747 = vsel %vm2010, %v5716, %v5347
        %v5748 = vsel %vm2010, %v5717, %v5349
        %v5749 = vsel %vm2010, %v5718, %v5351
        %v5750 = vsel %vm2010, %v5719, %v5353
        %v5751 = vsel %vm2010, %v5720, %v5355
        %v5752 = vsel %vm2010, %v5721, %v5357
        %v5753 = vsel %vm2010, %v5722, %v5359
        %v5754 = vsel %vm2010, %v5723, %v5361
        %v5755 = vsel %vm2010, %v5724, %v5363
        %v5756 = vsel %vm2010, %v5725, %v5365
        %v5757 = vsel %vm2010, %v5726, %v5367
        %v5758 = vsel %vm2010, %v5727, %v5369
        %v5759 = vsel %vm2010, %v5728, %v5371
        %v5760 = vsel %vm2010, %v5729, %v5373
        %v5761 = vsel %vm2010, %v5730, %v5373
        %v5762 = vsel %vm2010, %v5731, %v5373
        %v5763 = vsel %vm2043, %v5732, %v5404
        %v5764 = vsel %vm2043, %v5733, %v5406
        %v5765 = vsel %vm2043, %v5734, %v5408
        %v5766 = vsel %vm2043, %v5735, %v5410
        %v5767 = vsel %vm2043, %v5736, %v5412
        %v5768 = vsel %vm2043, %v5737, %v5414
        %v5769 = vsel %vm2043, %v5738, %v5416
        %v5770 = vsel %vm2043, %v5739, %v5418
        %v5771 = vsel %vm2043, %v5740, %v5420
        %v5772 = vsel %vm2043, %v5741, %v5422
        %v5773 = vsel %vm2043, %v5742, %v5424
        %v5774 = vsel %vm2043, %v5743, %v5426
        %v5775 = vsel %vm2043, %v5744, %v5428
        %v5776 = vsel %vm2043, %v5745, %v5430
        %v5777 = vsel %vm2043, %v5746, %v5432
        %v5778 = vsel %vm2043, %v5747, %v5434
        %v5779 = vsel %vm2043, %v5748, %v5436
        %v5780 = vsel %vm2043, %v5749, %v5438
        %v5781 = vsel %vm2043, %v5750, %v5440
        %v5782 = vsel %vm2043, %v5751, %v5442
        %v5783 = vsel %vm2043, %v5752, %v5444
        %v5784 = vsel %vm2043, %v5753, %v5446
        %v5785 = vsel %vm2043, %v5754, %v5448
        %v5786 = vsel %vm2043, %v5755, %v5450
        %v5787 = vsel %vm2043, %v5756, %v5452
        %v5788 = vsel %vm2043, %v5757, %v5454
        %v5789 = vsel %vm2043, %v5758, %v5456
        %v5790 = vsel %vm2043, %v5759, %v5458
        %v5791 = vsel %vm2043, %v5760, %v5460
        %v5792 = vsel %vm2043, %v5761, %v5460
        %v5793 = vsel %vm2043, %v5762, %v5460
        %v5794 = vsel %vm2076, %v5763, %v5491
        %v5795 = vsel %vm2076, %v5764, %v5493
        %v5796 = vsel %vm2076, %v5765, %v5495
        %v5797 = vsel %vm2076, %v5766, %v5497
        %v5798 = vsel %vm2076, %v5767, %v5499
        %v5799 = vsel %vm2076, %v5768, %v5501
        %v5800 = vsel %vm2076, %v5769, %v5503
        %v5801 = vsel %vm2076, %v5770, %v5505
        %v5802 = vsel %vm2076, %v5771, %v5507
        %v5803 = vsel %vm2076, %v5772, %v5509
        %v5804 = vsel %vm2076, %v5773, %v5511
        %v5805 = vsel %vm2076, %v5774, %v5513
        %v5806 = vsel %vm2076, %v5775, %v5515
        %v5807 = vsel %vm2076, %v5776, %v5517
        %v5808 = vsel %vm2076, %v5777, %v5519
        %v5809 = vsel %vm2076, %v5778, %v5521
        %v5810 = vsel %vm2076, %v5779, %v5523
        %v5811 = vsel %vm2076, %v5780, %v5525
        %v5812 = vsel %vm2076, %v5781, %v5527
        %v5813 = vsel %vm2076, %v5782, %v5529
        %v5814 = vsel %vm2076, %v5783, %v5531
        %v5815 = vsel %vm2076, %v5784, %v5533
        %v5816 = vsel %vm2076, %v5785, %v5535
        %v5817 = vsel %vm2076, %v5786, %v5537
        %v5818 = vsel %vm2076, %v5787, %v5539
        %v5819 = vsel %vm2076, %v5788, %v5541
        %v5820 = vsel %vm2076, %v5789, %v5543
        %v5821 = vsel %vm2076, %v5790, %v5545
        %v5822 = vsel %vm2076, %v5791, %v5547
        %v5823 = vsel %vm2076, %v5792, %v5547
        %v5824 = vsel %vm2076, %v5793, %v5547
        %5856 = vrot.lane.b32.xlu0 %v5794, 64
        %v5857 = vpop.permute.xlu0 %5856
        %5858 = vrot.lane.b32.xlu0 %v5795, 64
        %v5859 = vpop.permute.xlu0 %5858
        %5860 = vrot.lane.b32.xlu0 %v5796, 64
        %v5861 = vpop.permute.xlu0 %5860
        %5862 = vrot.lane.b32.xlu0 %v5797, 64
        %v5863 = vpop.permute.xlu0 %5862
        %5864 = vrot.lane.b32.xlu0 %v5798, 64
        %v5865 = vpop.permute.xlu0 %5864
        %5866 = vrot.lane.b32.xlu0 %v5799, 64
        %v5867 = vpop.permute.xlu0 %5866
        %5868 = vrot.lane.b32.xlu0 %v5800, 64
        %v5869 = vpop.permute.xlu0 %5868
        %5870 = vrot.lane.b32.xlu0 %v5801, 64
        %v5871 = vpop.permute.xlu0 %5870
        %5872 = vrot.lane.b32.xlu0 %v5802, 64
        %v5873 = vpop.permute.xlu0 %5872
        %5874 = vrot.lane.b32.xlu0 %v5803, 64
        %v5875 = vpop.permute.xlu0 %5874
        %5876 = vrot.lane.b32.xlu0 %v5804, 64
        %v5877 = vpop.permute.xlu0 %5876
        %5878 = vrot.lane.b32.xlu0 %v5805, 64
        %v5879 = vpop.permute.xlu0 %5878
        %5880 = vrot.lane.b32.xlu0 %v5806, 64
        %v5881 = vpop.permute.xlu0 %5880
        %5882 = vrot.lane.b32.xlu0 %v5807, 64
        %v5883 = vpop.permute.xlu0 %5882
        %5884 = vrot.lane.b32.xlu0 %v5808, 64
        %v5885 = vpop.permute.xlu0 %5884
        %5886 = vrot.lane.b32.xlu0 %v5809, 64
        %v5887 = vpop.permute.xlu0 %5886
        %5888 = vrot.lane.b32.xlu0 %v5810, 64
        %v5889 = vpop.permute.xlu0 %5888
        %5890 = vrot.lane.b32.xlu0 %v5811, 64
        %v5891 = vpop.permute.xlu0 %5890
        %5892 = vrot.lane.b32.xlu0 %v5812, 64
        %v5893 = vpop.permute.xlu0 %5892
        %5894 = vrot.lane.b32.xlu0 %v5813, 64
        %v5895 = vpop.permute.xlu0 %5894
        %5896 = vrot.lane.b32.xlu0 %v5814, 64
        %v5897 = vpop.permute.xlu0 %5896
        %5898 = vrot.lane.b32.xlu0 %v5815, 64
        %v5899 = vpop.permute.xlu0 %5898
        %5900 = vrot.lane.b32.xlu0 %v5816, 64
        %v5901 = vpop.permute.xlu0 %5900
        %5902 = vrot.lane.b32.xlu0 %v5817, 64
        %v5903 = vpop.permute.xlu0 %5902
        %5904 = vrot.lane.b32.xlu0 %v5818, 64
        %v5905 = vpop.permute.xlu0 %5904
        %5906 = vrot.lane.b32.xlu0 %v5819, 64
        %v5907 = vpop.permute.xlu0 %5906
        %5908 = vrot.lane.b32.xlu0 %v5820, 64
        %v5909 = vpop.permute.xlu0 %5908
        %5910 = vrot.lane.b32.xlu0 %v5821, 64
        %v5911 = vpop.permute.xlu0 %5910
        %5912 = vrot.lane.b32.xlu0 %v5822, 64
        %v5913 = vpop.permute.xlu0 %5912
        %5914 = vrot.lane.b32.xlu0 %v5823, 64
        %v5915 = vpop.permute.xlu0 %5914
        %5916 = vrot.lane.b32.xlu0 %v5824, 64
        %v5917 = vpop.permute.xlu0 %5916
        %vm5949 = vcmask 523264
        %v5950 = vsel %vm5949, %v4831, %v5857
        %v5951 = vsel %vm5949, %v4832, %v5859
        %v5952 = vsel %vm5949, %v4833, %v5861
        %v5953 = vsel %vm5949, %v4834, %v5863
        %v5954 = vsel %vm5949, %v4835, %v5865
        %v5955 = vsel %vm5949, %v4836, %v5867
        %v5956 = vsel %vm5949, %v4837, %v5869
        %v5957 = vsel %vm5949, %v4838, %v5871
        %v5958 = vsel %vm5949, %v4839, %v5873
        %v5959 = vsel %vm5949, %v4840, %v5875
        %v5960 = vsel %vm5949, %v4841, %v5877
        %v5961 = vsel %vm5949, %v4842, %v5879
        %v5962 = vsel %vm5949, %v4843, %v5881
        %v5963 = vsel %vm5949, %v4844, %v5883
        %v5964 = vsel %vm5949, %v4845, %v5885
        %v5965 = vsel %vm5949, %v4846, %v5887
        %v5966 = vsel %vm5949, %v4847, %v5889
        %v5967 = vsel %vm5949, %v4848, %v5891
        %v5968 = vsel %vm5949, %v4849, %v5893
        %v5969 = vsel %vm5949, %v4850, %v5895
        %v5970 = vsel %vm5949, %v4851, %v5897
        %v5971 = vsel %vm5949, %v4852, %v5899
        %v5972 = vsel %vm5949, %v4853, %v5901
        %v5973 = vsel %vm5949, %v4854, %v5903
        %v5974 = vsel %vm5949, %v4855, %v5905
        %v5975 = vsel %vm5949, %v4856, %v5907
        %v5976 = vsel %vm5949, %v4857, %v5909
        %v5977 = vsel %vm5949, %v4858, %v5911
        %v5978 = vsel %vm5949, %v4859, %v5913
        %v5979 = vsel %vm5949, %v4860, %v5915
        %v5980 = vsel %vm5949, %v4861, %v5917
        %v5981 = vsel %vm5949, %v4862, %v5917
        %v5982 = vpack.c.bf16 %v5951, %v5950
        %v5983 = vpack.c.bf16 %v5953, %v5952
        %v5984 = vpack.c.bf16 %v5955, %v5954
        %v5985 = vpack.c.bf16 %v5957, %v5956
        %v5986 = vpack.c.bf16 %v5959, %v5958
        %v5987 = vpack.c.bf16 %v5961, %v5960
        %v5988 = vpack.c.bf16 %v5963, %v5962
        %v5989 = vpack.c.bf16 %v5965, %v5964
        %v5990 = vpack.c.bf16 %v5967, %v5966
        %v5991 = vpack.c.bf16 %v5969, %v5968
        %v5992 = vpack.c.bf16 %v5971, %v5970
        %v5993 = vpack.c.bf16 %v5973, %v5972
        %v5994 = vpack.c.bf16 %v5975, %v5974
        %v5995 = vpack.c.bf16 %v5977, %v5976
        %v5996 = vpack.c.bf16 %v5979, %v5978
        %v5997 = vpack.c.bf16 %v5981, %v5980
        %v5999 = vlaneseq
        %v6000 = vshrl.u32 %v5999, 7
        %v6001 = vsub.s32 0, %v6000
        %v6002 = vrot.slane %v2404, %v6001
        %v6017 = vunpack.c.l.b16 %v2391
        %v6018 = vunpack.c.l.b16 %v2392
        %v6019 = vunpack.c.l.b16 %v2393
        %v6020 = vunpack.c.l.b16 %v2394
        %v6021 = vunpack.c.l.b16 %v2395
        %v6022 = vunpack.c.l.b16 %v2396
        %v6023 = vunpack.c.l.b16 %v2397
        %v6024 = vunpack.c.l.b16 %v2398
        %v6025 = vunpack.c.l.b16 %v2399
        %v6026 = vunpack.c.l.b16 %v2400
        %v6027 = vunpack.c.l.b16 %v2401
        %v6028 = vunpack.c.l.b16 %v2402
        %v6029 = vunpack.c.l.b16 %v2403
        %v6030 = vpack.c.b16 %v6018, %v6017
        %v6031 = vpack.c.b16 %v6020, %v6019
        %v6032 = vpack.c.b16 %v6022, %v6021
        %v6033 = vpack.c.b16 %v6024, %v6023
        %v6034 = vpack.c.b16 %v6026, %v6025
        %v6035 = vpack.c.b16 %v6028, %v6027
        %v6036 = vpack.c.b16 %v6029, %v6029
        %vm6043 = vcmask 818176
        %v6045 = vsel %vm6043, %v5982, 0
        %v6048 = vsel %vm6043, %v5983, 0
        %v6051 = vsel %vm6043, %v5984, 0
        %v6054 = vsel %vm6043, %v5985, 0
        %v6057 = vsel %vm6043, %v5986, 0
        %v6060 = vsel %vm6043, %v5987, 0
        %v6063 = vsel %vm6043, %v5988, 0
        %v6066 = vsel %vm6043, %v5989, 0
        %v6069 = vsel %vm6043, %v5990, 0
        %v6072 = vsel %vm6043, %v5991, 0
        %v6075 = vsel %vm6043, %v5992, 0
        %v6078 = vsel %vm6043, %v5993, 0
        %v6081 = vsel %vm6043, %v5994, 0
        %v6084 = vsel %vm6043, %v5995, 0
        %v6087 = vsel %vm6043, %v5996, 0
        %v6090 = vsel %vm6043, %v5997, 0
        %v6093 = vsel %vm437, %v6036, 0
        %6095 = vmatprep.subr.bf16.mxu0 0
        %6096 = vmatpush1.bf16.msra.mxu0 %v6030
        %6097 = vmatprep.subr.bf16.mxu0 0
        %6098 = vmatpush1.bf16.msra.mxu0 %v6031
        %6099 = vmatprep.subr.bf16.mxu0 0
        %6100 = vmatpush1.bf16.msra.mxu0 %v6032
        %6101 = vmatprep.subr.bf16.mxu0 0
        %6102 = vmatpush1.bf16.msra.mxu0 %v6033
        %6103 = vmatprep.subr.bf16.mxu0 0
        %6104 = vmatpush1.bf16.msra.mxu0 %v6034
        %6105 = vmatprep.subr.bf16.mxu0 0
        %6106 = vmatpush1.bf16.msra.mxu0 %v6035
        %6107 = vmatprep.subr.bf16.mxu0 0
        %6108 = vmatpush1.bf16.msra.mxu0 %v6093
        %6109 = vmatprep.subr.bf16.mxu0 0
        %6110 = vmatpush1.bf16.msra.mxu0 0
        %6111 = vmatprep.subr.bf16.mxu0 0
        %6112 = vmatpush1.bf16.msra.mxu0 0
        %6113 = vmatprep.subr.bf16.mxu0 0
        %6114 = vmatpush1.bf16.msra.mxu0 0
        %6115 = vmatprep.subr.bf16.mxu0 0
        %6116 = vmatpush1.bf16.msra.mxu0 0
        %6117 = vmatprep.subr.bf16.mxu0 0
        %6118 = vmatpush1.bf16.msra.mxu0 0
        %6119 = vmatprep.subr.bf16.mxu0 0
        %6120 = vmatpush1.bf16.msra.mxu0 0
        %6121 = vmatprep.subr.bf16.mxu0 0
        %6122 = vmatpush1.bf16.msra.mxu0 0
        %6123 = vmatprep.subr.bf16.mxu0 0
        %6124 = vmatpush1.bf16.msra.mxu0 0
        %6125 = vmatprep.subr.bf16.mxu0 0
        %6126 = vmatpush1.bf16.msra.mxu0 0
        %6127 = vmatprep.mubr.bf16.mxu0 0
        %6128 = vmatmul.mubr.bf16.gmra.mrb[0].mxu0 %v6045
        %v6129 = vpop.f32.mrb[0].mxu0
        %v6130 = vadd.f32 %v6002, %v6129
        %v6131 = vpop.f32.mrb[0].mxu0
        %v6132 = vpop.f32.mrb[0].mxu0
        %v6133 = vadd.f32 %v6002, %v6132
        %v6134 = vpop.f32.mrb[0].mxu0
        %6135 = vmatprep.mubr.bf16.mxu0 0
        %6136 = vmatmul.mubr.bf16.gmra.mrb[0].mxu0 %v6048
        %v6137 = vpop.f32.mrb[0].mxu0
        %v6138 = vadd.f32 %v6002, %v6137
        %v6139 = vpop.f32.mrb[0].mxu0
        %v6140 = vpop.f32.mrb[0].mxu0
        %v6141 = vadd.f32 %v6002, %v6140
        %v6142 = vpop.f32.mrb[0].mxu0
        %6143 = vmatprep.mubr.bf16.mxu0 0
        %6144 = vmatmul.mubr.bf16.gmra.mrb[0].mxu0 %v6051
        %v6145 = vpop.f32.mrb[0].mxu0
        %v6146 = vadd.f32 %v6002, %v6145
        %v6147 = vpop.f32.mrb[0].mxu0
        %v6148 = vpop.f32.mrb[0].mxu0
        %v6149 = vadd.f32 %v6002, %v6148
        %v6150 = vpop.f32.mrb[0].mxu0
        %6151 = vmatprep.mubr.bf16.mxu0 0
        %6152 = vmatmul.mubr.bf16.gmra.mrb[0].mxu0 %v6054
        %v6153 = vpop.f32.mrb[0].mxu0
        %v6154 = vadd.f32 %v6002, %v6153
        %v6155 = vpop.f32.mrb[0].mxu0
        %v6156 = vpop.f32.mrb[0].mxu0
        %v6157 = vadd.f32 %v6002, %v6156
        %v6158 = vpop.f32.mrb[0].mxu0
        %6159 = vmatprep.mubr.bf16.mxu0 0
        %6160 = vmatmul.mubr.bf16.gmra.mrb[0].mxu0 %v6057
        %v6161 = vpop.f32.mrb[0].mxu0
        %v6162 = vadd.f32 %v6002, %v6161
        %v6163 = vpop.f32.mrb[0].mxu0
        %v6164 = vpop.f32.mrb[0].mxu0
        %v6165 = vadd.f32 %v6002, %v6164
        %v6166 = vpop.f32.mrb[0].mxu0
        %6167 = vmatprep.mubr.bf16.mxu0 0
        %6168 = vmatmul.mubr.bf16.gmra.mrb[0].mxu0 %v6060
        %v6169 = vpop.f32.mrb[0].mxu0
        %v6170 = vadd.f32 %v6002, %v6169
        %v6171 = vpop.f32.mrb[0].mxu0
        %v6172 = vpop.f32.mrb[0].mxu0
        %v6173 = vadd.f32 %v6002, %v6172
        %v6174 = vpop.f32.mrb[0].mxu0
        %6175 = vmatprep.mubr.bf16.mxu0 0
        %6176 = vmatmul.mubr.bf16.gmra.mrb[0].mxu0 %v6063
        %v6177 = vpop.f32.mrb[0].mxu0
        %v6178 = vadd.f32 %v6002, %v6177
        %v6179 = vpop.f32.mrb[0].mxu0
        %v6180 = vpop.f32.mrb[0].mxu0
        %v6181 = vadd.f32 %v6002, %v6180
        %v6182 = vpop.f32.mrb[0].mxu0
        %6183 = vmatprep.mubr.bf16.mxu0 0
        %6184 = vmatmul.mubr.bf16.gmra.mrb[0].mxu0 %v6066
        %v6185 = vpop.f32.mrb[0].mxu0
        %v6186 = vadd.f32 %v6002, %v6185
        %v6187 = vpop.f32.mrb[0].mxu0
        %v6188 = vpop.f32.mrb[0].mxu0
        %v6189 = vadd.f32 %v6002, %v6188
        %v6190 = vpop.f32.mrb[0].mxu0
        %6191 = vmatprep.mubr.bf16.mxu0 0
        %6192 = vmatmul.mubr.bf16.gmra.mrb[0].mxu0 %v6069
        %v6193 = vpop.f32.mrb[0].mxu0
        %v6194 = vadd.f32 %v6002, %v6193
        %v6195 = vpop.f32.mrb[0].mxu0
        %v6196 = vpop.f32.mrb[0].mxu0
        %v6197 = vadd.f32 %v6002, %v6196
        %v6198 = vpop.f32.mrb[0].mxu0
        %6199 = vmatprep.mubr.bf16.mxu0 0
        %6200 = vmatmul.mubr.bf16.gmra.mrb[0].mxu0 %v6072
        %v6201 = vpop.f32.mrb[0].mxu0
        %v6202 = vadd.f32 %v6002, %v6201
        %v6203 = vpop.f32.mrb[0].mxu0
        %v6204 = vpop.f32.mrb[0].mxu0
        %v6205 = vadd.f32 %v6002, %v6204
        %v6206 = vpop.f32.mrb[0].mxu0
        %6207 = vmatprep.mubr.bf16.mxu0 0
        %6208 = vmatmul.mubr.bf16.gmra.mrb[0].mxu0 %v6075
        %v6209 = vpop.f32.mrb[0].mxu0
        %v6210 = vadd.f32 %v6002, %v6209
        %v6211 = vpop.f32.mrb[0].mxu0
        %v6212 = vpop.f32.mrb[0].mxu0
        %v6213 = vadd.f32 %v6002, %v6212
        %v6214 = vpop.f32.mrb[0].mxu0
        %6215 = vmatprep.mubr.bf16.mxu0 0
        %6216 = vmatmul.mubr.bf16.gmra.mrb[0].mxu0 %v6078
        %v6217 = vpop.f32.mrb[0].mxu0
        %v6218 = vadd.f32 %v6002, %v6217
        %v6219 = vpop.f32.mrb[0].mxu0
        %v6220 = vpop.f32.mrb[0].mxu0
        %v6221 = vadd.f32 %v6002, %v6220
        %v6222 = vpop.f32.mrb[0].mxu0
        %6223 = vmatprep.mubr.bf16.mxu0 0
        %6224 = vmatmul.mubr.bf16.gmra.mrb[0].mxu0 %v6081
        %v6225 = vpop.f32.mrb[0].mxu0
        %v6226 = vadd.f32 %v6002, %v6225
        %v6227 = vpop.f32.mrb[0].mxu0
        %v6228 = vpop.f32.mrb[0].mxu0
        %v6229 = vadd.f32 %v6002, %v6228
        %v6230 = vpop.f32.mrb[0].mxu0
        %6231 = vmatprep.mubr.bf16.mxu0 0
        %6232 = vmatmul.mubr.bf16.gmra.mrb[0].mxu0 %v6084
        %v6233 = vpop.f32.mrb[0].mxu0
        %v6234 = vadd.f32 %v6002, %v6233
        %v6235 = vpop.f32.mrb[0].mxu0
        %v6236 = vpop.f32.mrb[0].mxu0
        %v6237 = vadd.f32 %v6002, %v6236
        %v6238 = vpop.f32.mrb[0].mxu0
        %6239 = vmatprep.mubr.bf16.mxu0 0
        %6240 = vmatmul.mubr.bf16.gmra.mrb[0].mxu0 %v6087
        %v6241 = vpop.f32.mrb[0].mxu0
        %v6242 = vadd.f32 %v6002, %v6241
        %v6243 = vpop.f32.mrb[0].mxu0
        %v6244 = vpop.f32.mrb[0].mxu0
        %v6245 = vadd.f32 %v6002, %v6244
        %v6246 = vpop.f32.mrb[0].mxu0
        %6247 = vmatprep.mubr.bf16.mxu0 0
        %6248 = vmatmul.mubr.bf16.gmra.mrb[0].mxu0 %v6090
        %v6249 = vpop.f32.mrb[0].mxu0
        %v6250 = vadd.f32 %v6002, %v6249
        %v6251 = vpop.f32.mrb[0].mxu0
        %v6252 = vpop.f32.mrb[0].mxu0
        %v6253 = vadd.f32 %v6002, %v6252
        %v6254 = vpop.f32.mrb[0].mxu0
        %6255 = vdwg.mxu0
        %v6256 = vmax.f32 %v6130, 0.0
        %v6257 = vmax.f32 %v6133, 0.0
        %v6258 = vmax.f32 %v6138, 0.0
        %v6259 = vmax.f32 %v6141, 0.0
        %v6260 = vmax.f32 %v6146, 0.0
        %v6261 = vmax.f32 %v6149, 0.0
        %v6262 = vmax.f32 %v6154, 0.0
        %v6263 = vmax.f32 %v6157, 0.0
        %v6264 = vmax.f32 %v6162, 0.0
        %v6265 = vmax.f32 %v6165, 0.0
        %v6266 = vmax.f32 %v6170, 0.0
        %v6267 = vmax.f32 %v6173, 0.0
        %v6268 = vmax.f32 %v6178, 0.0
        %v6269 = vmax.f32 %v6181, 0.0
        %v6270 = vmax.f32 %v6186, 0.0
        %v6271 = vmax.f32 %v6189, 0.0
        %v6272 = vmax.f32 %v6194, 0.0
        %v6273 = vmax.f32 %v6197, 0.0
        %v6274 = vmax.f32 %v6202, 0.0
        %v6275 = vmax.f32 %v6205, 0.0
        %v6276 = vmax.f32 %v6210, 0.0
        %v6277 = vmax.f32 %v6213, 0.0
        %v6278 = vmax.f32 %v6218, 0.0
        %v6279 = vmax.f32 %v6221, 0.0
        %v6280 = vmax.f32 %v6226, 0.0
        %v6281 = vmax.f32 %v6229, 0.0
        %v6282 = vmax.f32 %v6234, 0.0
        %v6283 = vmax.f32 %v6237, 0.0
        %v6284 = vmax.f32 %v6242, 0.0
        %v6285 = vmax.f32 %v6245, 0.0
        %v6286 = vmax.f32 %v6250, 0.0
        %v6287 = vmax.f32 %v6253, 0.0
        %v6320 = vrot.slane %v332, 7
        %v6321 = vrot.slane %v333, 7
        %v6322 = vsel %vm672, %v6320, %v6321
        %v6323 = vrot.slane %v334, 7
        %v6324 = vrot.slane %v335, 7
        %v6325 = vsel %vm672, %v6323, %v6324
        %v6326 = vrot.slane %v336, 7
        %v6327 = vrot.slane %v337, 7
        %v6328 = vsel %vm672, %v6326, %v6327
        %v6329 = vrot.slane %v338, 7
        %v6330 = vrot.slane %v339, 7
        %v6331 = vsel %vm672, %v6329, %v6330
        %v6332 = vrot.slane %v340, 7
        %v6333 = vrot.slane %v341, 7
        %v6334 = vsel %vm672, %v6332, %v6333
        %v6335 = vrot.slane %v342, 7
        %v6336 = vrot.slane %v343, 7
        %v6337 = vsel %vm672, %v6335, %v6336
        %v6338 = vrot.slane %v344, 7
        %v6339 = vrot.slane %v345, 7
        %v6340 = vsel %vm672, %v6338, %v6339
        %v6341 = vrot.slane %v346, 7
        %v6342 = vrot.slane %v347, 7
        %v6343 = vsel %vm672, %v6341, %v6342
        %v6344 = vrot.slane %v348, 7
        %v6345 = vrot.slane %v349, 7
        %v6346 = vsel %vm672, %v6344, %v6345
        %v6347 = vrot.slane %v350, 7
        %v6348 = vrot.slane %v351, 7
        %v6349 = vsel %vm672, %v6347, %v6348
        %v6350 = vrot.slane %v352, 7
        %v6351 = vrot.slane %v353, 7
        %v6352 = vsel %vm672, %v6350, %v6351
        %v6353 = vrot.slane %v354, 7
        %v6354 = vrot.slane %v355, 7
        %v6355 = vsel %vm672, %v6353, %v6354
        %v6356 = vrot.slane %v356, 7
        %v6357 = vrot.slane %v357, 7
        %v6358 = vsel %vm672, %v6356, %v6357
        %v6359 = vrot.slane %v358, 7
        %v6360 = vrot.slane %v359, 7
        %v6361 = vsel %vm672, %v6359, %v6360
        %v6362 = vrot.slane %v360, 7
        %v6363 = vrot.slane %v361, 7
        %v6364 = vsel %vm672, %v6362, %v6363
        %v6365 = vrot.slane %v362, 7
        %v6366 = vrot.slane %v363, 7
        %v6367 = vsel %vm672, %v6365, %v6366
        %v6416 = vsel %vm672, -inf, %v6320
        %v6417 = vsel %vm672, -inf, %v6323
        %v6418 = vsel %vm672, -inf, %v6326
        %v6419 = vsel %vm672, -inf, %v6329
        %v6420 = vsel %vm672, -inf, %v6332
        %v6421 = vsel %vm672, -inf, %v6335
        %v6422 = vsel %vm672, -inf, %v6338
        %v6423 = vsel %vm672, -inf, %v6341
        %v6424 = vsel %vm672, -inf, %v6344
        %v6425 = vsel %vm672, -inf, %v6347
        %v6426 = vsel %vm672, -inf, %v6350
        %v6427 = vsel %vm672, -inf, %v6353
        %v6428 = vsel %vm672, -inf, %v6356
        %v6429 = vsel %vm672, -inf, %v6359
        %v6430 = vsel %vm672, -inf, %v6362
        %v6431 = vsel %vm672, -inf, %v6365
        %v6432 = vsel %vm672, %v6321, -inf
        %v6433 = vsel %vm672, %v6324, -inf
        %v6434 = vsel %vm672, %v6327, -inf
        %v6435 = vsel %vm672, %v6330, -inf
        %v6436 = vsel %vm672, %v6333, -inf
        %v6437 = vsel %vm672, %v6336, -inf
        %v6438 = vsel %vm672, %v6339, -inf
        %v6439 = vsel %vm672, %v6342, -inf
        %v6440 = vsel %vm672, %v6345, -inf
        %v6441 = vsel %vm672, %v6348, -inf
        %v6442 = vsel %vm672, %v6351, -inf
        %v6443 = vsel %vm672, %v6354, -inf
        %v6444 = vsel %vm672, %v6357, -inf
        %v6445 = vsel %vm672, %v6360, -inf
        %v6446 = vsel %vm672, %v6363, -inf
        %v6447 = vsel %vm672, %v6366, -inf
        %v6481 = vrot.slane -inf, 1
        %v6482 = vsel %vm927, %v6481, %v6481
        %v6483 = vrot.slane %v6416, 1
        %v6484 = vrot.slane %v6322, 1
        %v6485 = vsel %vm927, %v6483, %v6484
        %v6486 = vrot.slane %v6432, 1
        %v6487 = vsel %vm927, %v6484, %v6486
        %v6488 = vrot.slane %v6417, 1
        %v6489 = vrot.slane %v6325, 1
        %v6490 = vsel %vm927, %v6488, %v6489
        %v6491 = vrot.slane %v6433, 1
        %v6492 = vsel %vm927, %v6489, %v6491
        %v6493 = vrot.slane %v6418, 1
        %v6494 = vrot.slane %v6328, 1
        %v6495 = vsel %vm927, %v6493, %v6494
        %v6496 = vrot.slane %v6434, 1
        %v6497 = vsel %vm927, %v6494, %v6496
        %v6498 = vrot.slane %v6419, 1
        %v6499 = vrot.slane %v6331, 1
        %v6500 = vsel %vm927, %v6498, %v6499
        %v6501 = vrot.slane %v6435, 1
        %v6502 = vsel %vm927, %v6499, %v6501
        %v6503 = vrot.slane %v6420, 1
        %v6504 = vrot.slane %v6334, 1
        %v6505 = vsel %vm927, %v6503, %v6504
        %v6506 = vrot.slane %v6436, 1
        %v6507 = vsel %vm927, %v6504, %v6506
        %v6508 = vrot.slane %v6421, 1
        %v6509 = vrot.slane %v6337, 1
        %v6510 = vsel %vm927, %v6508, %v6509
        %v6511 = vrot.slane %v6437, 1
        %v6512 = vsel %vm927, %v6509, %v6511
        %v6513 = vrot.slane %v6422, 1
        %v6514 = vrot.slane %v6340, 1
        %v6515 = vsel %vm927, %v6513, %v6514
        %v6516 = vrot.slane %v6438, 1
        %v6517 = vsel %vm927, %v6514, %v6516
        %v6518 = vrot.slane %v6423, 1
        %v6519 = vrot.slane %v6343, 1
        %v6520 = vsel %vm927, %v6518, %v6519
        %v6521 = vrot.slane %v6439, 1
        %v6522 = vsel %vm927, %v6519, %v6521
        %v6523 = vrot.slane %v6424, 1
        %v6524 = vrot.slane %v6346, 1
        %v6525 = vsel %vm927, %v6523, %v6524
        %v6526 = vrot.slane %v6440, 1
        %v6527 = vsel %vm927, %v6524, %v6526
        %v6528 = vrot.slane %v6425, 1
        %v6529 = vrot.slane %v6349, 1
        %v6530 = vsel %vm927, %v6528, %v6529
        %v6531 = vrot.slane %v6441, 1
        %v6532 = vsel %vm927, %v6529, %v6531
        %v6533 = vrot.slane %v6426, 1
        %v6534 = vrot.slane %v6352, 1
        %v6535 = vsel %vm927, %v6533, %v6534
        %v6536 = vrot.slane %v6442, 1
        %v6537 = vsel %vm927, %v6534, %v6536
        %v6538 = vrot.slane %v6427, 1
        %v6539 = vrot.slane %v6355, 1
        %v6540 = vsel %vm927, %v6538, %v6539
        %v6541 = vrot.slane %v6443, 1
        %v6542 = vsel %vm927, %v6539, %v6541
        %v6543 = vrot.slane %v6428, 1
        %v6544 = vrot.slane %v6358, 1
        %v6545 = vsel %vm927, %v6543, %v6544
        %v6546 = vrot.slane %v6444, 1
        %v6547 = vsel %vm927, %v6544, %v6546
        %v6548 = vrot.slane %v6429, 1
        %v6549 = vrot.slane %v6361, 1
        %v6550 = vsel %vm927, %v6548, %v6549
        %v6551 = vrot.slane %v6445, 1
        %v6552 = vsel %vm927, %v6549, %v6551
        %v6553 = vrot.slane %v6430, 1
        %v6554 = vrot.slane %v6364, 1
        %v6555 = vsel %vm927, %v6553, %v6554
        %v6556 = vrot.slane %v6446, 1
        %v6557 = vsel %vm927, %v6554, %v6556
        %v6558 = vrot.slane %v6431, 1
        %v6559 = vrot.slane %v6367, 1
        %v6560 = vsel %vm927, %v6558, %v6559
        %v6561 = vrot.slane %v6447, 1
        %v6562 = vsel %vm927, %v6559, %v6561
        %v6596 = vmax.f32 %v6416, %v6485
        %v6597 = vmax.f32 %v6322, %v6487
        %v6598 = vmax.f32 %v6417, %v6490
        %v6599 = vmax.f32 %v6325, %v6492
        %v6600 = vmax.f32 %v6418, %v6495
        %v6601 = vmax.f32 %v6328, %v6497
        %v6602 = vmax.f32 %v6419, %v6500
        %v6603 = vmax.f32 %v6331, %v6502
        %v6604 = vmax.f32 %v6420, %v6505
        %v6605 = vmax.f32 %v6334, %v6507
        %v6606 = vmax.f32 %v6421, %v6510
        %v6607 = vmax.f32 %v6337, %v6512
        %v6608 = vmax.f32 %v6422, %v6515
        %v6609 = vmax.f32 %v6340, %v6517
        %v6610 = vmax.f32 %v6423, %v6520
        %v6611 = vmax.f32 %v6343, %v6522
        %v6612 = vmax.f32 %v6424, %v6525
        %v6613 = vmax.f32 %v6346, %v6527
        %v6614 = vmax.f32 %v6425, %v6530
        %v6615 = vmax.f32 %v6349, %v6532
        %v6616 = vmax.f32 %v6426, %v6535
        %v6617 = vmax.f32 %v6352, %v6537
        %v6618 = vmax.f32 %v6427, %v6540
        %v6619 = vmax.f32 %v6355, %v6542
        %v6620 = vmax.f32 %v6428, %v6545
        %v6621 = vmax.f32 %v6358, %v6547
        %v6622 = vmax.f32 %v6429, %v6550
        %v6623 = vmax.f32 %v6361, %v6552
        %v6624 = vmax.f32 %v6430, %v6555
        %v6625 = vmax.f32 %v6364, %v6557
        %v6626 = vmax.f32 %v6431, %v6560
        %v6627 = vmax.f32 %v6367, %v6562
        %v6628 = vrot.slane -inf, 2
        %v6629 = vsel %vm1005, %v6628, %v6628
        %v6630 = vrot.slane %v6416, 2
        %v6631 = vrot.slane %v6322, 2
        %v6632 = vsel %vm1005, %v6630, %v6631
        %v6633 = vrot.slane %v6432, 2
        %v6634 = vsel %vm1005, %v6631, %v6633
        %v6635 = vrot.slane %v6417, 2
        %v6636 = vrot.slane %v6325, 2
        %v6637 = vsel %vm1005, %v6635, %v6636
        %v6638 = vrot.slane %v6433, 2
        %v6639 = vsel %vm1005, %v6636, %v6638
        %v6640 = vrot.slane %v6418, 2
        %v6641 = vrot.slane %v6328, 2
        %v6642 = vsel %vm1005, %v6640, %v6641
        %v6643 = vrot.slane %v6434, 2
        %v6644 = vsel %vm1005, %v6641, %v6643
        %v6645 = vrot.slane %v6419, 2
        %v6646 = vrot.slane %v6331, 2
        %v6647 = vsel %vm1005, %v6645, %v6646
        %v6648 = vrot.slane %v6435, 2
        %v6649 = vsel %vm1005, %v6646, %v6648
        %v6650 = vrot.slane %v6420, 2
        %v6651 = vrot.slane %v6334, 2
        %v6652 = vsel %vm1005, %v6650, %v6651
        %v6653 = vrot.slane %v6436, 2
        %v6654 = vsel %vm1005, %v6651, %v6653
        %v6655 = vrot.slane %v6421, 2
        %v6656 = vrot.slane %v6337, 2
        %v6657 = vsel %vm1005, %v6655, %v6656
        %v6658 = vrot.slane %v6437, 2
        %v6659 = vsel %vm1005, %v6656, %v6658
        %v6660 = vrot.slane %v6422, 2
        %v6661 = vrot.slane %v6340, 2
        %v6662 = vsel %vm1005, %v6660, %v6661
        %v6663 = vrot.slane %v6438, 2
        %v6664 = vsel %vm1005, %v6661, %v6663
        %v6665 = vrot.slane %v6423, 2
        %v6666 = vrot.slane %v6343, 2
        %v6667 = vsel %vm1005, %v6665, %v6666
        %v6668 = vrot.slane %v6439, 2
        %v6669 = vsel %vm1005, %v6666, %v6668
        %v6670 = vrot.slane %v6424, 2
        %v6671 = vrot.slane %v6346, 2
        %v6672 = vsel %vm1005, %v6670, %v6671
        %v6673 = vrot.slane %v6440, 2
        %v6674 = vsel %vm1005, %v6671, %v6673
        %v6675 = vrot.slane %v6425, 2
        %v6676 = vrot.slane %v6349, 2
        %v6677 = vsel %vm1005, %v6675, %v6676
        %v6678 = vrot.slane %v6441, 2
        %v6679 = vsel %vm1005, %v6676, %v6678
        %v6680 = vrot.slane %v6426, 2
        %v6681 = vrot.slane %v6352, 2
        %v6682 = vsel %vm1005, %v6680, %v6681
        %v6683 = vrot.slane %v6442, 2
        %v6684 = vsel %vm1005, %v6681, %v6683
        %v6685 = vrot.slane %v6427, 2
        %v6686 = vrot.slane %v6355, 2
        %v6687 = vsel %vm1005, %v6685, %v6686
        %v6688 = vrot.slane %v6443, 2
        %v6689 = vsel %vm1005, %v6686, %v6688
        %v6690 = vrot.slane %v6428, 2
        %v6691 = vrot.slane %v6358, 2
        %v6692 = vsel %vm1005, %v6690, %v6691
        %v6693 = vrot.slane %v6444, 2
        %v6694 = vsel %vm1005, %v6691, %v6693
        %v6695 = vrot.slane %v6429, 2
        %v6696 = vrot.slane %v6361, 2
        %v6697 = vsel %vm1005, %v6695, %v6696
        %v6698 = vrot.slane %v6445, 2
        %v6699 = vsel %vm1005, %v6696, %v6698
        %v6700 = vrot.slane %v6430, 2
        %v6701 = vrot.slane %v6364, 2
        %v6702 = vsel %vm1005, %v6700, %v6701
        %v6703 = vrot.slane %v6446, 2
        %v6704 = vsel %vm1005, %v6701, %v6703
        %v6705 = vrot.slane %v6431, 2
        %v6706 = vrot.slane %v6367, 2
        %v6707 = vsel %vm1005, %v6705, %v6706
        %v6708 = vrot.slane %v6447, 2
        %v6709 = vsel %vm1005, %v6706, %v6708
        %v6743 = vmax.f32 %v6482, %v6629
        %v6744 = vmax.f32 %v6596, %v6632
        %v6745 = vmax.f32 %v6597, %v6634
        %v6746 = vmax.f32 %v6598, %v6637
        %v6747 = vmax.f32 %v6599, %v6639
        %v6748 = vmax.f32 %v6600, %v6642
        %v6749 = vmax.f32 %v6601, %v6644
        %v6750 = vmax.f32 %v6602, %v6647
        %v6751 = vmax.f32 %v6603, %v6649
        %v6752 = vmax.f32 %v6604, %v6652
        %v6753 = vmax.f32 %v6605, %v6654
        %v6754 = vmax.f32 %v6606, %v6657
        %v6755 = vmax.f32 %v6607, %v6659
        %v6756 = vmax.f32 %v6608, %v6662
        %v6757 = vmax.f32 %v6609, %v6664
        %v6758 = vmax.f32 %v6610, %v6667
        %v6759 = vmax.f32 %v6611, %v6669
        %v6760 = vmax.f32 %v6612, %v6672
        %v6761 = vmax.f32 %v6613, %v6674
        %v6762 = vmax.f32 %v6614, %v6677
        %v6763 = vmax.f32 %v6615, %v6679
        %v6764 = vmax.f32 %v6616, %v6682
        %v6765 = vmax.f32 %v6617, %v6684
        %v6766 = vmax.f32 %v6618, %v6687
        %v6767 = vmax.f32 %v6619, %v6689
        %v6768 = vmax.f32 %v6620, %v6692
        %v6769 = vmax.f32 %v6621, %v6694
        %v6770 = vmax.f32 %v6622, %v6697
        %v6771 = vmax.f32 %v6623, %v6699
        %v6772 = vmax.f32 %v6624, %v6702
        %v6773 = vmax.f32 %v6625, %v6704
        %v6774 = vmax.f32 %v6626, %v6707
        %v6775 = vmax.f32 %v6627, %v6709
        %v6776 = vmax.f32 %v6743, %v6744
        %v6777 = vmax.f32 %v6743, %v6745
        %v6778 = vmax.f32 %v6744, %v6746
        %v6779 = vmax.f32 %v6745, %v6747
        %v6780 = vmax.f32 %v6746, %v6748
        %v6781 = vmax.f32 %v6747, %v6749
        %v6782 = vmax.f32 %v6748, %v6750
        %v6783 = vmax.f32 %v6749, %v6751
        %v6784 = vmax.f32 %v6750, %v6752
        %v6785 = vmax.f32 %v6751, %v6753
        %v6786 = vmax.f32 %v6752, %v6754
        %v6787 = vmax.f32 %v6753, %v6755
        %v6788 = vmax.f32 %v6754, %v6756
        %v6789 = vmax.f32 %v6755, %v6757
        %v6790 = vmax.f32 %v6756, %v6758
        %v6791 = vmax.f32 %v6757, %v6759
        %v6792 = vmax.f32 %v6758, %v6760
        %v6793 = vmax.f32 %v6759, %v6761
        %v6794 = vmax.f32 %v6760, %v6762
        %v6795 = vmax.f32 %v6761, %v6763
        %v6796 = vmax.f32 %v6762, %v6764
        %v6797 = vmax.f32 %v6763, %v6765
        %v6798 = vmax.f32 %v6764, %v6766
        %v6799 = vmax.f32 %v6765, %v6767
        %v6800 = vmax.f32 %v6766, %v6768
        %v6801 = vmax.f32 %v6767, %v6769
        %v6802 = vmax.f32 %v6768, %v6770
        %v6803 = vmax.f32 %v6769, %v6771
        %v6804 = vmax.f32 %v6770, %v6772
        %v6805 = vmax.f32 %v6771, %v6773
        %v6806 = vmax.f32 %v6772, %v6774
        %v6807 = vmax.f32 %v6773, %v6775
        %v6808 = vmax.f32 %v6776, %v6746
        %v6809 = vmax.f32 %v6777, %v6747
        %v6810 = vmax.f32 %v6778, %v6748
        %v6811 = vmax.f32 %v6779, %v6749
        %v6812 = vmax.f32 %v6780, %v6750
        %v6813 = vmax.f32 %v6781, %v6751
        %v6814 = vmax.f32 %v6782, %v6752
        %v6815 = vmax.f32 %v6783, %v6753
        %v6816 = vmax.f32 %v6784, %v6754
        %v6817 = vmax.f32 %v6785, %v6755
        %v6818 = vmax.f32 %v6786, %v6756
        %v6819 = vmax.f32 %v6787, %v6757
        %v6820 = vmax.f32 %v6788, %v6758
        %v6821 = vmax.f32 %v6789, %v6759
        %v6822 = vmax.f32 %v6790, %v6760
        %v6823 = vmax.f32 %v6791, %v6761
        %v6824 = vmax.f32 %v6792, %v6762
        %v6825 = vmax.f32 %v6793, %v6763
        %v6826 = vmax.f32 %v6794, %v6764
        %v6827 = vmax.f32 %v6795, %v6765
        %v6828 = vmax.f32 %v6796, %v6766
        %v6829 = vmax.f32 %v6797, %v6767
        %v6830 = vmax.f32 %v6798, %v6768
        %v6831 = vmax.f32 %v6799, %v6769
        %v6832 = vmax.f32 %v6800, %v6770
        %v6833 = vmax.f32 %v6801, %v6771
        %v6834 = vmax.f32 %v6802, %v6772
        %v6835 = vmax.f32 %v6803, %v6773
        %v6836 = vmax.f32 %v6804, %v6774
        %v6837 = vmax.f32 %v6805, %v6775
        %v6838 = vmax.f32 %v6806, %v6743
        %v6839 = vmax.f32 %v6807, %v6743
        %v6840 = vpack.c.bf16 %v6809, %v6808
        %v6841 = vpack.c.bf16 %v6811, %v6810
        %v6842 = vpack.c.bf16 %v6813, %v6812
        %v6843 = vpack.c.bf16 %v6815, %v6814
        %v6844 = vpack.c.bf16 %v6817, %v6816
        %v6845 = vpack.c.bf16 %v6819, %v6818
        %v6846 = vpack.c.bf16 %v6821, %v6820
        %v6847 = vpack.c.bf16 %v6823, %v6822
        %v6848 = vpack.c.bf16 %v6825, %v6824
        %v6849 = vpack.c.bf16 %v6827, %v6826
        %v6850 = vpack.c.bf16 %v6829, %v6828
        %v6851 = vpack.c.bf16 %v6831, %v6830
        %v6852 = vpack.c.bf16 %v6833, %v6832
        %v6853 = vpack.c.bf16 %v6835, %v6834
        %v6854 = vpack.c.bf16 %v6837, %v6836
        %v6855 = vpack.c.bf16 %v6839, %v6838
        %v6856 = vld [vmem:[%s7] sm:$0x3]
        %v6857 = vld [vmem:[%s8] sm:$0x1]
        %v6859 = vlaneseq
        %v6860 = vshrl.u32 %v6859, 7
        %v6861 = vsub.s32 0, %v6860
        %v6862 = vrot.slane %v6857, %v6861
        %v6865 = vsel %vm388, %v6840, 0
        %v6868 = vsel %vm388, %v6841, 0
        %v6871 = vsel %vm388, %v6842, 0
        %v6874 = vsel %vm388, %v6843, 0
        %v6877 = vsel %vm388, %v6844, 0
        %v6880 = vsel %vm388, %v6845, 0
        %v6883 = vsel %vm388, %v6846, 0
        %v6886 = vsel %vm388, %v6847, 0
        %v6889 = vsel %vm388, %v6848, 0
        %v6892 = vsel %vm388, %v6849, 0
        %v6895 = vsel %vm388, %v6850, 0
        %v6898 = vsel %vm388, %v6851, 0
        %v6901 = vsel %vm388, %v6852, 0
        %v6904 = vsel %vm388, %v6853, 0
        %v6907 = vsel %vm388, %v6854, 0
        %v6910 = vsel %vm388, %v6855, 0
        %v6913 = vsel %vm437, %v6856, 0
        %6915 = vmatprep.subr.bf16.mxu0 0
        %6916 = vmatpush1.bf16.msra.mxu0 %v6913
        %6917 = vmatprep.subr.bf16.mxu0 0
        %6918 = vmatpush1.bf16.msra.mxu0 0
        %6919 = vmatprep.subr.bf16.mxu0 0
        %6920 = vmatpush1.bf16.msra.mxu0 0
        %6921 = vmatprep.subr.bf16.mxu0 0
        %6922 = vmatpush1.bf16.msra.mxu0 0
        %6923 = vmatprep.subr.bf16.mxu0 0
        %6924 = vmatpush1.bf16.msra.mxu0 0
        %6925 = vmatprep.subr.bf16.mxu0 0
        %6926 = vmatpush1.bf16.msra.mxu0 0
        %6927 = vmatprep.subr.bf16.mxu0 0
        %6928 = vmatpush1.bf16.msra.mxu0 0
        %6929 = vmatprep.subr.bf16.mxu0 0
        %6930 = vmatpush1.bf16.msra.mxu0 0
        %6931 = vmatprep.subr.bf16.mxu0 0
        %6932 = vmatpush1.bf16.msra.mxu0 0
        %6933 = vmatprep.subr.bf16.mxu0 0
        %6934 = vmatpush1.bf16.msra.mxu0 0
        %6935 = vmatprep.subr.bf16.mxu0 0
        %6936 = vmatpush1.bf16.msra.mxu0 0
        %6937 = vmatprep.subr.bf16.mxu0 0
        %6938 = vmatpush1.bf16.msra.mxu0 0
        %6939 = vmatprep.subr.bf16.mxu0 0
        %6940 = vmatpush1.bf16.msra.mxu0 0
        %6941 = vmatprep.subr.bf16.mxu0 0
        %6942 = vmatpush1.bf16.msra.mxu0 0
        %6943 = vmatprep.subr.bf16.mxu0 0
        %6944 = vmatpush1.bf16.msra.mxu0 0
        %6945 = vmatprep.subr.bf16.mxu0 0
        %6946 = vmatpush1.bf16.msra.mxu0 0
        %6947 = vmatprep.mubr.bf16.mxu0 0
        %6948 = vmatmul.mubr.bf16.gmra.mrb[0].mxu0 %v6865
        %v6949 = vpop.f32.mrb[0].mxu0
        %v6950 = vadd.f32 %v6862, %v6949
        %v6951 = vpop.f32.mrb[0].mxu0
        %v6952 = vpop.f32.mrb[0].mxu0
        %v6953 = vadd.f32 %v6862, %v6952
        %v6954 = vpop.f32.mrb[0].mxu0
        %6955 = vmatprep.mubr.bf16.mxu0 0
        %6956 = vmatmul.mubr.bf16.gmra.mrb[0].mxu0 %v6868
        %v6957 = vpop.f32.mrb[0].mxu0
        %v6958 = vadd.f32 %v6862, %v6957
        %v6959 = vpop.f32.mrb[0].mxu0
        %v6960 = vpop.f32.mrb[0].mxu0
        %v6961 = vadd.f32 %v6862, %v6960
        %v6962 = vpop.f32.mrb[0].mxu0
        %6963 = vmatprep.mubr.bf16.mxu0 0
        %6964 = vmatmul.mubr.bf16.gmra.mrb[0].mxu0 %v6871
        %v6965 = vpop.f32.mrb[0].mxu0
        %v6966 = vadd.f32 %v6862, %v6965
        %v6967 = vpop.f32.mrb[0].mxu0
        %v6968 = vpop.f32.mrb[0].mxu0
        %v6969 = vadd.f32 %v6862, %v6968
        %v6970 = vpop.f32.mrb[0].mxu0
        %6971 = vmatprep.mubr.bf16.mxu0 0
        %6972 = vmatmul.mubr.bf16.gmra.mrb[0].mxu0 %v6874
        %v6973 = vpop.f32.mrb[0].mxu0
        %v6974 = vadd.f32 %v6862, %v6973
        %v6975 = vpop.f32.mrb[0].mxu0
        %v6976 = vpop.f32.mrb[0].mxu0
        %v6977 = vadd.f32 %v6862, %v6976
        %v6978 = vpop.f32.mrb[0].mxu0
        %6979 = vmatprep.mubr.bf16.mxu0 0
        %6980 = vmatmul.mubr.bf16.gmra.mrb[0].mxu0 %v6877
        %v6981 = vpop.f32.mrb[0].mxu0
        %v6982 = vadd.f32 %v6862, %v6981
        %v6983 = vpop.f32.mrb[0].mxu0
        %v6984 = vpop.f32.mrb[0].mxu0
        %v6985 = vadd.f32 %v6862, %v6984
        %v6986 = vpop.f32.mrb[0].mxu0
        %6987 = vmatprep.mubr.bf16.mxu0 0
        %6988 = vmatmul.mubr.bf16.gmra.mrb[0].mxu0 %v6880
        %v6989 = vpop.f32.mrb[0].mxu0
        %v6990 = vadd.f32 %v6862, %v6989
        %v6991 = vpop.f32.mrb[0].mxu0
        %v6992 = vpop.f32.mrb[0].mxu0
        %v6993 = vadd.f32 %v6862, %v6992
        %v6994 = vpop.f32.mrb[0].mxu0
        %6995 = vmatprep.mubr.bf16.mxu0 0
        %6996 = vmatmul.mubr.bf16.gmra.mrb[0].mxu0 %v6883
        %v6997 = vpop.f32.mrb[0].mxu0
        %v6998 = vadd.f32 %v6862, %v6997
        %v6999 = vpop.f32.mrb[0].mxu0
        %v7000 = vpop.f32.mrb[0].mxu0
        %v7001 = vadd.f32 %v6862, %v7000
        %v7002 = vpop.f32.mrb[0].mxu0
        %7003 = vmatprep.mubr.bf16.mxu0 0
        %7004 = vmatmul.mubr.bf16.gmra.mrb[0].mxu0 %v6886
        %v7005 = vpop.f32.mrb[0].mxu0
        %v7006 = vadd.f32 %v6862, %v7005
        %v7007 = vpop.f32.mrb[0].mxu0
        %v7008 = vpop.f32.mrb[0].mxu0
        %v7009 = vadd.f32 %v6862, %v7008
        %v7010 = vpop.f32.mrb[0].mxu0
        %7011 = vmatprep.mubr.bf16.mxu0 0
        %7012 = vmatmul.mubr.bf16.gmra.mrb[0].mxu0 %v6889
        %v7013 = vpop.f32.mrb[0].mxu0
        %v7014 = vadd.f32 %v6862, %v7013
        %v7015 = vpop.f32.mrb[0].mxu0
        %v7016 = vpop.f32.mrb[0].mxu0
        %v7017 = vadd.f32 %v6862, %v7016
        %v7018 = vpop.f32.mrb[0].mxu0
        %7019 = vmatprep.mubr.bf16.mxu0 0
        %7020 = vmatmul.mubr.bf16.gmra.mrb[0].mxu0 %v6892
        %v7021 = vpop.f32.mrb[0].mxu0
        %v7022 = vadd.f32 %v6862, %v7021
        %v7023 = vpop.f32.mrb[0].mxu0
        %v7024 = vpop.f32.mrb[0].mxu0
        %v7025 = vadd.f32 %v6862, %v7024
        %v7026 = vpop.f32.mrb[0].mxu0
        %7027 = vmatprep.mubr.bf16.mxu0 0
        %7028 = vmatmul.mubr.bf16.gmra.mrb[0].mxu0 %v6895
        %v7029 = vpop.f32.mrb[0].mxu0
        %v7030 = vadd.f32 %v6862, %v7029
        %v7031 = vpop.f32.mrb[0].mxu0
        %v7032 = vpop.f32.mrb[0].mxu0
        %v7033 = vadd.f32 %v6862, %v7032
        %v7034 = vpop.f32.mrb[0].mxu0
        %7035 = vmatprep.mubr.bf16.mxu0 0
        %7036 = vmatmul.mubr.bf16.gmra.mrb[0].mxu0 %v6898
        %v7037 = vpop.f32.mrb[0].mxu0
        %v7038 = vadd.f32 %v6862, %v7037
        %v7039 = vpop.f32.mrb[0].mxu0
        %v7040 = vpop.f32.mrb[0].mxu0
        %v7041 = vadd.f32 %v6862, %v7040
        %v7042 = vpop.f32.mrb[0].mxu0
        %7043 = vmatprep.mubr.bf16.mxu0 0
        %7044 = vmatmul.mubr.bf16.gmra.mrb[0].mxu0 %v6901
        %v7045 = vpop.f32.mrb[0].mxu0
        %v7046 = vadd.f32 %v6862, %v7045
        %v7047 = vpop.f32.mrb[0].mxu0
        %v7048 = vpop.f32.mrb[0].mxu0
        %v7049 = vadd.f32 %v6862, %v7048
        %v7050 = vpop.f32.mrb[0].mxu0
        %7051 = vmatprep.mubr.bf16.mxu0 0
        %7052 = vmatmul.mubr.bf16.gmra.mrb[0].mxu0 %v6904
        %v7053 = vpop.f32.mrb[0].mxu0
        %v7054 = vadd.f32 %v6862, %v7053
        %v7055 = vpop.f32.mrb[0].mxu0
        %v7056 = vpop.f32.mrb[0].mxu0
        %v7057 = vadd.f32 %v6862, %v7056
        %v7058 = vpop.f32.mrb[0].mxu0
        %7059 = vmatprep.mubr.bf16.mxu0 0
        %7060 = vmatmul.mubr.bf16.gmra.mrb[0].mxu0 %v6907
        %v7061 = vpop.f32.mrb[0].mxu0
        %v7062 = vadd.f32 %v6862, %v7061
        %v7063 = vpop.f32.mrb[0].mxu0
        %v7064 = vpop.f32.mrb[0].mxu0
        %v7065 = vadd.f32 %v6862, %v7064
        %v7066 = vpop.f32.mrb[0].mxu0
        %7067 = vmatprep.mubr.bf16.mxu0 0
        %7068 = vmatmul.mubr.bf16.gmra.mrb[0].mxu0 %v6910
        %v7069 = vpop.f32.mrb[0].mxu0
        %v7070 = vadd.f32 %v6862, %v7069
        %v7071 = vpop.f32.mrb[0].mxu0
        %v7072 = vpop.f32.mrb[0].mxu0
        %v7073 = vadd.f32 %v6862, %v7072
        %v7074 = vpop.f32.mrb[0].mxu0
        %7075 = vdwg.mxu0
        %v7076 = vmax.f32 %v6950, 0.0
        %v7077 = vmax.f32 %v6953, 0.0
        %v7078 = vmax.f32 %v6958, 0.0
        %v7079 = vmax.f32 %v6961, 0.0
        %v7080 = vmax.f32 %v6966, 0.0
        %v7081 = vmax.f32 %v6969, 0.0
        %v7082 = vmax.f32 %v6974, 0.0
        %v7083 = vmax.f32 %v6977, 0.0
        %v7084 = vmax.f32 %v6982, 0.0
        %v7085 = vmax.f32 %v6985, 0.0
        %v7086 = vmax.f32 %v6990, 0.0
        %v7087 = vmax.f32 %v6993, 0.0
        %v7088 = vmax.f32 %v6998, 0.0
        %v7089 = vmax.f32 %v7001, 0.0
        %v7090 = vmax.f32 %v7006, 0.0
        %v7091 = vmax.f32 %v7009, 0.0
        %v7092 = vmax.f32 %v7014, 0.0
        %v7093 = vmax.f32 %v7017, 0.0
        %v7094 = vmax.f32 %v7022, 0.0
        %v7095 = vmax.f32 %v7025, 0.0
        %v7096 = vmax.f32 %v7030, 0.0
        %v7097 = vmax.f32 %v7033, 0.0
        %v7098 = vmax.f32 %v7038, 0.0
        %v7099 = vmax.f32 %v7041, 0.0
        %v7100 = vmax.f32 %v7046, 0.0
        %v7101 = vmax.f32 %v7049, 0.0
        %v7102 = vmax.f32 %v7054, 0.0
        %v7103 = vmax.f32 %v7057, 0.0
        %v7104 = vmax.f32 %v7062, 0.0
        %v7105 = vmax.f32 %v7065, 0.0
        %v7106 = vmax.f32 %v7070, 0.0
        %v7107 = vmax.f32 %v7073, 0.0
        %7140 = vrot.lane.b32.xlu0 %v2359, 8
        %v7141 = vpop.permute.xlu0 %7140
        %7142 = vrot.lane.b32.xlu0 %v2360, 8
        %v7143 = vpop.permute.xlu0 %7142
        %7144 = vrot.lane.b32.xlu0 %v2361, 8
        %v7145 = vpop.permute.xlu0 %7144
        %7146 = vrot.lane.b32.xlu0 %v2362, 8
        %v7147 = vpop.permute.xlu0 %7146
        %7148 = vrot.lane.b32.xlu0 %v2363, 8
        %v7149 = vpop.permute.xlu0 %7148
        %7150 = vrot.lane.b32.xlu0 %v2364, 8
        %v7151 = vpop.permute.xlu0 %7150
        %7152 = vrot.lane.b32.xlu0 %v2365, 8
        %v7153 = vpop.permute.xlu0 %7152
        %7154 = vrot.lane.b32.xlu0 %v2366, 8
        %v7155 = vpop.permute.xlu0 %7154
        %7156 = vrot.lane.b32.xlu0 %v2367, 8
        %v7157 = vpop.permute.xlu0 %7156
        %7158 = vrot.lane.b32.xlu0 %v2368, 8
        %v7159 = vpop.permute.xlu0 %7158
        %7160 = vrot.lane.b32.xlu0 %v2369, 8
        %v7161 = vpop.permute.xlu0 %7160
        %7162 = vrot.lane.b32.xlu0 %v2370, 8
        %v7163 = vpop.permute.xlu0 %7162
        %7164 = vrot.lane.b32.xlu0 %v2371, 8
        %v7165 = vpop.permute.xlu0 %7164
        %7166 = vrot.lane.b32.xlu0 %v2372, 8
        %v7167 = vpop.permute.xlu0 %7166
        %7168 = vrot.lane.b32.xlu0 %v2373, 8
        %v7169 = vpop.permute.xlu0 %7168
        %7170 = vrot.lane.b32.xlu0 %v2374, 8
        %v7171 = vpop.permute.xlu0 %7170
        %7172 = vrot.lane.b32.xlu0 %v2375, 8
        %v7173 = vpop.permute.xlu0 %7172
        %7174 = vrot.lane.b32.xlu0 %v2376, 8
        %v7175 = vpop.permute.xlu0 %7174
        %7176 = vrot.lane.b32.xlu0 %v2377, 8
        %v7177 = vpop.permute.xlu0 %7176
        %7178 = vrot.lane.b32.xlu0 %v2378, 8
        %v7179 = vpop.permute.xlu0 %7178
        %7180 = vrot.lane.b32.xlu0 %v2379, 8
        %v7181 = vpop.permute.xlu0 %7180
        %7182 = vrot.lane.b32.xlu0 %v2380, 8
        %v7183 = vpop.permute.xlu0 %7182
        %7184 = vrot.lane.b32.xlu0 %v2381, 8
        %v7185 = vpop.permute.xlu0 %7184
        %7186 = vrot.lane.b32.xlu0 %v2382, 8
        %v7187 = vpop.permute.xlu0 %7186
        %7188 = vrot.lane.b32.xlu0 %v2383, 8
        %v7189 = vpop.permute.xlu0 %7188
        %7190 = vrot.lane.b32.xlu0 %v2384, 8
        %v7191 = vpop.permute.xlu0 %7190
        %7192 = vrot.lane.b32.xlu0 %v2385, 8
        %v7193 = vpop.permute.xlu0 %7192
        %7194 = vrot.lane.b32.xlu0 %v2386, 8
        %v7195 = vpop.permute.xlu0 %7194
        %7196 = vrot.lane.b32.xlu0 %v2387, 8
        %v7197 = vpop.permute.xlu0 %7196
        %7198 = vrot.lane.b32.xlu0 %v2388, 8
        %v7199 = vpop.permute.xlu0 %7198
        %7200 = vrot.lane.b32.xlu0 %v2389, 8
        %v7201 = vpop.permute.xlu0 %7200
        %7202 = vrot.lane.b32.xlu0 %v2390, 8
        %v7203 = vpop.permute.xlu0 %7202
        %7268 = vrot.lane.b32.xlu0 %v6256, 16
        %v7269 = vpop.permute.xlu0 %7268
        %7270 = vrot.lane.b32.xlu0 %v6257, 16
        %v7271 = vpop.permute.xlu0 %7270
        %7272 = vrot.lane.b32.xlu0 %v6258, 16
        %v7273 = vpop.permute.xlu0 %7272
        %7274 = vrot.lane.b32.xlu0 %v6259, 16
        %v7275 = vpop.permute.xlu0 %7274
        %7276 = vrot.lane.b32.xlu0 %v6260, 16
        %v7277 = vpop.permute.xlu0 %7276
        %7278 = vrot.lane.b32.xlu0 %v6261, 16
        %v7279 = vpop.permute.xlu0 %7278
        %7280 = vrot.lane.b32.xlu0 %v6262, 16
        %v7281 = vpop.permute.xlu0 %7280
        %7282 = vrot.lane.b32.xlu0 %v6263, 16
        %v7283 = vpop.permute.xlu0 %7282
        %7284 = vrot.lane.b32.xlu0 %v6264, 16
        %v7285 = vpop.permute.xlu0 %7284
        %7286 = vrot.lane.b32.xlu0 %v6265, 16
        %v7287 = vpop.permute.xlu0 %7286
        %7288 = vrot.lane.b32.xlu0 %v6266, 16
        %v7289 = vpop.permute.xlu0 %7288
        %7290 = vrot.lane.b32.xlu0 %v6267, 16
        %v7291 = vpop.permute.xlu0 %7290
        %7292 = vrot.lane.b32.xlu0 %v6268, 16
        %v7293 = vpop.permute.xlu0 %7292
        %7294 = vrot.lane.b32.xlu0 %v6269, 16
        %v7295 = vpop.permute.xlu0 %7294
        %7296 = vrot.lane.b32.xlu0 %v6270, 16
        %v7297 = vpop.permute.xlu0 %7296
        %7298 = vrot.lane.b32.xlu0 %v6271, 16
        %v7299 = vpop.permute.xlu0 %7298
        %7300 = vrot.lane.b32.xlu0 %v6272, 16
        %v7301 = vpop.permute.xlu0 %7300
        %7302 = vrot.lane.b32.xlu0 %v6273, 16
        %v7303 = vpop.permute.xlu0 %7302
        %7304 = vrot.lane.b32.xlu0 %v6274, 16
        %v7305 = vpop.permute.xlu0 %7304
        %7306 = vrot.lane.b32.xlu0 %v6275, 16
        %v7307 = vpop.permute.xlu0 %7306
        %7308 = vrot.lane.b32.xlu0 %v6276, 16
        %v7309 = vpop.permute.xlu0 %7308
        %7310 = vrot.lane.b32.xlu0 %v6277, 16
        %v7311 = vpop.permute.xlu0 %7310
        %7312 = vrot.lane.b32.xlu0 %v6278, 16
        %v7313 = vpop.permute.xlu0 %7312
        %7314 = vrot.lane.b32.xlu0 %v6279, 16
        %v7315 = vpop.permute.xlu0 %7314
        %7316 = vrot.lane.b32.xlu0 %v6280, 16
        %v7317 = vpop.permute.xlu0 %7316
        %7318 = vrot.lane.b32.xlu0 %v6281, 16
        %v7319 = vpop.permute.xlu0 %7318
        %7320 = vrot.lane.b32.xlu0 %v6282, 16
        %v7321 = vpop.permute.xlu0 %7320
        %7322 = vrot.lane.b32.xlu0 %v6283, 16
        %v7323 = vpop.permute.xlu0 %7322
        %7324 = vrot.lane.b32.xlu0 %v6284, 16
        %v7325 = vpop.permute.xlu0 %7324
        %7326 = vrot.lane.b32.xlu0 %v6285, 16
        %v7327 = vpop.permute.xlu0 %7326
        %7328 = vrot.lane.b32.xlu0 %v6286, 16
        %v7329 = vpop.permute.xlu0 %7328
        %7330 = vrot.lane.b32.xlu0 %v6287, 16
        %v7331 = vpop.permute.xlu0 %7330
        %7396 = vrot.lane.b32.xlu0 %v7076, 24
        %v7397 = vpop.permute.xlu0 %7396
        %7398 = vrot.lane.b32.xlu0 %v7077, 24
        %v7399 = vpop.permute.xlu0 %7398
        %7400 = vrot.lane.b32.xlu0 %v7078, 24
        %v7401 = vpop.permute.xlu0 %7400
        %7402 = vrot.lane.b32.xlu0 %v7079, 24
        %v7403 = vpop.permute.xlu0 %7402
        %7404 = vrot.lane.b32.xlu0 %v7080, 24
        %v7405 = vpop.permute.xlu0 %7404
        %7406 = vrot.lane.b32.xlu0 %v7081, 24
        %v7407 = vpop.permute.xlu0 %7406
        %7408 = vrot.lane.b32.xlu0 %v7082, 24
        %v7409 = vpop.permute.xlu0 %7408
        %7410 = vrot.lane.b32.xlu0 %v7083, 24
        %v7411 = vpop.permute.xlu0 %7410
        %7412 = vrot.lane.b32.xlu0 %v7084, 24
        %v7413 = vpop.permute.xlu0 %7412
        %7414 = vrot.lane.b32.xlu0 %v7085, 24
        %v7415 = vpop.permute.xlu0 %7414
        %7416 = vrot.lane.b32.xlu0 %v7086, 24
        %v7417 = vpop.permute.xlu0 %7416
        %7418 = vrot.lane.b32.xlu0 %v7087, 24
        %v7419 = vpop.permute.xlu0 %7418
        %7420 = vrot.lane.b32.xlu0 %v7088, 24
        %v7421 = vpop.permute.xlu0 %7420
        %7422 = vrot.lane.b32.xlu0 %v7089, 24
        %v7423 = vpop.permute.xlu0 %7422
        %7424 = vrot.lane.b32.xlu0 %v7090, 24
        %v7425 = vpop.permute.xlu0 %7424
        %7426 = vrot.lane.b32.xlu0 %v7091, 24
        %v7427 = vpop.permute.xlu0 %7426
        %7428 = vrot.lane.b32.xlu0 %v7092, 24
        %v7429 = vpop.permute.xlu0 %7428
        %7430 = vrot.lane.b32.xlu0 %v7093, 24
        %v7431 = vpop.permute.xlu0 %7430
        %7432 = vrot.lane.b32.xlu0 %v7094, 24
        %v7433 = vpop.permute.xlu0 %7432
        %7434 = vrot.lane.b32.xlu0 %v7095, 24
        %v7435 = vpop.permute.xlu0 %7434
        %7436 = vrot.lane.b32.xlu0 %v7096, 24
        %v7437 = vpop.permute.xlu0 %7436
        %7438 = vrot.lane.b32.xlu0 %v7097, 24
        %v7439 = vpop.permute.xlu0 %7438
        %7440 = vrot.lane.b32.xlu0 %v7098, 24
        %v7441 = vpop.permute.xlu0 %7440
        %7442 = vrot.lane.b32.xlu0 %v7099, 24
        %v7443 = vpop.permute.xlu0 %7442
        %7444 = vrot.lane.b32.xlu0 %v7100, 24
        %v7445 = vpop.permute.xlu0 %7444
        %7446 = vrot.lane.b32.xlu0 %v7101, 24
        %v7447 = vpop.permute.xlu0 %7446
        %7448 = vrot.lane.b32.xlu0 %v7102, 24
        %v7449 = vpop.permute.xlu0 %7448
        %7450 = vrot.lane.b32.xlu0 %v7103, 24
        %v7451 = vpop.permute.xlu0 %7450
        %7452 = vrot.lane.b32.xlu0 %v7104, 24
        %v7453 = vpop.permute.xlu0 %7452
        %7454 = vrot.lane.b32.xlu0 %v7105, 24
        %v7455 = vpop.permute.xlu0 %7454
        %7456 = vrot.lane.b32.xlu0 %v7106, 24
        %v7457 = vpop.permute.xlu0 %7456
        %7458 = vrot.lane.b32.xlu0 %v7107, 24
        %v7459 = vpop.permute.xlu0 %7458
        %v7492 = vsel %vm1879, %v602, %v7141
        %v7493 = vsel %vm1879, %v603, %v7143
        %v7494 = vsel %vm1879, %v604, %v7145
        %v7495 = vsel %vm1879, %v605, %v7147
        %v7496 = vsel %vm1879, %v606, %v7149
        %v7497 = vsel %vm1879, %v607, %v7151
        %v7498 = vsel %vm1879, %v608, %v7153
        %v7499 = vsel %vm1879, %v609, %v7155
        %v7500 = vsel %vm1879, %v610, %v7157
        %v7501 = vsel %vm1879, %v611, %v7159
        %v7502 = vsel %vm1879, %v612, %v7161
        %v7503 = vsel %vm1879, %v613, %v7163
        %v7504 = vsel %vm1879, %v614, %v7165
        %v7505 = vsel %vm1879, %v615, %v7167
        %v7506 = vsel %vm1879, %v616, %v7169
        %v7507 = vsel %vm1879, %v617, %v7171
        %v7508 = vsel %vm1879, %v618, %v7173
        %v7509 = vsel %vm1879, %v619, %v7175
        %v7510 = vsel %vm1879, %v620, %v7177
        %v7511 = vsel %vm1879, %v621, %v7179
        %v7512 = vsel %vm1879, %v622, %v7181
        %v7513 = vsel %vm1879, %v623, %v7183
        %v7514 = vsel %vm1879, %v624, %v7185
        %v7515 = vsel %vm1879, %v625, %v7187
        %v7516 = vsel %vm1879, %v626, %v7189
        %v7517 = vsel %vm1879, %v627, %v7191
        %v7518 = vsel %vm1879, %v628, %v7193
        %v7519 = vsel %vm1879, %v629, %v7195
        %v7520 = vsel %vm1879, %v630, %v7197
        %v7521 = vsel %vm1879, %v631, %v7199
        %v7522 = vsel %vm1879, %v632, %v7201
        %v7523 = vsel %vm1879, %v633, %v7203
        %v7524 = vsel %vm1944, %v7492, %v7269
        %v7525 = vsel %vm1944, %v7493, %v7271
        %v7526 = vsel %vm1944, %v7494, %v7273
        %v7527 = vsel %vm1944, %v7495, %v7275
        %v7528 = vsel %vm1944, %v7496, %v7277
        %v7529 = vsel %vm1944, %v7497, %v7279
        %v7530 = vsel %vm1944, %v7498, %v7281
        %v7531 = vsel %vm1944, %v7499, %v7283
        %v7532 = vsel %vm1944, %v7500, %v7285
        %v7533 = vsel %vm1944, %v7501, %v7287
        %v7534 = vsel %vm1944, %v7502, %v7289
        %v7535 = vsel %vm1944, %v7503, %v7291
        %v7536 = vsel %vm1944, %v7504, %v7293
        %v7537 = vsel %vm1944, %v7505, %v7295
        %v7538 = vsel %vm1944, %v7506, %v7297
        %v7539 = vsel %vm1944, %v7507, %v7299
        %v7540 = vsel %vm1944, %v7508, %v7301
        %v7541 = vsel %vm1944, %v7509, %v7303
        %v7542 = vsel %vm1944, %v7510, %v7305
        %v7543 = vsel %vm1944, %v7511, %v7307
        %v7544 = vsel %vm1944, %v7512, %v7309
        %v7545 = vsel %vm1944, %v7513, %v7311
        %v7546 = vsel %vm1944, %v7514, %v7313
        %v7547 = vsel %vm1944, %v7515, %v7315
        %v7548 = vsel %vm1944, %v7516, %v7317
        %v7549 = vsel %vm1944, %v7517, %v7319
        %v7550 = vsel %vm1944, %v7518, %v7321
        %v7551 = vsel %vm1944, %v7519, %v7323
        %v7552 = vsel %vm1944, %v7520, %v7325
        %v7553 = vsel %vm1944, %v7521, %v7327
        %v7554 = vsel %vm1944, %v7522, %v7329
        %v7555 = vsel %vm1944, %v7523, %v7331
        %v7556 = vsel %vm2010, %v7524, %v7397
        %v7557 = vsel %vm2010, %v7525, %v7399
        %v7558 = vsel %vm2010, %v7526, %v7401
        %v7559 = vsel %vm2010, %v7527, %v7403
        %v7560 = vsel %vm2010, %v7528, %v7405
        %v7561 = vsel %vm2010, %v7529, %v7407
        %v7562 = vsel %vm2010, %v7530, %v7409
        %v7563 = vsel %vm2010, %v7531, %v7411
        %v7564 = vsel %vm2010, %v7532, %v7413
        %v7565 = vsel %vm2010, %v7533, %v7415
        %v7566 = vsel %vm2010, %v7534, %v7417
        %v7567 = vsel %vm2010, %v7535, %v7419
        %v7568 = vsel %vm2010, %v7536, %v7421
        %v7569 = vsel %vm2010, %v7537, %v7423
        %v7570 = vsel %vm2010, %v7538, %v7425
        %v7571 = vsel %vm2010, %v7539, %v7427
        %v7572 = vsel %vm2010, %v7540, %v7429
        %v7573 = vsel %vm2010, %v7541, %v7431
        %v7574 = vsel %vm2010, %v7542, %v7433
        %v7575 = vsel %vm2010, %v7543, %v7435
        %v7576 = vsel %vm2010, %v7544, %v7437
        %v7577 = vsel %vm2010, %v7545, %v7439
        %v7578 = vsel %vm2010, %v7546, %v7441
        %v7579 = vsel %vm2010, %v7547, %v7443
        %v7580 = vsel %vm2010, %v7548, %v7445
        %v7581 = vsel %vm2010, %v7549, %v7447
        %v7582 = vsel %vm2010, %v7550, %v7449
        %v7583 = vsel %vm2010, %v7551, %v7451
        %v7584 = vsel %vm2010, %v7552, %v7453
        %v7585 = vsel %vm2010, %v7553, %v7455
        %v7586 = vsel %vm2010, %v7554, %v7457
        %v7587 = vsel %vm2010, %v7555, %v7459
        %7588 = vst.msk [vmem:[%s325] sm:$0xff] %vm2076, %v7556
        %7589 = vst.msk [vmem:[%s325 + $0x8] sm:$0xff] %vm2076, %v7557
        %7590 = vst.msk [vmem:[%s325 + $0x10] sm:$0xff] %vm2076, %v7558
        %7591 = vst.msk [vmem:[%s325 + $0x18] sm:$0xff] %vm2076, %v7559
        %7592 = vst.msk [vmem:[%s325 + $0x20] sm:$0xff] %vm2076, %v7560
        %7593 = vst.msk [vmem:[%s325 + $0x28] sm:$0xff] %vm2076, %v7561
        %7594 = vst.msk [vmem:[%s325 + $0x30] sm:$0xff] %vm2076, %v7562
        %7595 = vst.msk [vmem:[%s325 + $0x38] sm:$0xff] %vm2076, %v7563
        %7596 = vst.msk [vmem:[%s325 + $0x40] sm:$0xff] %vm2076, %v7564
        %7597 = vst.msk [vmem:[%s325 + $0x48] sm:$0xff] %vm2076, %v7565
        %7598 = vst.msk [vmem:[%s325 + $0x50] sm:$0xff] %vm2076, %v7566
        %7599 = vst.msk [vmem:[%s325 + $0x58] sm:$0xff] %vm2076, %v7567
        %7600 = vst.msk [vmem:[%s325 + $0x60] sm:$0xff] %vm2076, %v7568
        %7601 = vst.msk [vmem:[%s325 + $0x68] sm:$0xff] %vm2076, %v7569
        %7602 = vst.msk [vmem:[%s325 + $0x70] sm:$0xff] %vm2076, %v7570
        %7603 = vst.msk [vmem:[%s325 + $0x78] sm:$0xff] %vm2076, %v7571
        %7604 = vst.msk [vmem:[%s325 + $0x80] sm:$0xff] %vm2076, %v7572
        %7605 = vst.msk [vmem:[%s325 + $0x88] sm:$0xff] %vm2076, %v7573
        %7606 = vst.msk [vmem:[%s325 + $0x90] sm:$0xff] %vm2076, %v7574
        %7607 = vst.msk [vmem:[%s325 + $0x98] sm:$0xff] %vm2076, %v7575
        %7608 = vst.msk [vmem:[%s325 + $0xa0] sm:$0xff] %vm2076, %v7576
        %7609 = vst.msk [vmem:[%s325 + $0xa8] sm:$0xff] %vm2076, %v7577
        %7610 = vst.msk [vmem:[%s325 + $0xb0] sm:$0xff] %vm2076, %v7578
        %7611 = vst.msk [vmem:[%s325 + $0xb8] sm:$0xff] %vm2076, %v7579
        %7612 = vst.msk [vmem:[%s325 + $0xc0] sm:$0xff] %vm2076, %v7580
        %7613 = vst.msk [vmem:[%s325 + $0xc8] sm:$0xff] %vm2076, %v7581
        %7614 = vst.msk [vmem:[%s325 + $0xd0] sm:$0xff] %vm2076, %v7582
        %7615 = vst.msk [vmem:[%s325 + $0xd8] sm:$0xff] %vm2076, %v7583
        %7616 = vst.msk [vmem:[%s325 + $0xe0] sm:$0xff] %vm2076, %v7584
        %7617 = vst.msk [vmem:[%s325 + $0xe8] sm:$0xff] %vm2076, %v7585
        %7618 = vst.msk [vmem:[%s325 + $0xf0] sm:$0xff] %vm2076, %v7586
        %7619 = vst.msk [vmem:[%s325 + $0xf8] sm:$0xff] %vm2076, %v7587
        %s7620 = sand.u32 %s225, 1
        %s7621 = scalar_lea.sflag [#allocation3], %s7620
        %s7622 = sand.u32 %s225, 1
        %s7623 = smul.addr %s7622, 256
        %s7624 = scalar_lea.vmem [#allocation2], %s7623
        // Predicated region
        $region57: #{inception_forward.1} parent=55 // pred_check
          %p7625 = pneg %p235
        $region58: #{inception_forward.1} parent=55 // pred_check_branch
          %7627 = sbr.rel (%p7625) target = $region60
        $region59: #{inception_forward.1} parent=55 // pred_region
          %s7629 = ssub.s32 4096, 4096
          %7630 = vsyncadd %s7621, %s7629
          %s7631 = smul.addr %s23, 32
          %s7632 = smul.addr %s7631, 128
          %s7633 = scalar_lea.hbm %s9, %s7632
          %s7634 = sshll.u32 %s7624, 4
          %s7635 = int_to_ptr.vmem [resolvable:$true] %s7634
          %7640 = dma.vmem_to_hbm [thread:$0]  %s7635, 4096, %s7633, %s7621, 128, 128, 8
        $region60: #{inception_forward.1} parent=55 // pred_fallthru
          _
      $region56: #{inception_forward.1} parent=5 // pred_fallthru
        _
      %p7641 = scmp.le.s32.totalorder 2, %s18
      // Predicated region
      $region61: #{inception_forward.1} parent=5 // pred_check
        %p7642 = pneg %p7641
      $region62: #{inception_forward.1} parent=5 // pred_check_branch
        %7644 = sbr.rel (%p7642) target = $region64
      $region63: #{inception_forward.1} parent=5 // pred_region
        %s7645 = ssub.s32 %s18, 2
        // Predicated region
        $region65: #{inception_forward.1} parent=63 // pred_check
          %p7646 = pneg %p241
        $region66: #{inception_forward.1} parent=63 // pred_check_branch
          %7648 = sbr.rel (%p7646) target = $region68
        $region67: #{inception_forward.1} parent=63 // pred_region
          %s7649 = sand.u32 %s226, 1
          %s7650 = scalar_lea.sflag [#allocation3], %s7649
          %s7651 = sand.u32 %s226, 1
          %s7652 = smul.addr %s7651, 256
          %s7653 = scalar_lea.vmem [#allocation2], %s7652
          %7654 = dma.done %s7650, 4096
        $region68: #{inception_forward.1} parent=63 // pred_fallthru
          _
      $region64: #{inception_forward.1} parent=5 // pred_fallthru
        _
    $region6: #{inception_forward.1} parent=1 // loop_footer
      %s22 = sadd.s32 1, %s18
    $region7: #{inception_forward.1} parent=1 // loop_footer_branch
      %17 = sbr.rel target = $region3
    $region8: #{inception_forward.1} parent=1 // loop_exit
      _
    %7655 = vsyncpa [#allocation3], 1
    %s7656 = scalar_lea.sflag [#allocation3], 1
    %7657 = vsyncpa %s7656, 1

</llo_original>
